<compile_context>
chip_gen: v7x
topology: tpu7x:2x2x1
jax: 0.10.0
libtpu: 0.0.40
codegen_flags: <defaults>
</compile_context>

<pallas_src>
import functools

import jax
import jax.numpy as jnp
from jax.experimental import pallas as pl
from jax.experimental.pallas import tpu as pltpu


# ---------------------------------------------------------------------------
# Single-invocation kernel: entire generator + discriminator recurrence.
# ---------------------------------------------------------------------------
def _rgan_kernel(
    seq_len,                 # static (bound via functools.partial)
    true_proj_ref,           # (T, B, H)  hoisted real-path input proj (+ ch)
    z_ref,                   # (B, L)     latent noise
    Wz_ref, bz_ref,          # (L, H), (1, H)   generator init projection
    Wxh_ref, Whh_ref, bh_ref,  # (E, H), (H, H), (1, H)  generator RNN cell
    Whv_ref, bv_ref,         # (H, V), (1, V)   generator output logits
    E_ref,                   # (V, E)           embedding table (weighted lockup)
    Uxh_ref, Uhh_ref, ch_ref,  # (E, H), (H, H), (1, H)  discriminator RNN cell
    wout_ref, bout_ref,      # (H, 1), (1, 1)   discriminator head
    d_loss_ref, g_loss_ref,  # (1, 1) outputs
):
    batch = z_ref.shape[0]
    hidden = Wz_ref.shape[1]
    vocab, embed = E_ref.shape

    # ---- hoisted loop-invariant weight loads / bias broadcasts ----
    Wxh = Wxh_ref[...]
    Whh = Whh_ref[...]
    Whv = Whv_ref[...]
    Etab = E_ref[...]
    Uxh = Uxh_ref[...]
    Uhh = Uhh_ref[...]
    bh = jnp.broadcast_to(bh_ref[...], (batch, hidden))
    bv = jnp.broadcast_to(bv_ref[...], (batch, vocab))
    ch = jnp.broadcast_to(ch_ref[...], (batch, hidden))

    # ---- initial state (loop-carried values, kept in vregs) ----
    hg = jnp.tanh(
        jnp.dot(z_ref[...], Wz_ref[...], preferred_element_type=jnp.float32)
        + bz_ref[...]
    )                                                   # (B, H) generator state
    xprev = jnp.zeros((batch, embed), jnp.float32)      # fed-back soft embedding
    hdf = jnp.zeros((batch, hidden), jnp.float32)       # disc state, fake path
    hdr = jnp.zeros((batch, hidden), jnp.float32)       # disc state, real path

    # ---- unrolled recurrence (seq_len is small and static) ----
    # TODO(synk): v7x-only MRB weight-stationary driving (matmul_push_rhs /
    # matmul_acc_lhs) is not used to keep the kernel portable across v5e/v6e.
    for t in range(seq_len):
        # Generator cell: two independent split dots + VPU add (no lane concat).
        hg = jnp.tanh(
            jnp.dot(xprev, Wxh, preferred_element_type=jnp.float32)
            + jnp.dot(hg, Whh, preferred_element_type=jnp.float32)
            + bh
        )

        # Vocab logits -> softmax (exact divide) -> weighted lockup.
        logits = jnp.dot(hg, Whv, preferred_element_type=jnp.float32) + bv
        m = jnp.max(logits, axis=-1, keepdims=True)
        p = jnp.exp(logits - m)
        probs = p / jnp.sum(p, axis=-1, keepdims=True)
        x_gen = jnp.dot(probs, Etab, preferred_element_type=jnp.float32)  # (B, E)

        # Fake-path discriminator cell (depends on x_gen).
        hdf = jnp.tanh(
            jnp.dot(x_gen, Uxh, preferred_element_type=jnp.float32)
            + jnp.dot(hdf, Uhh, preferred_element_type=jnp.float32)
            + ch
        )

        # Real-path discriminator cell: independent chain, input projection
        # (true_embed[t] @ Uxh + ch) was hoisted to the wrapper.
        hdr = jnp.tanh(
            true_proj_ref[t]
            + jnp.dot(hdr, Uhh, preferred_element_type=jnp.float32)
        )

        xprev = x_gen

    # ---- discriminator head + BCE-with-logits losses ----
    d_fake = (
        jnp.dot(hdf, wout_ref[...], preferred_element_type=jnp.float32)
        + bout_ref[...]
    )                                                    # (B, 1)
    d_real = (
        jnp.dot(hdr, wout_ref[...], preferred_element_type=jnp.float32)
        + bout_ref[...]
    )                                                    # (B, 1)

    def softplus(x):
        return jnp.maximum(x, 0.0) + jnp.log1p(jnp.exp(-jnp.abs(x)))

    d_loss = jnp.mean(softplus(-d_real) + softplus(d_fake))
    g_loss = jnp.mean(softplus(-d_fake))
    d_loss_ref[...] = jnp.reshape(d_loss, (1, 1))
    g_loss_ref[...] = jnp.reshape(g_loss, (1, 1))


# ---------------------------------------------------------------------------
# Wrapper: embedding lookup of int ids and the hoisted real-path projection
# are plain-XLA glue (known inputs, off the serial critical path); all of the
# recurrence math, softmax, lockup and losses run in one kernel call.
# ---------------------------------------------------------------------------
@jax.jit
def rgan_forward(z, true_data, params):
    E = params["E"].astype(jnp.float32)
    # EmbeddingLockup.forward: indices -> embeddings (glue).
    true_embed = jnp.take(E, true_data, axis=0)                  # (B, T, Emb)
    # Hoisted real-path discriminator input projection (+ bias), time-major.
    true_proj = (
        jnp.einsum("bte,eh->bth", true_embed, params["Uxh"]) + params["ch"]
    )
    true_proj = jnp.transpose(true_proj, (1, 0, 2)).astype(jnp.float32)  # (T,B,H)

    seq_len = true_proj.shape[0]

    args = (
        true_proj, z.astype(jnp.float32),
        params["Wz"], params["bz"],
        params["Wxh"], params["Whh"], params["bh"],
        params["Whv"], params["bv"],
        E,
        params["Uxh"], params["Uhh"], params["ch"],
        params["wout"], params["bout"],
    )

    vmem = lambda: pl.BlockSpec(memory_space=pltpu.MemorySpace.VMEM)
    d_loss, g_loss = pl.pallas_call(
        functools.partial(_rgan_kernel, seq_len),
        out_shape=(
            jax.ShapeDtypeStruct((1, 1), jnp.float32),
            jax.ShapeDtypeStruct((1, 1), jnp.float32),
        ),
        in_specs=[vmem() for _ in args],
        out_specs=(vmem(), vmem()),
    )(*args)

    return d_loss[0, 0], g_loss[0, 0]


# ---------------------------------------------------------------------------
# Pure-JAX reference (same math) for validation.
# ---------------------------------------------------------------------------
def rgan_reference(z, true_data, p):
    true_embed = jnp.take(p["E"], true_data, axis=0).astype(jnp.float32)
    true_embed = jnp.transpose(true_embed, (1, 0, 2))            # (T, B, Emb)
    seq_len, batch, embed = true_embed.shape
    hidden = p["Whh"].shape[0]

    hg = jnp.tanh(z @ p["Wz"] + p["bz"])
    xprev = jnp.zeros((batch, embed), jnp.float32)
    hdf = jnp.zeros((batch, hidden), jnp.float32)
    hdr = jnp.zeros((batch, hidden), jnp.float32)
    for t in range(seq_len):
        hg = jnp.tanh(xprev @ p["Wxh"] + hg @ p["Whh"] + p["bh"])
        probs = jax.nn.softmax(hg @ p["Whv"] + p["bv"], axis=-1)
        xgen = probs @ p["E"]
        hdf = jnp.tanh(xgen @ p["Uxh"] + hdf @ p["Uhh"] + p["ch"])
        hdr = jnp.tanh(true_embed[t] @ p["Uxh"] + hdr @ p["Uhh"] + p["ch"])
        xprev = xgen
    d_fake = hdf @ p["wout"] + p["bout"]
    d_real = hdr @ p["wout"] + p["bout"]
    sp = jax.nn.softplus
    return jnp.mean(sp(-d_real) + sp(d_fake)), jnp.mean(sp(-d_fake))


def make_params(vocab, embed, latent, hidden, seed=42):
    keys = jax.random.split(jax.random.PRNGKey(seed), 8)
    n = lambda k, s: (0.1 * jax.random.normal(k, s)).astype(jnp.float32)
    return {
        "E":    n(keys[0], (vocab, embed)),
        "Wz":   n(keys[1], (latent, hidden)),
        "bz":   jnp.zeros((1, hidden), jnp.float32),
        "Wxh":  n(keys[2], (embed, hidden)),
        "Whh":  n(keys[3], (hidden, hidden)),
        "bh":   jnp.zeros((1, hidden), jnp.float32),
        "Whv":  n(keys[4], (hidden, vocab)),
        "bv":   jnp.zeros((1, vocab), jnp.float32),
        "Uxh":  n(keys[5], (embed, hidden)),
        "Uhh":  n(keys[6], (hidden, hidden)),
        "ch":   jnp.zeros((1, hidden), jnp.float32),
        "wout": n(keys[7], (hidden, 1)),
        "bout": jnp.zeros((1, 1), jnp.float32),
    }


if __name__ == "__main__":
    batch, seq_len = 4, 8
    latent, hidden, embed, vocab = 16, 32, 32, 64

    params = make_params(vocab, embed, latent, hidden)

    key = jax.random.PRNGKey(0)
    kz, kd = jax.random.split(key)
    z = jax.random.uniform(kz, (batch, latent), dtype=jnp.float32)
    true_data = jax.random.randint(kd, (batch, seq_len), 0, vocab, dtype=jnp.int32)

    d_loss, g_loss = rgan_forward(z, true_data, params)
    d_loss, g_loss = jax.block_until_ready((d_loss, g_loss))

    d_ref, g_ref = rgan_reference(z, true_data, params)
    assert jnp.isfinite(d_loss) and jnp.isfinite(g_loss)
    assert jnp.allclose(d_loss, d_ref, atol=2e-3, rtol=2e-3), (d_loss, d_ref)
    assert jnp.allclose(g_loss, g_ref, atol=2e-3, rtol=2e-3), (g_loss, g_ref)

    # TODO(synk): RGAN.sample() (free-running generation w/ batch_loader) is a
    # separate inference path and is not part of the forward pass implemented here.
    print("KERNEL_OK")
</pallas_src>

<mosaic_0001>
module attributes {stable_mosaic.version = 11 : i64} {
  func.func @_rgan_kernel(%arg0: memref<8x4x32xf32, #tpu.memory_space<vmem>>, %arg1: memref<4x16xf32, #tpu.memory_space<vmem>>, %arg2: memref<16x32xf32, #tpu.memory_space<vmem>>, %arg3: memref<1x32xf32, #tpu.memory_space<vmem>>, %arg4: memref<32x32xf32, #tpu.memory_space<vmem>>, %arg5: memref<32x32xf32, #tpu.memory_space<vmem>>, %arg6: memref<1x32xf32, #tpu.memory_space<vmem>>, %arg7: memref<32x64xf32, #tpu.memory_space<vmem>>, %arg8: memref<1x64xf32, #tpu.memory_space<vmem>>, %arg9: memref<64x32xf32, #tpu.memory_space<vmem>>, %arg10: memref<32x32xf32, #tpu.memory_space<vmem>>, %arg11: memref<32x32xf32, #tpu.memory_space<vmem>>, %arg12: memref<1x32xf32, #tpu.memory_space<vmem>>, %arg13: memref<32x1xf32, #tpu.memory_space<vmem>>, %arg14: memref<1x1xf32, #tpu.memory_space<vmem>>, %arg15: memref<1x1xf32, #tpu.memory_space<vmem>>, %arg16: memref<1x1xf32, #tpu.memory_space<vmem>>) attributes {dimension_semantics = [], scalar_prefetch = 0 : i64, scratch_operands = 0 : i64, tpu.core_type = #tpu.core_type<tc>} {
    %c0 = arith.constant 0 : index
    %c0_0 = arith.constant 0 : index
    %0 = vector.load %arg4[%c0, %c0_0] : memref<32x32xf32, #tpu.memory_space<vmem>>, vector<32x32xf32>
    %c0_1 = arith.constant 0 : index
    %c0_2 = arith.constant 0 : index
    %1 = vector.load %arg5[%c0_1, %c0_2] : memref<32x32xf32, #tpu.memory_space<vmem>>, vector<32x32xf32>
    %c0_3 = arith.constant 0 : index
    %c0_4 = arith.constant 0 : index
    %2 = vector.load %arg7[%c0_3, %c0_4] : memref<32x64xf32, #tpu.memory_space<vmem>>, vector<32x64xf32>
    %c0_5 = arith.constant 0 : index
    %c0_6 = arith.constant 0 : index
    %3 = vector.load %arg9[%c0_5, %c0_6] : memref<64x32xf32, #tpu.memory_space<vmem>>, vector<64x32xf32>
    %c0_7 = arith.constant 0 : index
    %c0_8 = arith.constant 0 : index
    %4 = vector.load %arg10[%c0_7, %c0_8] : memref<32x32xf32, #tpu.memory_space<vmem>>, vector<32x32xf32>
    %c0_9 = arith.constant 0 : index
    %c0_10 = arith.constant 0 : index
    %5 = vector.load %arg11[%c0_9, %c0_10] : memref<32x32xf32, #tpu.memory_space<vmem>>, vector<32x32xf32>
    %c0_11 = arith.constant 0 : index
    %c0_12 = arith.constant 0 : index
    %6 = vector.load %arg6[%c0_11, %c0_12] : memref<1x32xf32, #tpu.memory_space<vmem>>, vector<1x32xf32>
    %7 = vector.shape_cast %6 : vector<1x32xf32> to vector<1x32xf32>
    %8 = vector.broadcast %7 : vector<1x32xf32> to vector<4x32xf32>
    %c0_13 = arith.constant 0 : index
    %c0_14 = arith.constant 0 : index
    %9 = vector.load %arg8[%c0_13, %c0_14] : memref<1x64xf32, #tpu.memory_space<vmem>>, vector<1x64xf32>
    %10 = vector.shape_cast %9 : vector<1x64xf32> to vector<1x64xf32>
    %11 = vector.broadcast %10 : vector<1x64xf32> to vector<4x64xf32>
    %c0_15 = arith.constant 0 : index
    %c0_16 = arith.constant 0 : index
    %12 = vector.load %arg12[%c0_15, %c0_16] : memref<1x32xf32, #tpu.memory_space<vmem>>, vector<1x32xf32>
    %13 = vector.shape_cast %12 : vector<1x32xf32> to vector<1x32xf32>
    %14 = vector.broadcast %13 : vector<1x32xf32> to vector<4x32xf32>
    %c0_17 = arith.constant 0 : index
    %c0_18 = arith.constant 0 : index
    %15 = vector.load %arg1[%c0_17, %c0_18] : memref<4x16xf32, #tpu.memory_space<vmem>>, vector<4x16xf32>
    %c0_19 = arith.constant 0 : index
    %c0_20 = arith.constant 0 : index
    %16 = vector.load %arg2[%c0_19, %c0_20] : memref<16x32xf32, #tpu.memory_space<vmem>>, vector<16x32xf32>
    %cst = arith.constant dense<0.000000e+00> : vector<4x32xf32>
    %17 = tpu.matmul %15, %16, %cst {dimension_numbers = #tpu.dot_dimension_numbers<[1], [0], [0], [1], [0, 0, 1, 1], [], []>} : vector<4x16xf32>, vector<16x32xf32>, vector<4x32xf32> -> vector<4x32xf32>
    %c0_21 = arith.constant 0 : index
    %c0_22 = arith.constant 0 : index
    %18 = vector.load %arg3[%c0_21, %c0_22] : memref<1x32xf32, #tpu.memory_space<vmem>>, vector<1x32xf32>
    %19 = vector.broadcast %18 : vector<1x32xf32> to vector<4x32xf32>
    %20 = arith.addf %17, %19 : vector<4x32xf32>
    %21 = math.tanh %20 : vector<4x32xf32>
    %cst_23 = arith.constant 0.000000e+00 : f32
    %22 = vector.broadcast %cst_23 : f32 to vector<4x32xf32>
    %cst_24 = arith.constant 0.000000e+00 : f32
    %23 = vector.broadcast %cst_24 : f32 to vector<4x32xf32>
    %cst_25 = arith.constant 0.000000e+00 : f32
    %24 = vector.broadcast %cst_25 : f32 to vector<4x32xf32>
    %cst_26 = arith.constant dense<0.000000e+00> : vector<4x32xf32>
    %25 = tpu.matmul %22, %0, %cst_26 {dimension_numbers = #tpu.dot_dimension_numbers<[1], [0], [0], [1], [0, 0, 1, 1], [], []>} : vector<4x32xf32>, vector<32x32xf32>, vector<4x32xf32> -> vector<4x32xf32>
    %cst_27 = arith.constant dense<0.000000e+00> : vector<4x32xf32>
    %26 = tpu.matmul %21, %1, %cst_27 {dimension_numbers = #tpu.dot_dimension_numbers<[1], [0], [0], [1], [0, 0, 1, 1], [], []>} : vector<4x32xf32>, vector<32x32xf32>, vector<4x32xf32> -> vector<4x32xf32>
    %27 = arith.addf %25, %26 : vector<4x32xf32>
    %28 = arith.addf %27, %8 : vector<4x32xf32>
    %29 = math.tanh %28 : vector<4x32xf32>
    %cst_28 = arith.constant dense<0.000000e+00> : vector<4x64xf32>
    %30 = tpu.matmul %29, %2, %cst_28 {dimension_numbers = #tpu.dot_dimension_numbers<[1], [0], [0], [1], [0, 0, 1, 1], [], []>} : vector<4x32xf32>, vector<32x64xf32>, vector<4x64xf32> -> vector<4x64xf32>
    %31 = arith.addf %30, %11 : vector<4x64xf32>
    %cst_29 = arith.constant dense<0xFF800000> : vector<4xf32>
    %32 = vector.multi_reduction <maximumf>, %31, %cst_29 [1] : vector<4x64xf32> to vector<4xf32>
    %33 = vector.shape_cast %32 : vector<4xf32> to vector<4x1xf32>
    %34 = vector.broadcast %33 : vector<4x1xf32> to vector<4x64xf32>
    %35 = arith.subf %31, %34 : vector<4x64xf32>
    %36 = math.exp %35 : vector<4x64xf32>
    %cst_30 = arith.constant dense<0.000000e+00> : vector<4xf32>
    %37 = vector.multi_reduction <add>, %36, %cst_30 [1] : vector<4x64xf32> to vector<4xf32>
    %38 = vector.shape_cast %37 : vector<4xf32> to vector<4x1xf32>
    %39 = vector.broadcast %38 : vector<4x1xf32> to vector<4x64xf32>
    %40 = arith.divf %36, %39 : vector<4x64xf32>
    %cst_31 = arith.constant dense<0.000000e+00> : vector<4x32xf32>
    %41 = tpu.matmul %40, %3, %cst_31 {dimension_numbers = #tpu.dot_dimension_numbers<[1], [0], [0], [1], [0, 0, 1, 1], [], []>} : vector<4x64xf32>, vector<64x32xf32>, vector<4x32xf32> -> vector<4x32xf32>
    %cst_32 = arith.constant dense<0.000000e+00> : vector<4x32xf32>
    %42 = tpu.matmul %41, %4, %cst_32 {dimension_numbers = #tpu.dot_dimension_numbers<[1], [0], [0], [1], [0, 0, 1, 1], [], []>} : vector<4x32xf32>, vector<32x32xf32>, vector<4x32xf32> -> vector<4x32xf32>
    %cst_33 = arith.constant dense<0.000000e+00> : vector<4x32xf32>
    %43 = tpu.matmul %23, %5, %cst_33 {dimension_numbers = #tpu.dot_dimension_numbers<[1], [0], [0], [1], [0, 0, 1, 1], [], []>} : vector<4x32xf32>, vector<32x32xf32>, vector<4x32xf32> -> vector<4x32xf32>
    %44 = arith.addf %42, %43 : vector<4x32xf32>
    %45 = arith.addf %44, %14 : vector<4x32xf32>
    %46 = math.tanh %45 : vector<4x32xf32>
    %c0_34 = arith.constant 0 : index
    %c0_35 = arith.constant 0 : index
    %c0_36 = arith.constant 0 : index
    %47 = vector.load %arg0[%c0_34, %c0_35, %c0_36] : memref<8x4x32xf32, #tpu.memory_space<vmem>>, vector<1x4x32xf32>
    %48 = vector.shape_cast %47 : vector<1x4x32xf32> to vector<4x32xf32>
    %cst_37 = arith.constant dense<0.000000e+00> : vector<4x32xf32>
    %49 = tpu.matmul %24, %5, %cst_37 {dimension_numbers = #tpu.dot_dimension_numbers<[1], [0], [0], [1], [0, 0, 1, 1], [], []>} : vector<4x32xf32>, vector<32x32xf32>, vector<4x32xf32> -> vector<4x32xf32>
    %50 = arith.addf %48, %49 : vector<4x32xf32>
    %51 = math.tanh %50 : vector<4x32xf32>
    %cst_38 = arith.constant dense<0.000000e+00> : vector<4x32xf32>
    %52 = tpu.matmul %41, %0, %cst_38 {dimension_numbers = #tpu.dot_dimension_numbers<[1], [0], [0], [1], [0, 0, 1, 1], [], []>} : vector<4x32xf32>, vector<32x32xf32>, vector<4x32xf32> -> vector<4x32xf32>
    %cst_39 = arith.constant dense<0.000000e+00> : vector<4x32xf32>
    %53 = tpu.matmul %29, %1, %cst_39 {dimension_numbers = #tpu.dot_dimension_numbers<[1], [0], [0], [1], [0, 0, 1, 1], [], []>} : vector<4x32xf32>, vector<32x32xf32>, vector<4x32xf32> -> vector<4x32xf32>
    %54 = arith.addf %52, %53 : vector<4x32xf32>
    %55 = arith.addf %54, %8 : vector<4x32xf32>
    %56 = math.tanh %55 : vector<4x32xf32>
    %cst_40 = arith.constant dense<0.000000e+00> : vector<4x64xf32>
    %57 = tpu.matmul %56, %2, %cst_40 {dimension_numbers = #tpu.dot_dimension_numbers<[1], [0], [0], [1], [0, 0, 1, 1], [], []>} : vector<4x32xf32>, vector<32x64xf32>, vector<4x64xf32> -> vector<4x64xf32>
    %58 = arith.addf %57, %11 : vector<4x64xf32>
    %cst_41 = arith.constant dense<0xFF800000> : vector<4xf32>
    %59 = vector.multi_reduction <maximumf>, %58, %cst_41 [1] : vector<4x64xf32> to vector<4xf32>
    %60 = vector.shape_cast %59 : vector<4xf32> to vector<4x1xf32>
    %61 = vector.broadcast %60 : vector<4x1xf32> to vector<4x64xf32>
    %62 = arith.subf %58, %61 : vector<4x64xf32>
    %63 = math.exp %62 : vector<4x64xf32>
    %cst_42 = arith.constant dense<0.000000e+00> : vector<4xf32>
    %64 = vector.multi_reduction <add>, %63, %cst_42 [1] : vector<4x64xf32> to vector<4xf32>
    %65 = vector.shape_cast %64 : vector<4xf32> to vector<4x1xf32>
    %66 = vector.broadcast %65 : vector<4x1xf32> to vector<4x64xf32>
    %67 = arith.divf %63, %66 : vector<4x64xf32>
    %cst_43 = arith.constant dense<0.000000e+00> : vector<4x32xf32>
    %68 = tpu.matmul %67, %3, %cst_43 {dimension_numbers = #tpu.dot_dimension_numbers<[1], [0], [0], [1], [0, 0, 1, 1], [], []>} : vector<4x64xf32>, vector<64x32xf32>, vector<4x32xf32> -> vector<4x32xf32>
    %cst_44 = arith.constant dense<0.000000e+00> : vector<4x32xf32>
    %69 = tpu.matmul %68, %4, %cst_44 {dimension_numbers = #tpu.dot_dimension_numbers<[1], [0], [0], [1], [0, 0, 1, 1], [], []>} : vector<4x32xf32>, vector<32x32xf32>, vector<4x32xf32> -> vector<4x32xf32>
    %cst_45 = arith.constant dense<0.000000e+00> : vector<4x32xf32>
    %70 = tpu.matmul %46, %5, %cst_45 {dimension_numbers = #tpu.dot_dimension_numbers<[1], [0], [0], [1], [0, 0, 1, 1], [], []>} : vector<4x32xf32>, vector<32x32xf32>, vector<4x32xf32> -> vector<4x32xf32>
    %71 = arith.addf %69, %70 : vector<4x32xf32>
    %72 = arith.addf %71, %14 : vector<4x32xf32>
    %73 = math.tanh %72 : vector<4x32xf32>
    %c1 = arith.constant 1 : index
    %c0_46 = arith.constant 0 : index
    %c0_47 = arith.constant 0 : index
    %74 = vector.load %arg0[%c1, %c0_46, %c0_47] : memref<8x4x32xf32, #tpu.memory_space<vmem>>, vector<1x4x32xf32>
    %75 = vector.shape_cast %74 : vector<1x4x32xf32> to vector<4x32xf32>
    %cst_48 = arith.constant dense<0.000000e+00> : vector<4x32xf32>
    %76 = tpu.matmul %51, %5, %cst_48 {dimension_numbers = #tpu.dot_dimension_numbers<[1], [0], [0], [1], [0, 0, 1, 1], [], []>} : vector<4x32xf32>, vector<32x32xf32>, vector<4x32xf32> -> vector<4x32xf32>
    %77 = arith.addf %75, %76 : vector<4x32xf32>
    %78 = math.tanh %77 : vector<4x32xf32>
    %cst_49 = arith.constant dense<0.000000e+00> : vector<4x32xf32>
    %79 = tpu.matmul %68, %0, %cst_49 {dimension_numbers = #tpu.dot_dimension_numbers<[1], [0], [0], [1], [0, 0, 1, 1], [], []>} : vector<4x32xf32>, vector<32x32xf32>, vector<4x32xf32> -> vector<4x32xf32>
    %cst_50 = arith.constant dense<0.000000e+00> : vector<4x32xf32>
    %80 = tpu.matmul %56, %1, %cst_50 {dimension_numbers = #tpu.dot_dimension_numbers<[1], [0], [0], [1], [0, 0, 1, 1], [], []>} : vector<4x32xf32>, vector<32x32xf32>, vector<4x32xf32> -> vector<4x32xf32>
    %81 = arith.addf %79, %80 : vector<4x32xf32>
    %82 = arith.addf %81, %8 : vector<4x32xf32>
    %83 = math.tanh %82 : vector<4x32xf32>
    %cst_51 = arith.constant dense<0.000000e+00> : vector<4x64xf32>
    %84 = tpu.matmul %83, %2, %cst_51 {dimension_numbers = #tpu.dot_dimension_numbers<[1], [0], [0], [1], [0, 0, 1, 1], [], []>} : vector<4x32xf32>, vector<32x64xf32>, vector<4x64xf32> -> vector<4x64xf32>
    %85 = arith.addf %84, %11 : vector<4x64xf32>
    %cst_52 = arith.constant dense<0xFF800000> : vector<4xf32>
    %86 = vector.multi_reduction <maximumf>, %85, %cst_52 [1] : vector<4x64xf32> to vector<4xf32>
    %87 = vector.shape_cast %86 : vector<4xf32> to vector<4x1xf32>
    %88 = vector.broadcast %87 : vector<4x1xf32> to vector<4x64xf32>
    %89 = arith.subf %85, %88 : vector<4x64xf32>
    %90 = math.exp %89 : vector<4x64xf32>
    %cst_53 = arith.constant dense<0.000000e+00> : vector<4xf32>
    %91 = vector.multi_reduction <add>, %90, %cst_53 [1] : vector<4x64xf32> to vector<4xf32>
    %92 = vector.shape_cast %91 : vector<4xf32> to vector<4x1xf32>
    %93 = vector.broadcast %92 : vector<4x1xf32> to vector<4x64xf32>
    %94 = arith.divf %90, %93 : vector<4x64xf32>
    %cst_54 = arith.constant dense<0.000000e+00> : vector<4x32xf32>
    %95 = tpu.matmul %94, %3, %cst_54 {dimension_numbers = #tpu.dot_dimension_numbers<[1], [0], [0], [1], [0, 0, 1, 1], [], []>} : vector<4x64xf32>, vector<64x32xf32>, vector<4x32xf32> -> vector<4x32xf32>
    %cst_55 = arith.constant dense<0.000000e+00> : vector<4x32xf32>
    %96 = tpu.matmul %95, %4, %cst_55 {dimension_numbers = #tpu.dot_dimension_numbers<[1], [0], [0], [1], [0, 0, 1, 1], [], []>} : vector<4x32xf32>, vector<32x32xf32>, vector<4x32xf32> -> vector<4x32xf32>
    %cst_56 = arith.constant dense<0.000000e+00> : vector<4x32xf32>
    %97 = tpu.matmul %73, %5, %cst_56 {dimension_numbers = #tpu.dot_dimension_numbers<[1], [0], [0], [1], [0, 0, 1, 1], [], []>} : vector<4x32xf32>, vector<32x32xf32>, vector<4x32xf32> -> vector<4x32xf32>
    %98 = arith.addf %96, %97 : vector<4x32xf32>
    %99 = arith.addf %98, %14 : vector<4x32xf32>
    %100 = math.tanh %99 : vector<4x32xf32>
    %c2 = arith.constant 2 : index
    %c0_57 = arith.constant 0 : index
    %c0_58 = arith.constant 0 : index
    %101 = vector.load %arg0[%c2, %c0_57, %c0_58] : memref<8x4x32xf32, #tpu.memory_space<vmem>>, vector<1x4x32xf32>
    %102 = vector.shape_cast %101 : vector<1x4x32xf32> to vector<4x32xf32>
    %cst_59 = arith.constant dense<0.000000e+00> : vector<4x32xf32>
    %103 = tpu.matmul %78, %5, %cst_59 {dimension_numbers = #tpu.dot_dimension_numbers<[1], [0], [0], [1], [0, 0, 1, 1], [], []>} : vector<4x32xf32>, vector<32x32xf32>, vector<4x32xf32> -> vector<4x32xf32>
    %104 = arith.addf %102, %103 : vector<4x32xf32>
    %105 = math.tanh %104 : vector<4x32xf32>
    %cst_60 = arith.constant dense<0.000000e+00> : vector<4x32xf32>
    %106 = tpu.matmul %95, %0, %cst_60 {dimension_numbers = #tpu.dot_dimension_numbers<[1], [0], [0], [1], [0, 0, 1, 1], [], []>} : vector<4x32xf32>, vector<32x32xf32>, vector<4x32xf32> -> vector<4x32xf32>
    %cst_61 = arith.constant dense<0.000000e+00> : vector<4x32xf32>
    %107 = tpu.matmul %83, %1, %cst_61 {dimension_numbers = #tpu.dot_dimension_numbers<[1], [0], [0], [1], [0, 0, 1, 1], [], []>} : vector<4x32xf32>, vector<32x32xf32>, vector<4x32xf32> -> vector<4x32xf32>
    %108 = arith.addf %106, %107 : vector<4x32xf32>
    %109 = arith.addf %108, %8 : vector<4x32xf32>
    %110 = math.tanh %109 : vector<4x32xf32>
    %cst_62 = arith.constant dense<0.000000e+00> : vector<4x64xf32>
    %111 = tpu.matmul %110, %2, %cst_62 {dimension_numbers = #tpu.dot_dimension_numbers<[1], [0], [0], [1], [0, 0, 1, 1], [], []>} : vector<4x32xf32>, vector<32x64xf32>, vector<4x64xf32> -> vector<4x64xf32>
    %112 = arith.addf %111, %11 : vector<4x64xf32>
    %cst_63 = arith.constant dense<0xFF800000> : vector<4xf32>
    %113 = vector.multi_reduction <maximumf>, %112, %cst_63 [1] : vector<4x64xf32> to vector<4xf32>
    %114 = vector.shape_cast %113 : vector<4xf32> to vector<4x1xf32>
    %115 = vector.broadcast %114 : vector<4x1xf32> to vector<4x64xf32>
    %116 = arith.subf %112, %115 : vector<4x64xf32>
    %117 = math.exp %116 : vector<4x64xf32>
    %cst_64 = arith.constant dense<0.000000e+00> : vector<4xf32>
    %118 = vector.multi_reduction <add>, %117, %cst_64 [1] : vector<4x64xf32> to vector<4xf32>
    %119 = vector.shape_cast %118 : vector<4xf32> to vector<4x1xf32>
    %120 = vector.broadcast %119 : vector<4x1xf32> to vector<4x64xf32>
    %121 = arith.divf %117, %120 : vector<4x64xf32>
    %cst_65 = arith.constant dense<0.000000e+00> : vector<4x32xf32>
    %122 = tpu.matmul %121, %3, %cst_65 {dimension_numbers = #tpu.dot_dimension_numbers<[1], [0], [0], [1], [0, 0, 1, 1], [], []>} : vector<4x64xf32>, vector<64x32xf32>, vector<4x32xf32> -> vector<4x32xf32>
    %cst_66 = arith.constant dense<0.000000e+00> : vector<4x32xf32>
    %123 = tpu.matmul %122, %4, %cst_66 {dimension_numbers = #tpu.dot_dimension_numbers<[1], [0], [0], [1], [0, 0, 1, 1], [], []>} : vector<4x32xf32>, vector<32x32xf32>, vector<4x32xf32> -> vector<4x32xf32>
    %cst_67 = arith.constant dense<0.000000e+00> : vector<4x32xf32>
    %124 = tpu.matmul %100, %5, %cst_67 {dimension_numbers = #tpu.dot_dimension_numbers<[1], [0], [0], [1], [0, 0, 1, 1], [], []>} : vector<4x32xf32>, vector<32x32xf32>, vector<4x32xf32> -> vector<4x32xf32>
    %125 = arith.addf %123, %124 : vector<4x32xf32>
    %126 = arith.addf %125, %14 : vector<4x32xf32>
    %127 = math.tanh %126 : vector<4x32xf32>
    %c3 = arith.constant 3 : index
    %c0_68 = arith.constant 0 : index
    %c0_69 = arith.constant 0 : index
    %128 = vector.load %arg0[%c3, %c0_68, %c0_69] : memref<8x4x32xf32, #tpu.memory_space<vmem>>, vector<1x4x32xf32>
    %129 = vector.shape_cast %128 : vector<1x4x32xf32> to vector<4x32xf32>
    %cst_70 = arith.constant dense<0.000000e+00> : vector<4x32xf32>
    %130 = tpu.matmul %105, %5, %cst_70 {dimension_numbers = #tpu.dot_dimension_numbers<[1], [0], [0], [1], [0, 0, 1, 1], [], []>} : vector<4x32xf32>, vector<32x32xf32>, vector<4x32xf32> -> vector<4x32xf32>
    %131 = arith.addf %129, %130 : vector<4x32xf32>
    %132 = math.tanh %131 : vector<4x32xf32>
    %cst_71 = arith.constant dense<0.000000e+00> : vector<4x32xf32>
    %133 = tpu.matmul %122, %0, %cst_71 {dimension_numbers = #tpu.dot_dimension_numbers<[1], [0], [0], [1], [0, 0, 1, 1], [], []>} : vector<4x32xf32>, vector<32x32xf32>, vector<4x32xf32> -> vector<4x32xf32>
    %cst_72 = arith.constant dense<0.000000e+00> : vector<4x32xf32>
    %134 = tpu.matmul %110, %1, %cst_72 {dimension_numbers = #tpu.dot_dimension_numbers<[1], [0], [0], [1], [0, 0, 1, 1], [], []>} : vector<4x32xf32>, vector<32x32xf32>, vector<4x32xf32> -> vector<4x32xf32>
    %135 = arith.addf %133, %134 : vector<4x32xf32>
    %136 = arith.addf %135, %8 : vector<4x32xf32>
    %137 = math.tanh %136 : vector<4x32xf32>
    %cst_73 = arith.constant dense<0.000000e+00> : vector<4x64xf32>
    %138 = tpu.matmul %137, %2, %cst_73 {dimension_numbers = #tpu.dot_dimension_numbers<[1], [0], [0], [1], [0, 0, 1, 1], [], []>} : vector<4x32xf32>, vector<32x64xf32>, vector<4x64xf32> -> vector<4x64xf32>
    %139 = arith.addf %138, %11 : vector<4x64xf32>
    %cst_74 = arith.constant dense<0xFF800000> : vector<4xf32>
    %140 = vector.multi_reduction <maximumf>, %139, %cst_74 [1] : vector<4x64xf32> to vector<4xf32>
    %141 = vector.shape_cast %140 : vector<4xf32> to vector<4x1xf32>
    %142 = vector.broadcast %141 : vector<4x1xf32> to vector<4x64xf32>
    %143 = arith.subf %139, %142 : vector<4x64xf32>
    %144 = math.exp %143 : vector<4x64xf32>
    %cst_75 = arith.constant dense<0.000000e+00> : vector<4xf32>
    %145 = vector.multi_reduction <add>, %144, %cst_75 [1] : vector<4x64xf32> to vector<4xf32>
    %146 = vector.shape_cast %145 : vector<4xf32> to vector<4x1xf32>
    %147 = vector.broadcast %146 : vector<4x1xf32> to vector<4x64xf32>
    %148 = arith.divf %144, %147 : vector<4x64xf32>
    %cst_76 = arith.constant dense<0.000000e+00> : vector<4x32xf32>
    %149 = tpu.matmul %148, %3, %cst_76 {dimension_numbers = #tpu.dot_dimension_numbers<[1], [0], [0], [1], [0, 0, 1, 1], [], []>} : vector<4x64xf32>, vector<64x32xf32>, vector<4x32xf32> -> vector<4x32xf32>
    %cst_77 = arith.constant dense<0.000000e+00> : vector<4x32xf32>
    %150 = tpu.matmul %149, %4, %cst_77 {dimension_numbers = #tpu.dot_dimension_numbers<[1], [0], [0], [1], [0, 0, 1, 1], [], []>} : vector<4x32xf32>, vector<32x32xf32>, vector<4x32xf32> -> vector<4x32xf32>
    %cst_78 = arith.constant dense<0.000000e+00> : vector<4x32xf32>
    %151 = tpu.matmul %127, %5, %cst_78 {dimension_numbers = #tpu.dot_dimension_numbers<[1], [0], [0], [1], [0, 0, 1, 1], [], []>} : vector<4x32xf32>, vector<32x32xf32>, vector<4x32xf32> -> vector<4x32xf32>
    %152 = arith.addf %150, %151 : vector<4x32xf32>
    %153 = arith.addf %152, %14 : vector<4x32xf32>
    %154 = math.tanh %153 : vector<4x32xf32>
    %c4 = arith.constant 4 : index
    %c0_79 = arith.constant 0 : index
    %c0_80 = arith.constant 0 : index
    %155 = vector.load %arg0[%c4, %c0_79, %c0_80] : memref<8x4x32xf32, #tpu.memory_space<vmem>>, vector<1x4x32xf32>
    %156 = vector.shape_cast %155 : vector<1x4x32xf32> to vector<4x32xf32>
    %cst_81 = arith.constant dense<0.000000e+00> : vector<4x32xf32>
    %157 = tpu.matmul %132, %5, %cst_81 {dimension_numbers = #tpu.dot_dimension_numbers<[1], [0], [0], [1], [0, 0, 1, 1], [], []>} : vector<4x32xf32>, vector<32x32xf32>, vector<4x32xf32> -> vector<4x32xf32>
    %158 = arith.addf %156, %157 : vector<4x32xf32>
    %159 = math.tanh %158 : vector<4x32xf32>
    %cst_82 = arith.constant dense<0.000000e+00> : vector<4x32xf32>
    %160 = tpu.matmul %149, %0, %cst_82 {dimension_numbers = #tpu.dot_dimension_numbers<[1], [0], [0], [1], [0, 0, 1, 1], [], []>} : vector<4x32xf32>, vector<32x32xf32>, vector<4x32xf32> -> vector<4x32xf32>
    %cst_83 = arith.constant dense<0.000000e+00> : vector<4x32xf32>
    %161 = tpu.matmul %137, %1, %cst_83 {dimension_numbers = #tpu.dot_dimension_numbers<[1], [0], [0], [1], [0, 0, 1, 1], [], []>} : vector<4x32xf32>, vector<32x32xf32>, vector<4x32xf32> -> vector<4x32xf32>
    %162 = arith.addf %160, %161 : vector<4x32xf32>
    %163 = arith.addf %162, %8 : vector<4x32xf32>
    %164 = math.tanh %163 : vector<4x32xf32>
    %cst_84 = arith.constant dense<0.000000e+00> : vector<4x64xf32>
    %165 = tpu.matmul %164, %2, %cst_84 {dimension_numbers = #tpu.dot_dimension_numbers<[1], [0], [0], [1], [0, 0, 1, 1], [], []>} : vector<4x32xf32>, vector<32x64xf32>, vector<4x64xf32> -> vector<4x64xf32>
    %166 = arith.addf %165, %11 : vector<4x64xf32>
    %cst_85 = arith.constant dense<0xFF800000> : vector<4xf32>
    %167 = vector.multi_reduction <maximumf>, %166, %cst_85 [1] : vector<4x64xf32> to vector<4xf32>
    %168 = vector.shape_cast %167 : vector<4xf32> to vector<4x1xf32>
    %169 = vector.broadcast %168 : vector<4x1xf32> to vector<4x64xf32>
    %170 = arith.subf %166, %169 : vector<4x64xf32>
    %171 = math.exp %170 : vector<4x64xf32>
    %cst_86 = arith.constant dense<0.000000e+00> : vector<4xf32>
    %172 = vector.multi_reduction <add>, %171, %cst_86 [1] : vector<4x64xf32> to vector<4xf32>
    %173 = vector.shape_cast %172 : vector<4xf32> to vector<4x1xf32>
    %174 = vector.broadcast %173 : vector<4x1xf32> to vector<4x64xf32>
    %175 = arith.divf %171, %174 : vector<4x64xf32>
    %cst_87 = arith.constant dense<0.000000e+00> : vector<4x32xf32>
    %176 = tpu.matmul %175, %3, %cst_87 {dimension_numbers = #tpu.dot_dimension_numbers<[1], [0], [0], [1], [0, 0, 1, 1], [], []>} : vector<4x64xf32>, vector<64x32xf32>, vector<4x32xf32> -> vector<4x32xf32>
    %cst_88 = arith.constant dense<0.000000e+00> : vector<4x32xf32>
    %177 = tpu.matmul %176, %4, %cst_88 {dimension_numbers = #tpu.dot_dimension_numbers<[1], [0], [0], [1], [0, 0, 1, 1], [], []>} : vector<4x32xf32>, vector<32x32xf32>, vector<4x32xf32> -> vector<4x32xf32>
    %cst_89 = arith.constant dense<0.000000e+00> : vector<4x32xf32>
    %178 = tpu.matmul %154, %5, %cst_89 {dimension_numbers = #tpu.dot_dimension_numbers<[1], [0], [0], [1], [0, 0, 1, 1], [], []>} : vector<4x32xf32>, vector<32x32xf32>, vector<4x32xf32> -> vector<4x32xf32>
    %179 = arith.addf %177, %178 : vector<4x32xf32>
    %180 = arith.addf %179, %14 : vector<4x32xf32>
    %181 = math.tanh %180 : vector<4x32xf32>
    %c5 = arith.constant 5 : index
    %c0_90 = arith.constant 0 : index
    %c0_91 = arith.constant 0 : index
    %182 = vector.load %arg0[%c5, %c0_90, %c0_91] : memref<8x4x32xf32, #tpu.memory_space<vmem>>, vector<1x4x32xf32>
    %183 = vector.shape_cast %182 : vector<1x4x32xf32> to vector<4x32xf32>
    %cst_92 = arith.constant dense<0.000000e+00> : vector<4x32xf32>
    %184 = tpu.matmul %159, %5, %cst_92 {dimension_numbers = #tpu.dot_dimension_numbers<[1], [0], [0], [1], [0, 0, 1, 1], [], []>} : vector<4x32xf32>, vector<32x32xf32>, vector<4x32xf32> -> vector<4x32xf32>
    %185 = arith.addf %183, %184 : vector<4x32xf32>
    %186 = math.tanh %185 : vector<4x32xf32>
    %cst_93 = arith.constant dense<0.000000e+00> : vector<4x32xf32>
    %187 = tpu.matmul %176, %0, %cst_93 {dimension_numbers = #tpu.dot_dimension_numbers<[1], [0], [0], [1], [0, 0, 1, 1], [], []>} : vector<4x32xf32>, vector<32x32xf32>, vector<4x32xf32> -> vector<4x32xf32>
    %cst_94 = arith.constant dense<0.000000e+00> : vector<4x32xf32>
    %188 = tpu.matmul %164, %1, %cst_94 {dimension_numbers = #tpu.dot_dimension_numbers<[1], [0], [0], [1], [0, 0, 1, 1], [], []>} : vector<4x32xf32>, vector<32x32xf32>, vector<4x32xf32> -> vector<4x32xf32>
    %189 = arith.addf %187, %188 : vector<4x32xf32>
    %190 = arith.addf %189, %8 : vector<4x32xf32>
    %191 = math.tanh %190 : vector<4x32xf32>
    %cst_95 = arith.constant dense<0.000000e+00> : vector<4x64xf32>
    %192 = tpu.matmul %191, %2, %cst_95 {dimension_numbers = #tpu.dot_dimension_numbers<[1], [0], [0], [1], [0, 0, 1, 1], [], []>} : vector<4x32xf32>, vector<32x64xf32>, vector<4x64xf32> -> vector<4x64xf32>
    %193 = arith.addf %192, %11 : vector<4x64xf32>
    %cst_96 = arith.constant dense<0xFF800000> : vector<4xf32>
    %194 = vector.multi_reduction <maximumf>, %193, %cst_96 [1] : vector<4x64xf32> to vector<4xf32>
    %195 = vector.shape_cast %194 : vector<4xf32> to vector<4x1xf32>
    %196 = vector.broadcast %195 : vector<4x1xf32> to vector<4x64xf32>
    %197 = arith.subf %193, %196 : vector<4x64xf32>
    %198 = math.exp %197 : vector<4x64xf32>
    %cst_97 = arith.constant dense<0.000000e+00> : vector<4xf32>
    %199 = vector.multi_reduction <add>, %198, %cst_97 [1] : vector<4x64xf32> to vector<4xf32>
    %200 = vector.shape_cast %199 : vector<4xf32> to vector<4x1xf32>
    %201 = vector.broadcast %200 : vector<4x1xf32> to vector<4x64xf32>
    %202 = arith.divf %198, %201 : vector<4x64xf32>
    %cst_98 = arith.constant dense<0.000000e+00> : vector<4x32xf32>
    %203 = tpu.matmul %202, %3, %cst_98 {dimension_numbers = #tpu.dot_dimension_numbers<[1], [0], [0], [1], [0, 0, 1, 1], [], []>} : vector<4x64xf32>, vector<64x32xf32>, vector<4x32xf32> -> vector<4x32xf32>
    %cst_99 = arith.constant dense<0.000000e+00> : vector<4x32xf32>
    %204 = tpu.matmul %203, %4, %cst_99 {dimension_numbers = #tpu.dot_dimension_numbers<[1], [0], [0], [1], [0, 0, 1, 1], [], []>} : vector<4x32xf32>, vector<32x32xf32>, vector<4x32xf32> -> vector<4x32xf32>
    %cst_100 = arith.constant dense<0.000000e+00> : vector<4x32xf32>
    %205 = tpu.matmul %181, %5, %cst_100 {dimension_numbers = #tpu.dot_dimension_numbers<[1], [0], [0], [1], [0, 0, 1, 1], [], []>} : vector<4x32xf32>, vector<32x32xf32>, vector<4x32xf32> -> vector<4x32xf32>
    %206 = arith.addf %204, %205 : vector<4x32xf32>
    %207 = arith.addf %206, %14 : vector<4x32xf32>
    %208 = math.tanh %207 : vector<4x32xf32>
    %c6 = arith.constant 6 : index
    %c0_101 = arith.constant 0 : index
    %c0_102 = arith.constant 0 : index
    %209 = vector.load %arg0[%c6, %c0_101, %c0_102] : memref<8x4x32xf32, #tpu.memory_space<vmem>>, vector<1x4x32xf32>
    %210 = vector.shape_cast %209 : vector<1x4x32xf32> to vector<4x32xf32>
    %cst_103 = arith.constant dense<0.000000e+00> : vector<4x32xf32>
    %211 = tpu.matmul %186, %5, %cst_103 {dimension_numbers = #tpu.dot_dimension_numbers<[1], [0], [0], [1], [0, 0, 1, 1], [], []>} : vector<4x32xf32>, vector<32x32xf32>, vector<4x32xf32> -> vector<4x32xf32>
    %212 = arith.addf %210, %211 : vector<4x32xf32>
    %213 = math.tanh %212 : vector<4x32xf32>
    %cst_104 = arith.constant dense<0.000000e+00> : vector<4x32xf32>
    %214 = tpu.matmul %203, %0, %cst_104 {dimension_numbers = #tpu.dot_dimension_numbers<[1], [0], [0], [1], [0, 0, 1, 1], [], []>} : vector<4x32xf32>, vector<32x32xf32>, vector<4x32xf32> -> vector<4x32xf32>
    %cst_105 = arith.constant dense<0.000000e+00> : vector<4x32xf32>
    %215 = tpu.matmul %191, %1, %cst_105 {dimension_numbers = #tpu.dot_dimension_numbers<[1], [0], [0], [1], [0, 0, 1, 1], [], []>} : vector<4x32xf32>, vector<32x32xf32>, vector<4x32xf32> -> vector<4x32xf32>
    %216 = arith.addf %214, %215 : vector<4x32xf32>
    %217 = arith.addf %216, %8 : vector<4x32xf32>
    %218 = math.tanh %217 : vector<4x32xf32>
    %cst_106 = arith.constant dense<0.000000e+00> : vector<4x64xf32>
    %219 = tpu.matmul %218, %2, %cst_106 {dimension_numbers = #tpu.dot_dimension_numbers<[1], [0], [0], [1], [0, 0, 1, 1], [], []>} : vector<4x32xf32>, vector<32x64xf32>, vector<4x64xf32> -> vector<4x64xf32>
    %220 = arith.addf %219, %11 : vector<4x64xf32>
    %cst_107 = arith.constant dense<0xFF800000> : vector<4xf32>
    %221 = vector.multi_reduction <maximumf>, %220, %cst_107 [1] : vector<4x64xf32> to vector<4xf32>
    %222 = vector.shape_cast %221 : vector<4xf32> to vector<4x1xf32>
    %223 = vector.broadcast %222 : vector<4x1xf32> to vector<4x64xf32>
    %224 = arith.subf %220, %223 : vector<4x64xf32>
    %225 = math.exp %224 : vector<4x64xf32>
    %cst_108 = arith.constant dense<0.000000e+00> : vector<4xf32>
    %226 = vector.multi_reduction <add>, %225, %cst_108 [1] : vector<4x64xf32> to vector<4xf32>
    %227 = vector.shape_cast %226 : vector<4xf32> to vector<4x1xf32>
    %228 = vector.broadcast %227 : vector<4x1xf32> to vector<4x64xf32>
    %229 = arith.divf %225, %228 : vector<4x64xf32>
    %cst_109 = arith.constant dense<0.000000e+00> : vector<4x32xf32>
    %230 = tpu.matmul %229, %3, %cst_109 {dimension_numbers = #tpu.dot_dimension_numbers<[1], [0], [0], [1], [0, 0, 1, 1], [], []>} : vector<4x64xf32>, vector<64x32xf32>, vector<4x32xf32> -> vector<4x32xf32>
    %cst_110 = arith.constant dense<0.000000e+00> : vector<4x32xf32>
    %231 = tpu.matmul %230, %4, %cst_110 {dimension_numbers = #tpu.dot_dimension_numbers<[1], [0], [0], [1], [0, 0, 1, 1], [], []>} : vector<4x32xf32>, vector<32x32xf32>, vector<4x32xf32> -> vector<4x32xf32>
    %cst_111 = arith.constant dense<0.000000e+00> : vector<4x32xf32>
    %232 = tpu.matmul %208, %5, %cst_111 {dimension_numbers = #tpu.dot_dimension_numbers<[1], [0], [0], [1], [0, 0, 1, 1], [], []>} : vector<4x32xf32>, vector<32x32xf32>, vector<4x32xf32> -> vector<4x32xf32>
    %233 = arith.addf %231, %232 : vector<4x32xf32>
    %234 = arith.addf %233, %14 : vector<4x32xf32>
    %235 = math.tanh %234 : vector<4x32xf32>
    %c7 = arith.constant 7 : index
    %c0_112 = arith.constant 0 : index
    %c0_113 = arith.constant 0 : index
    %236 = vector.load %arg0[%c7, %c0_112, %c0_113] : memref<8x4x32xf32, #tpu.memory_space<vmem>>, vector<1x4x32xf32>
    %237 = vector.shape_cast %236 : vector<1x4x32xf32> to vector<4x32xf32>
    %cst_114 = arith.constant dense<0.000000e+00> : vector<4x32xf32>
    %238 = tpu.matmul %213, %5, %cst_114 {dimension_numbers = #tpu.dot_dimension_numbers<[1], [0], [0], [1], [0, 0, 1, 1], [], []>} : vector<4x32xf32>, vector<32x32xf32>, vector<4x32xf32> -> vector<4x32xf32>
    %239 = arith.addf %237, %238 : vector<4x32xf32>
    %240 = math.tanh %239 : vector<4x32xf32>
    %c0_115 = arith.constant 0 : index
    %c0_116 = arith.constant 0 : index
    %241 = vector.load %arg13[%c0_115, %c0_116] : memref<32x1xf32, #tpu.memory_space<vmem>>, vector<32x1xf32>
    %cst_117 = arith.constant dense<0.000000e+00> : vector<4x1xf32>
    %242 = tpu.matmul %235, %241, %cst_117 {dimension_numbers = #tpu.dot_dimension_numbers<[1], [0], [0], [1], [0, 0, 1, 1], [], []>} : vector<4x32xf32>, vector<32x1xf32>, vector<4x1xf32> -> vector<4x1xf32>
    %c0_118 = arith.constant 0 : index
    %c0_119 = arith.constant 0 : index
    %243 = vector.load %arg14[%c0_118, %c0_119] : memref<1x1xf32, #tpu.memory_space<vmem>>, vector<1x1xf32>
    %244 = vector.broadcast %243 : vector<1x1xf32> to vector<4x1xf32>
    %245 = arith.addf %242, %244 : vector<4x1xf32>
    %c0_120 = arith.constant 0 : index
    %c0_121 = arith.constant 0 : index
    %246 = vector.load %arg13[%c0_120, %c0_121] : memref<32x1xf32, #tpu.memory_space<vmem>>, vector<32x1xf32>
    %cst_122 = arith.constant dense<0.000000e+00> : vector<4x1xf32>
    %247 = tpu.matmul %240, %246, %cst_122 {dimension_numbers = #tpu.dot_dimension_numbers<[1], [0], [0], [1], [0, 0, 1, 1], [], []>} : vector<4x32xf32>, vector<32x1xf32>, vector<4x1xf32> -> vector<4x1xf32>
    %c0_123 = arith.constant 0 : index
    %c0_124 = arith.constant 0 : index
    %248 = vector.load %arg14[%c0_123, %c0_124] : memref<1x1xf32, #tpu.memory_space<vmem>>, vector<1x1xf32>
    %249 = vector.broadcast %248 : vector<1x1xf32> to vector<4x1xf32>
    %250 = arith.addf %247, %249 : vector<4x1xf32>
    %cst_125 = arith.constant 0.000000e+00 : f32
    %251 = vector.broadcast %cst_125 : f32 to vector<4x1xf32>
    %252 = arith.subf %251, %250 : vector<4x1xf32>
    %cst_126 = arith.constant 0.000000e+00 : f32
    %253 = vector.broadcast %cst_126 : f32 to vector<4x1xf32>
    %254 = arith.maximumf %252, %253 : vector<4x1xf32>
    %255 = math.absf %252 : vector<4x1xf32>
    %cst_127 = arith.constant 0.000000e+00 : f32
    %256 = vector.broadcast %cst_127 : f32 to vector<4x1xf32>
    %257 = arith.subf %256, %255 : vector<4x1xf32>
    %258 = math.exp %257 : vector<4x1xf32>
    %259 = math.log1p %258 : vector<4x1xf32>
    %260 = arith.addf %254, %259 : vector<4x1xf32>
    %cst_128 = arith.constant 0.000000e+00 : f32
    %261 = vector.broadcast %cst_128 : f32 to vector<4x1xf32>
    %262 = arith.maximumf %245, %261 : vector<4x1xf32>
    %263 = math.absf %245 : vector<4x1xf32>
    %cst_129 = arith.constant 0.000000e+00 : f32
    %264 = vector.broadcast %cst_129 : f32 to vector<4x1xf32>
    %265 = arith.subf %264, %263 : vector<4x1xf32>
    %266 = math.exp %265 : vector<4x1xf32>
    %267 = math.log1p %266 : vector<4x1xf32>
    %268 = arith.addf %262, %267 : vector<4x1xf32>
    %269 = arith.addf %260, %268 : vector<4x1xf32>
    %270 = vector.shape_cast %269 : vector<4x1xf32> to vector<1x4x1xf32>
    %cst_130 = arith.constant dense<0.000000e+00> : vector<1xf32>
    %271 = vector.multi_reduction <add>, %270, %cst_130 [1, 2] : vector<1x4x1xf32> to vector<1xf32>
    %272 = vector.shape_cast %271 : vector<1xf32> to vector<1x1x1xf32>
    %273 = vector.extract %272[0, 0, 0] : f32 from vector<1x1x1xf32>
    %cst_131 = arith.constant 4.000000e+00 : f32
    %274 = arith.divf %273, %cst_131 : f32
    %cst_132 = arith.constant 0.000000e+00 : f32
    %275 = vector.broadcast %cst_132 : f32 to vector<4x1xf32>
    %276 = arith.subf %275, %245 : vector<4x1xf32>
    %cst_133 = arith.constant 0.000000e+00 : f32
    %277 = vector.broadcast %cst_133 : f32 to vector<4x1xf32>
    %278 = arith.maximumf %276, %277 : vector<4x1xf32>
    %279 = math.absf %276 : vector<4x1xf32>
    %cst_134 = arith.constant 0.000000e+00 : f32
    %280 = vector.broadcast %cst_134 : f32 to vector<4x1xf32>
    %281 = arith.subf %280, %279 : vector<4x1xf32>
    %282 = math.exp %281 : vector<4x1xf32>
    %283 = math.log1p %282 : vector<4x1xf32>
    %284 = arith.addf %278, %283 : vector<4x1xf32>
    %285 = vector.shape_cast %284 : vector<4x1xf32> to vector<1x4x1xf32>
    %cst_135 = arith.constant dense<0.000000e+00> : vector<1xf32>
    %286 = vector.multi_reduction <add>, %285, %cst_135 [1, 2] : vector<1x4x1xf32> to vector<1xf32>
    %287 = vector.shape_cast %286 : vector<1xf32> to vector<1x1x1xf32>
    %288 = vector.extract %287[0, 0, 0] : f32 from vector<1x1x1xf32>
    %cst_136 = arith.constant 4.000000e+00 : f32
    %289 = arith.divf %288, %cst_136 : f32
    %290 = vector.broadcast %274 : f32 to vector<1x1xf32>
    %c0_137 = arith.constant 0 : index
    %c0_138 = arith.constant 0 : index
    %291 = vector.load %arg15[%c0_137, %c0_138] : memref<1x1xf32, #tpu.memory_space<vmem>>, vector<1x1xf32>
    tpu.vector_store %arg15[%c0_137, %c0_138], %290 {strides = array<i32>} : memref<1x1xf32, #tpu.memory_space<vmem>>, vector<1x1xf32>,
    %292 = vector.broadcast %289 : f32 to vector<1x1xf32>
    %c0_139 = arith.constant 0 : index
    %c0_140 = arith.constant 0 : index
    %293 = vector.load %arg16[%c0_139, %c0_140] : memref<1x1xf32, #tpu.memory_space<vmem>>, vector<1x1xf32>
    tpu.vector_store %arg16[%c0_139, %c0_140], %292 {strides = array<i32>} : memref<1x1xf32, #tpu.memory_space<vmem>>, vector<1x1xf32>,
    return
  }
}

</mosaic_0001>

<llo_original>
// kernel: rgan_forward.1
$region0: #{rgan_forward.1}
  #allocation0 [shape = 'u32[]', space=smem, size = 0x4, offset = 0x4, fixed_abs, tag = 'smem constant byte address 0x4 - core index']
  #allocation1 [shape = 'u32[144,128]{1,0:T(1,128)}', space=vmem, size = 0x12000, scoped, tag = 'internal scratch']
  #allocation2 [shape = 'f32[1,1]{1,0:T(1,128)S(1)}', space=vmem, size = 0x200, scoped, tag = 'scoped memory for rgan_forward.1']
  %s0 = inlined_call_operand.vmem [shape: f32[8,4,32], index: 0, kind: input, shape index: {}]
  %s1 = inlined_call_operand.vmem [shape: f32[4,16], index: 1, kind: input, shape index: {}]
  %s2 = inlined_call_operand.vmem [shape: f32[16,32], index: 2, kind: input, shape index: {}]
  %s3 = inlined_call_operand.vmem [shape: f32[1,32], index: 3, kind: input, shape index: {}]
  %s4 = inlined_call_operand.vmem [shape: f32[32,32], index: 4, kind: input, shape index: {}]
  %s5 = inlined_call_operand.vmem [shape: f32[32,32], index: 5, kind: input, shape index: {}]
  %s6 = inlined_call_operand.vmem [shape: f32[1,32], index: 6, kind: input, shape index: {}]
  %s7 = inlined_call_operand.vmem [shape: f32[32,64], index: 7, kind: input, shape index: {}]
  %s8 = inlined_call_operand.vmem [shape: f32[1,64], index: 8, kind: input, shape index: {}]
  %s9 = inlined_call_operand.vmem [shape: f32[64,32], index: 9, kind: input, shape index: {}]
  %s10 = inlined_call_operand.vmem [shape: f32[32,32], index: 10, kind: input, shape index: {}]
  %s11 = inlined_call_operand.vmem [shape: f32[32,32], index: 11, kind: input, shape index: {}]
  %s12 = inlined_call_operand.vmem [shape: f32[1,32], index: 12, kind: input, shape index: {}]
  %s13 = inlined_call_operand.vmem [shape: f32[32,1], index: 13, kind: input, shape index: {}]
  %s14 = inlined_call_operand.<no memory space> [shape: f32[1,1], index: 14, kind: input, shape index: {}]
  %s15 = inlined_call_operand.hbm [shape: f32[1,1], index: 15, kind: output, shape index: {0}]
  %s16 = inlined_call_operand.hbm [shape: f32[1,1], index: 16, kind: output, shape index: {1}]
  %17 = xla_tuple %s15, %s16
  %s18 = sld [smem:[#allocation0]]
  $region78: #{rgan_forward.1} parent=0
    _
  %s20 = ssub.s32 1, %s18
  %s21 = scalar_select 0, %s20, %s18
  %v22 = vstv %s14
  %23 = vst [vmem:[#allocation2] sm:$0x1] %v22
  $region1: #{rgan_forward.1} parent=0
    #allocation3 [shape = 'u8[512]{0}', space=vmem, size = 0x400, scoped, tag = 'output window, operand 0, single buffered']
    #allocation4 [shape = 's32[1]{0}', space=sflag, size = 0x4, scoped, tag = 'scoped memory for rgan_forward.1']
    #allocation5 [shape = 'u8[512]{0}', space=vmem, size = 0x400, scoped, tag = 'output window, operand 1, single buffered']
    #allocation6 [shape = 's32[1]{0}', space=sflag, size = 0x4, scoped, tag = 'scoped memory for rgan_forward.1']
    %24 = vsyncpa [#allocation4], 0
    %25 = vsyncpa [#allocation6], 0
    // Predicated region
    $region2: #{rgan_forward.1} parent=1 // pred_check
      _
    $region3: #{rgan_forward.1} parent=1 // pred_check_branch
      %27 = sbr.rel (0) target = $region5
    $region4: #{rgan_forward.1} parent=1 // pred_region
      _
    $region5: #{rgan_forward.1} parent=1 // pred_fallthru
      _
    // Predicated region
    $region6: #{rgan_forward.1} parent=1 // pred_check
      _
    $region7: #{rgan_forward.1} parent=1 // pred_check_branch
      %29 = sbr.rel (0) target = $region9
    $region8: #{rgan_forward.1} parent=1 // pred_region
      _
    $region9: #{rgan_forward.1} parent=1 // pred_fallthru
      _
    // Predicated region
    $region10: #{rgan_forward.1} parent=1 // pred_check
      _
    $region11: #{rgan_forward.1} parent=1 // pred_check_branch
      %31 = sbr.rel (0) target = $region13
    $region12: #{rgan_forward.1} parent=1 // pred_region
      _
    $region13: #{rgan_forward.1} parent=1 // pred_fallthru
      _
    // Predicated region
    $region14: #{rgan_forward.1} parent=1 // pred_check
      _
    $region15: #{rgan_forward.1} parent=1 // pred_check_branch
      %33 = sbr.rel (0) target = $region17
    $region16: #{rgan_forward.1} parent=1 // pred_region
      _
    $region17: #{rgan_forward.1} parent=1 // pred_fallthru
      _
    // Predicated region
    $region18: #{rgan_forward.1} parent=1 // pred_check
      _
    $region19: #{rgan_forward.1} parent=1 // pred_check_branch
      %35 = sbr.rel (0) target = $region21
    $region20: #{rgan_forward.1} parent=1 // pred_region
      _
    $region21: #{rgan_forward.1} parent=1 // pred_fallthru
      _
    // Predicated region
    $region22: #{rgan_forward.1} parent=1 // pred_check
      _
    $region23: #{rgan_forward.1} parent=1 // pred_check_branch
      %37 = sbr.rel (0) target = $region25
    $region24: #{rgan_forward.1} parent=1 // pred_region
      _
    $region25: #{rgan_forward.1} parent=1 // pred_fallthru
      _
    // Predicated region
    $region26: #{rgan_forward.1} parent=1 // pred_check
      _
    $region27: #{rgan_forward.1} parent=1 // pred_check_branch
      %39 = sbr.rel (0) target = $region29
    $region28: #{rgan_forward.1} parent=1 // pred_region
      _
    $region29: #{rgan_forward.1} parent=1 // pred_fallthru
      _
    // Predicated region
    $region30: #{rgan_forward.1} parent=1 // pred_check
      _
    $region31: #{rgan_forward.1} parent=1 // pred_check_branch
      %41 = sbr.rel (0) target = $region33
    $region32: #{rgan_forward.1} parent=1 // pred_region
      _
    $region33: #{rgan_forward.1} parent=1 // pred_fallthru
      _
    // Predicated region
    $region34: #{rgan_forward.1} parent=1 // pred_check
      _
    $region35: #{rgan_forward.1} parent=1 // pred_check_branch
      %43 = sbr.rel (0) target = $region37
    $region36: #{rgan_forward.1} parent=1 // pred_region
      _
    $region37: #{rgan_forward.1} parent=1 // pred_fallthru
      _
    // Predicated region
    $region38: #{rgan_forward.1} parent=1 // pred_check
      _
    $region39: #{rgan_forward.1} parent=1 // pred_check_branch
      %45 = sbr.rel (0) target = $region41
    $region40: #{rgan_forward.1} parent=1 // pred_region
      _
    $region41: #{rgan_forward.1} parent=1 // pred_fallthru
      _
    // Predicated region
    $region42: #{rgan_forward.1} parent=1 // pred_check
      _
    $region43: #{rgan_forward.1} parent=1 // pred_check_branch
      %47 = sbr.rel (0) target = $region45
    $region44: #{rgan_forward.1} parent=1 // pred_region
      _
    $region45: #{rgan_forward.1} parent=1 // pred_fallthru
      _
    // Predicated region
    $region46: #{rgan_forward.1} parent=1 // pred_check
      _
    $region47: #{rgan_forward.1} parent=1 // pred_check_branch
      %49 = sbr.rel (0) target = $region49
    $region48: #{rgan_forward.1} parent=1 // pred_region
      _
    $region49: #{rgan_forward.1} parent=1 // pred_fallthru
      _
    // Predicated region
    $region50: #{rgan_forward.1} parent=1 // pred_check
      _
    $region51: #{rgan_forward.1} parent=1 // pred_check_branch
      %51 = sbr.rel (0) target = $region53
    $region52: #{rgan_forward.1} parent=1 // pred_region
      _
    $region53: #{rgan_forward.1} parent=1 // pred_fallthru
      _
    // Predicated region
    $region54: #{rgan_forward.1} parent=1 // pred_check
      _
    $region55: #{rgan_forward.1} parent=1 // pred_check_branch
      %53 = sbr.rel (0) target = $region57
    $region56: #{rgan_forward.1} parent=1 // pred_region
      _
    $region57: #{rgan_forward.1} parent=1 // pred_fallthru
      _
    // Predicated region
    $region58: #{rgan_forward.1} parent=1 // pred_check
      _
    $region59: #{rgan_forward.1} parent=1 // pred_check_branch
      %55 = sbr.rel (0) target = $region61
    $region60: #{rgan_forward.1} parent=1 // pred_region
      _
    $region61: #{rgan_forward.1} parent=1 // pred_fallthru
      _
    %v56 = vld [vmem:[%s4] sm:$0xff]
    %v57 = vld [vmem:[%s4 + $0x8] sm:$0xff]
    %v58 = vld [vmem:[%s4 + $0x10] sm:$0xff]
    %v59 = vld [vmem:[%s4 + $0x18] sm:$0xff]
    %v60 = vld [vmem:[%s5] sm:$0xff]
    %v61 = vld [vmem:[%s5 + $0x8] sm:$0xff]
    %v62 = vld [vmem:[%s5 + $0x10] sm:$0xff]
    %v63 = vld [vmem:[%s5 + $0x18] sm:$0xff]
    %v64 = vld [vmem:[%s7] sm:$0xff]
    %v65 = vld [vmem:[%s7 + $0x8] sm:$0xff]
    %v66 = vld [vmem:[%s7 + $0x10] sm:$0xff]
    %v67 = vld [vmem:[%s7 + $0x18] sm:$0xff]
    %v68 = vld [vmem:[%s9] sm:$0xff]
    %v69 = vld [vmem:[%s9 + $0x8] sm:$0xff]
    %v70 = vld [vmem:[%s9 + $0x10] sm:$0xff]
    %v71 = vld [vmem:[%s9 + $0x18] sm:$0xff]
    %v72 = vld [vmem:[%s9 + $0x20] sm:$0xff]
    %v73 = vld [vmem:[%s9 + $0x28] sm:$0xff]
    %v74 = vld [vmem:[%s9 + $0x30] sm:$0xff]
    %v75 = vld [vmem:[%s9 + $0x38] sm:$0xff]
    %v76 = vld [vmem:[%s10] sm:$0xff]
    %v77 = vld [vmem:[%s10 + $0x8] sm:$0xff]
    %v78 = vld [vmem:[%s10 + $0x10] sm:$0xff]
    %v79 = vld [vmem:[%s10 + $0x18] sm:$0xff]
    %v80 = vld [vmem:[%s11] sm:$0xff]
    %v81 = vld [vmem:[%s11 + $0x8] sm:$0xff]
    %v82 = vld [vmem:[%s11 + $0x10] sm:$0xff]
    %v83 = vld [vmem:[%s11 + $0x18] sm:$0xff]
    %v84 = vld [vmem:[%s6] sm:$0x1]
    %v86 = vlaneseq
    %v87 = vshrl.u32 %v86, 7
    %v88 = vsub.s32 0, %v87
    %v89 = vrot.slane %v84, %v88
    %v91 = vld [vmem:[%s8] sm:$0x1]
    %v93 = vlaneseq
    %v94 = vshrl.u32 %v93, 7
    %v95 = vsub.s32 0, %v94
    %v96 = vrot.slane %v91, %v95
    %v98 = vld [vmem:[%s12] sm:$0x1]
    %v100 = vlaneseq
    %v101 = vshrl.u32 %v100, 7
    %v102 = vsub.s32 0, %v101
    %v103 = vrot.slane %v98, %v102
    %v105 = vld [vmem:[%s1] sm:$0xf]
    %v106 = vld [vmem:[%s2] sm:$0xff]
    %v107 = vld [vmem:[%s2 + $0x8] sm:$0xff]
    %v108 = vld [vmem:[%s3] sm:$0x1]
    %v110 = vlaneseq
    %v111 = vshrl.u32 %v110, 7
    %v112 = vsub.s32 0, %v111
    %v113 = vrot.slane %v108, %v112
    %vm115 = vcmask 130048
    %v117 = vsel %vm115, %v105, 0
    %119 = vmatprep.subr.mxu0 0.0
    %120 = vmatpush1.msra.mxu0 %v106
    %121 = vmatprep.subr.mxu0 0.0
    %122 = vmatpush1.msra.mxu0 %v107
    %123 = vmatprep.subr.mxu0 0.0
    %124 = vmatpush1.msra.mxu0 0.0
    %125 = vmatprep.subr.mxu0 0.0
    %126 = vmatpush1.msra.mxu0 0.0
    %127 = vmatprep.subr.mxu0 0.0
    %128 = vmatpush1.msra.mxu0 0.0
    %129 = vmatprep.subr.mxu0 0.0
    %130 = vmatpush1.msra.mxu0 0.0
    %131 = vmatprep.subr.mxu0 0.0
    %132 = vmatpush1.msra.mxu0 0.0
    %133 = vmatprep.subr.mxu0 0.0
    %134 = vmatpush1.msra.mxu0 0.0
    %135 = vmatprep.subr.mxu0 0.0
    %136 = vmatpush1.msra.mxu0 0.0
    %137 = vmatprep.subr.mxu0 0.0
    %138 = vmatpush1.msra.mxu0 0.0
    %139 = vmatprep.subr.mxu0 0.0
    %140 = vmatpush1.msra.mxu0 0.0
    %141 = vmatprep.subr.mxu0 0.0
    %142 = vmatpush1.msra.mxu0 0.0
    %143 = vmatprep.subr.mxu0 0.0
    %144 = vmatpush1.msra.mxu0 0.0
    %145 = vmatprep.subr.mxu0 0.0
    %146 = vmatpush1.msra.mxu0 0.0
    %147 = vmatprep.subr.mxu0 0.0
    %148 = vmatpush1.msra.mxu0 0.0
    %149 = vmatprep.subr.mxu0 0.0
    %150 = vmatpush1.msra.mxu0 0.0
    %151 = vmatprep.subr.mxu0 0.0
    %152 = vmatpush1.msra.mxu0 0.0
    %153 = vmatprep.subr.mxu0 0.0
    %154 = vmatpush1.msra.mxu0 0.0
    %155 = vmatprep.subr.mxu0 0.0
    %156 = vmatpush1.msra.mxu0 0.0
    %157 = vmatprep.subr.mxu0 0.0
    %158 = vmatpush1.msra.mxu0 0.0
    %159 = vmatprep.subr.mxu0 0.0
    %160 = vmatpush1.msra.mxu0 0.0
    %161 = vmatprep.subr.mxu0 0.0
    %162 = vmatpush1.msra.mxu0 0.0
    %163 = vmatprep.subr.mxu0 0.0
    %164 = vmatpush1.msra.mxu0 0.0
    %165 = vmatprep.subr.mxu0 0.0
    %166 = vmatpush1.msra.mxu0 0.0
    %167 = vmatprep.subr.mxu0 0.0
    %168 = vmatpush1.msra.mxu0 0.0
    %169 = vmatprep.subr.mxu0 0.0
    %170 = vmatpush1.msra.mxu0 0.0
    %171 = vmatprep.subr.mxu0 0.0
    %172 = vmatpush1.msra.mxu0 0.0
    %173 = vmatprep.subr.mxu0 0.0
    %174 = vmatpush1.msra.mxu0 0.0
    %175 = vmatprep.subr.mxu0 0.0
    %176 = vmatpush1.msra.mxu0 0.0
    %177 = vmatprep.subr.mxu0 0.0
    %178 = vmatpush1.msra.mxu0 0.0
    %179 = vmatprep.subr.mxu0 0.0
    %180 = vmatpush1.msra.mxu0 0.0
    %181 = vmatprep.subr.mxu0 0.0
    %182 = vmatpush1.msra.mxu0 0.0
    %183 = vmatprep.mubr.f32.mxu0 0.0
    %184 = vmatmul.mubr.f32.gmra.mrb[0].mxu0 %v117
    %v185 = vpop.f32.mrb[0].mxu0
    %v186 = vadd.f32 %v113, %v185
    %v187 = vpop.f32.mrb[0].mxu0
    %188 = vdwg.mxu0
    %v189 = vtanh.pop %v186
    %vm190 = vcmask 261120
    %v192 = vsel %vm190, %v189, 0
    %194 = vmatprep.subr.mxu0 0.0
    %195 = vmatpush1.msra.mxu0 %v60
    %196 = vmatprep.subr.mxu0 0.0
    %197 = vmatpush1.msra.mxu0 %v61
    %198 = vmatprep.subr.mxu0 0.0
    %199 = vmatpush1.msra.mxu0 %v62
    %200 = vmatprep.subr.mxu0 0.0
    %201 = vmatpush1.msra.mxu0 %v63
    %202 = vmatprep.subr.mxu0 0.0
    %203 = vmatpush1.msra.mxu0 0.0
    %204 = vmatprep.subr.mxu0 0.0
    %205 = vmatpush1.msra.mxu0 0.0
    %206 = vmatprep.subr.mxu0 0.0
    %207 = vmatpush1.msra.mxu0 0.0
    %208 = vmatprep.subr.mxu0 0.0
    %209 = vmatpush1.msra.mxu0 0.0
    %210 = vmatprep.subr.mxu0 0.0
    %211 = vmatpush1.msra.mxu0 0.0
    %212 = vmatprep.subr.mxu0 0.0
    %213 = vmatpush1.msra.mxu0 0.0
    %214 = vmatprep.subr.mxu0 0.0
    %215 = vmatpush1.msra.mxu0 0.0
    %216 = vmatprep.subr.mxu0 0.0
    %217 = vmatpush1.msra.mxu0 0.0
    %218 = vmatprep.subr.mxu0 0.0
    %219 = vmatpush1.msra.mxu0 0.0
    %220 = vmatprep.subr.mxu0 0.0
    %221 = vmatpush1.msra.mxu0 0.0
    %222 = vmatprep.subr.mxu0 0.0
    %223 = vmatpush1.msra.mxu0 0.0
    %224 = vmatprep.subr.mxu0 0.0
    %225 = vmatpush1.msra.mxu0 0.0
    %226 = vmatprep.subr.mxu0 0.0
    %227 = vmatpush1.msra.mxu0 0.0
    %228 = vmatprep.subr.mxu0 0.0
    %229 = vmatpush1.msra.mxu0 0.0
    %230 = vmatprep.subr.mxu0 0.0
    %231 = vmatpush1.msra.mxu0 0.0
    %232 = vmatprep.subr.mxu0 0.0
    %233 = vmatpush1.msra.mxu0 0.0
    %234 = vmatprep.subr.mxu0 0.0
    %235 = vmatpush1.msra.mxu0 0.0
    %236 = vmatprep.subr.mxu0 0.0
    %237 = vmatpush1.msra.mxu0 0.0
    %238 = vmatprep.subr.mxu0 0.0
    %239 = vmatpush1.msra.mxu0 0.0
    %240 = vmatprep.subr.mxu0 0.0
    %241 = vmatpush1.msra.mxu0 0.0
    %242 = vmatprep.subr.mxu0 0.0
    %243 = vmatpush1.msra.mxu0 0.0
    %244 = vmatprep.subr.mxu0 0.0
    %245 = vmatpush1.msra.mxu0 0.0
    %246 = vmatprep.subr.mxu0 0.0
    %247 = vmatpush1.msra.mxu0 0.0
    %248 = vmatprep.subr.mxu0 0.0
    %249 = vmatpush1.msra.mxu0 0.0
    %250 = vmatprep.subr.mxu0 0.0
    %251 = vmatpush1.msra.mxu0 0.0
    %252 = vmatprep.subr.mxu0 0.0
    %253 = vmatpush1.msra.mxu0 0.0
    %254 = vmatprep.subr.mxu0 0.0
    %255 = vmatpush1.msra.mxu0 0.0
    %256 = vmatprep.subr.mxu0 0.0
    %257 = vmatpush1.msra.mxu0 0.0
    %258 = vmatprep.mubr.f32.mxu0 0.0
    %259 = vmatmul.mubr.f32.gmra.mrb[0].mxu0 %v192
    %v260 = vpop.f32.mrb[0].mxu0
    %v261 = vadd.f32 0.0, %v260
    %v262 = vpop.f32.mrb[0].mxu0
    %263 = vdwg.mxu0
    %v265 = vsel %vm190, 0.0, 0
    %267 = vmatprep.subr.mxu0 0.0
    %268 = vmatpush1.msra.mxu0 %v56
    %269 = vmatprep.subr.mxu0 0.0
    %270 = vmatpush1.msra.mxu0 %v57
    %271 = vmatprep.subr.mxu0 0.0
    %272 = vmatpush1.msra.mxu0 %v58
    %273 = vmatprep.subr.mxu0 0.0
    %274 = vmatpush1.msra.mxu0 %v59
    %275 = vmatprep.subr.mxu0 0.0
    %276 = vmatpush1.msra.mxu0 0.0
    %277 = vmatprep.subr.mxu0 0.0
    %278 = vmatpush1.msra.mxu0 0.0
    %279 = vmatprep.subr.mxu0 0.0
    %280 = vmatpush1.msra.mxu0 0.0
    %281 = vmatprep.subr.mxu0 0.0
    %282 = vmatpush1.msra.mxu0 0.0
    %283 = vmatprep.subr.mxu0 0.0
    %284 = vmatpush1.msra.mxu0 0.0
    %285 = vmatprep.subr.mxu0 0.0
    %286 = vmatpush1.msra.mxu0 0.0
    %287 = vmatprep.subr.mxu0 0.0
    %288 = vmatpush1.msra.mxu0 0.0
    %289 = vmatprep.subr.mxu0 0.0
    %290 = vmatpush1.msra.mxu0 0.0
    %291 = vmatprep.subr.mxu0 0.0
    %292 = vmatpush1.msra.mxu0 0.0
    %293 = vmatprep.subr.mxu0 0.0
    %294 = vmatpush1.msra.mxu0 0.0
    %295 = vmatprep.subr.mxu0 0.0
    %296 = vmatpush1.msra.mxu0 0.0
    %297 = vmatprep.subr.mxu0 0.0
    %298 = vmatpush1.msra.mxu0 0.0
    %299 = vmatprep.subr.mxu0 0.0
    %300 = vmatpush1.msra.mxu0 0.0
    %301 = vmatprep.subr.mxu0 0.0
    %302 = vmatpush1.msra.mxu0 0.0
    %303 = vmatprep.subr.mxu0 0.0
    %304 = vmatpush1.msra.mxu0 0.0
    %305 = vmatprep.subr.mxu0 0.0
    %306 = vmatpush1.msra.mxu0 0.0
    %307 = vmatprep.subr.mxu0 0.0
    %308 = vmatpush1.msra.mxu0 0.0
    %309 = vmatprep.subr.mxu0 0.0
    %310 = vmatpush1.msra.mxu0 0.0
    %311 = vmatprep.subr.mxu0 0.0
    %312 = vmatpush1.msra.mxu0 0.0
    %313 = vmatprep.subr.mxu0 0.0
    %314 = vmatpush1.msra.mxu0 0.0
    %315 = vmatprep.subr.mxu0 0.0
    %316 = vmatpush1.msra.mxu0 0.0
    %317 = vmatprep.subr.mxu0 0.0
    %318 = vmatpush1.msra.mxu0 0.0
    %319 = vmatprep.subr.mxu0 0.0
    %320 = vmatpush1.msra.mxu0 0.0
    %321 = vmatprep.subr.mxu0 0.0
    %322 = vmatpush1.msra.mxu0 0.0
    %323 = vmatprep.subr.mxu0 0.0
    %324 = vmatpush1.msra.mxu0 0.0
    %325 = vmatprep.subr.mxu0 0.0
    %326 = vmatpush1.msra.mxu0 0.0
    %327 = vmatprep.subr.mxu0 0.0
    %328 = vmatpush1.msra.mxu0 0.0
    %329 = vmatprep.subr.mxu0 0.0
    %330 = vmatpush1.msra.mxu0 0.0
    %331 = vmatprep.mubr.f32.mxu0 0.0
    %332 = vmatmul.mubr.f32.gmra.mrb[0].mxu0 %v265
    %v333 = vpop.f32.mrb[0].mxu0
    %v334 = vadd.f32 %v261, %v333
    %v335 = vpop.f32.mrb[0].mxu0
    %336 = vdwg.mxu0
    %v337 = vadd.f32 %v334, %v89
    %v338 = vtanh.pop %v337
    %v340 = vsel %vm190, %v338, 0
    %342 = vmatprep.subr.mxu0 0.0
    %343 = vmatpush1.msra.mxu0 %v64
    %344 = vmatprep.subr.mxu0 0.0
    %345 = vmatpush1.msra.mxu0 %v65
    %346 = vmatprep.subr.mxu0 0.0
    %347 = vmatpush1.msra.mxu0 %v66
    %348 = vmatprep.subr.mxu0 0.0
    %349 = vmatpush1.msra.mxu0 %v67
    %350 = vmatprep.subr.mxu0 0.0
    %351 = vmatpush1.msra.mxu0 0.0
    %352 = vmatprep.subr.mxu0 0.0
    %353 = vmatpush1.msra.mxu0 0.0
    %354 = vmatprep.subr.mxu0 0.0
    %355 = vmatpush1.msra.mxu0 0.0
    %356 = vmatprep.subr.mxu0 0.0
    %357 = vmatpush1.msra.mxu0 0.0
    %358 = vmatprep.subr.mxu0 0.0
    %359 = vmatpush1.msra.mxu0 0.0
    %360 = vmatprep.subr.mxu0 0.0
    %361 = vmatpush1.msra.mxu0 0.0
    %362 = vmatprep.subr.mxu0 0.0
    %363 = vmatpush1.msra.mxu0 0.0
    %364 = vmatprep.subr.mxu0 0.0
    %365 = vmatpush1.msra.mxu0 0.0
    %366 = vmatprep.subr.mxu0 0.0
    %367 = vmatpush1.msra.mxu0 0.0
    %368 = vmatprep.subr.mxu0 0.0
    %369 = vmatpush1.msra.mxu0 0.0
    %370 = vmatprep.subr.mxu0 0.0
    %371 = vmatpush1.msra.mxu0 0.0
    %372 = vmatprep.subr.mxu0 0.0
    %373 = vmatpush1.msra.mxu0 0.0
    %374 = vmatprep.subr.mxu0 0.0
    %375 = vmatpush1.msra.mxu0 0.0
    %376 = vmatprep.subr.mxu0 0.0
    %377 = vmatpush1.msra.mxu0 0.0
    %378 = vmatprep.subr.mxu0 0.0
    %379 = vmatpush1.msra.mxu0 0.0
    %380 = vmatprep.subr.mxu0 0.0
    %381 = vmatpush1.msra.mxu0 0.0
    %382 = vmatprep.subr.mxu0 0.0
    %383 = vmatpush1.msra.mxu0 0.0
    %384 = vmatprep.subr.mxu0 0.0
    %385 = vmatpush1.msra.mxu0 0.0
    %386 = vmatprep.subr.mxu0 0.0
    %387 = vmatpush1.msra.mxu0 0.0
    %388 = vmatprep.subr.mxu0 0.0
    %389 = vmatpush1.msra.mxu0 0.0
    %390 = vmatprep.subr.mxu0 0.0
    %391 = vmatpush1.msra.mxu0 0.0
    %392 = vmatprep.subr.mxu0 0.0
    %393 = vmatpush1.msra.mxu0 0.0
    %394 = vmatprep.subr.mxu0 0.0
    %395 = vmatpush1.msra.mxu0 0.0
    %396 = vmatprep.subr.mxu0 0.0
    %397 = vmatpush1.msra.mxu0 0.0
    %398 = vmatprep.subr.mxu0 0.0
    %399 = vmatpush1.msra.mxu0 0.0
    %400 = vmatprep.subr.mxu0 0.0
    %401 = vmatpush1.msra.mxu0 0.0
    %402 = vmatprep.subr.mxu0 0.0
    %403 = vmatpush1.msra.mxu0 0.0
    %404 = vmatprep.subr.mxu0 0.0
    %405 = vmatpush1.msra.mxu0 0.0
    %406 = vmatprep.mubr.f32.mxu0 0.0
    %407 = vmatmul.mubr.f32.gmra.mrb[0].mxu0 %v340
    %v408 = vpop.f32.mrb[0].mxu0
    %v409 = vadd.f32 %v96, %v408
    %v410 = vpop.f32.mrb[0].mxu0
    %411 = vdwg.mxu0
    %vm412 = vcmask 519168
    %v413 = vsel %vm412, %v409, -inf
    %414 = vmax.xlane.f32.xlu0 %v413
    %v415 = vpop.xlane.xlu0 %414
    %v416 = vsub.f32 %v409, %v415
    %v417 = vmul.f32 %v416, 1.442695
    %v418 = vpow.pop %v417
    %v419 = vsel %vm412, %v418, 0.0
    %420 = vadd.xlane.f32.xlu0 %v419
    %v421 = vpop.xlane.xlu0 %420
    %v422 = vrcp.pop %v421
    %v423 = vmul.f32 %v418, %v422
    %vm424 = vcmask 523264
    %v426 = vsel %vm424, %v423, 0
    %428 = vmatprep.subr.mxu0 0.0
    %429 = vmatpush1.msra.mxu0 %v68
    %430 = vmatprep.subr.mxu0 0.0
    %431 = vmatpush1.msra.mxu0 %v69
    %432 = vmatprep.subr.mxu0 0.0
    %433 = vmatpush1.msra.mxu0 %v70
    %434 = vmatprep.subr.mxu0 0.0
    %435 = vmatpush1.msra.mxu0 %v71
    %436 = vmatprep.subr.mxu0 0.0
    %437 = vmatpush1.msra.mxu0 %v72
    %438 = vmatprep.subr.mxu0 0.0
    %439 = vmatpush1.msra.mxu0 %v73
    %440 = vmatprep.subr.mxu0 0.0
    %441 = vmatpush1.msra.mxu0 %v74
    %442 = vmatprep.subr.mxu0 0.0
    %443 = vmatpush1.msra.mxu0 %v75
    %444 = vmatprep.subr.mxu0 0.0
    %445 = vmatpush1.msra.mxu0 0.0
    %446 = vmatprep.subr.mxu0 0.0
    %447 = vmatpush1.msra.mxu0 0.0
    %448 = vmatprep.subr.mxu0 0.0
    %449 = vmatpush1.msra.mxu0 0.0
    %450 = vmatprep.subr.mxu0 0.0
    %451 = vmatpush1.msra.mxu0 0.0
    %452 = vmatprep.subr.mxu0 0.0
    %453 = vmatpush1.msra.mxu0 0.0
    %454 = vmatprep.subr.mxu0 0.0
    %455 = vmatpush1.msra.mxu0 0.0
    %456 = vmatprep.subr.mxu0 0.0
    %457 = vmatpush1.msra.mxu0 0.0
    %458 = vmatprep.subr.mxu0 0.0
    %459 = vmatpush1.msra.mxu0 0.0
    %460 = vmatprep.subr.mxu0 0.0
    %461 = vmatpush1.msra.mxu0 0.0
    %462 = vmatprep.subr.mxu0 0.0
    %463 = vmatpush1.msra.mxu0 0.0
    %464 = vmatprep.subr.mxu0 0.0
    %465 = vmatpush1.msra.mxu0 0.0
    %466 = vmatprep.subr.mxu0 0.0
    %467 = vmatpush1.msra.mxu0 0.0
    %468 = vmatprep.subr.mxu0 0.0
    %469 = vmatpush1.msra.mxu0 0.0
    %470 = vmatprep.subr.mxu0 0.0
    %471 = vmatpush1.msra.mxu0 0.0
    %472 = vmatprep.subr.mxu0 0.0
    %473 = vmatpush1.msra.mxu0 0.0
    %474 = vmatprep.subr.mxu0 0.0
    %475 = vmatpush1.msra.mxu0 0.0
    %476 = vmatprep.subr.mxu0 0.0
    %477 = vmatpush1.msra.mxu0 0.0
    %478 = vmatprep.subr.mxu0 0.0
    %479 = vmatpush1.msra.mxu0 0.0
    %480 = vmatprep.subr.mxu0 0.0
    %481 = vmatpush1.msra.mxu0 0.0
    %482 = vmatprep.subr.mxu0 0.0
    %483 = vmatpush1.msra.mxu0 0.0
    %484 = vmatprep.subr.mxu0 0.0
    %485 = vmatpush1.msra.mxu0 0.0
    %486 = vmatprep.subr.mxu0 0.0
    %487 = vmatpush1.msra.mxu0 0.0
    %488 = vmatprep.subr.mxu0 0.0
    %489 = vmatpush1.msra.mxu0 0.0
    %490 = vmatprep.subr.mxu0 0.0
    %491 = vmatpush1.msra.mxu0 0.0
    %492 = vmatprep.mubr.f32.mxu0 0.0
    %493 = vmatmul.mubr.f32.gmra.mrb[0].mxu0 %v426
    %v494 = vpop.f32.mrb[0].mxu0
    %v495 = vadd.f32 0.0, %v494
    %v496 = vpop.f32.mrb[0].mxu0
    %497 = vdwg.mxu0
    %498 = vmatprep.subr.mxu0 0.0
    %499 = vmatpush1.msra.mxu0 %v80
    %500 = vmatprep.subr.mxu0 0.0
    %501 = vmatpush1.msra.mxu0 %v81
    %502 = vmatprep.subr.mxu0 0.0
    %503 = vmatpush1.msra.mxu0 %v82
    %504 = vmatprep.subr.mxu0 0.0
    %505 = vmatpush1.msra.mxu0 %v83
    %506 = vmatprep.subr.mxu0 0.0
    %507 = vmatpush1.msra.mxu0 0.0
    %508 = vmatprep.subr.mxu0 0.0
    %509 = vmatpush1.msra.mxu0 0.0
    %510 = vmatprep.subr.mxu0 0.0
    %511 = vmatpush1.msra.mxu0 0.0
    %512 = vmatprep.subr.mxu0 0.0
    %513 = vmatpush1.msra.mxu0 0.0
    %514 = vmatprep.subr.mxu0 0.0
    %515 = vmatpush1.msra.mxu0 0.0
    %516 = vmatprep.subr.mxu0 0.0
    %517 = vmatpush1.msra.mxu0 0.0
    %518 = vmatprep.subr.mxu0 0.0
    %519 = vmatpush1.msra.mxu0 0.0
    %520 = vmatprep.subr.mxu0 0.0
    %521 = vmatpush1.msra.mxu0 0.0
    %522 = vmatprep.subr.mxu0 0.0
    %523 = vmatpush1.msra.mxu0 0.0
    %524 = vmatprep.subr.mxu0 0.0
    %525 = vmatpush1.msra.mxu0 0.0
    %526 = vmatprep.subr.mxu0 0.0
    %527 = vmatpush1.msra.mxu0 0.0
    %528 = vmatprep.subr.mxu0 0.0
    %529 = vmatpush1.msra.mxu0 0.0
    %530 = vmatprep.subr.mxu0 0.0
    %531 = vmatpush1.msra.mxu0 0.0
    %532 = vmatprep.subr.mxu0 0.0
    %533 = vmatpush1.msra.mxu0 0.0
    %534 = vmatprep.subr.mxu0 0.0
    %535 = vmatpush1.msra.mxu0 0.0
    %536 = vmatprep.subr.mxu0 0.0
    %537 = vmatpush1.msra.mxu0 0.0
    %538 = vmatprep.subr.mxu0 0.0
    %539 = vmatpush1.msra.mxu0 0.0
    %540 = vmatprep.subr.mxu0 0.0
    %541 = vmatpush1.msra.mxu0 0.0
    %542 = vmatprep.subr.mxu0 0.0
    %543 = vmatpush1.msra.mxu0 0.0
    %544 = vmatprep.subr.mxu0 0.0
    %545 = vmatpush1.msra.mxu0 0.0
    %546 = vmatprep.subr.mxu0 0.0
    %547 = vmatpush1.msra.mxu0 0.0
    %548 = vmatprep.subr.mxu0 0.0
    %549 = vmatpush1.msra.mxu0 0.0
    %550 = vmatprep.subr.mxu0 0.0
    %551 = vmatpush1.msra.mxu0 0.0
    %552 = vmatprep.subr.mxu0 0.0
    %553 = vmatpush1.msra.mxu0 0.0
    %554 = vmatprep.subr.mxu0 0.0
    %555 = vmatpush1.msra.mxu0 0.0
    %556 = vmatprep.subr.mxu0 0.0
    %557 = vmatpush1.msra.mxu0 0.0
    %558 = vmatprep.subr.mxu0 0.0
    %559 = vmatpush1.msra.mxu0 0.0
    %560 = vmatprep.subr.mxu0 0.0
    %561 = vmatpush1.msra.mxu0 0.0
    %562 = vmatprep.mubr.f32.mxu0 0.0
    %563 = vmatmul.mubr.f32.gmra.mrb[0].mxu0 %v265
    %v564 = vpop.f32.mrb[0].mxu0
    %v565 = vadd.f32 0.0, %v564
    %v566 = vpop.f32.mrb[0].mxu0
    %567 = vdwg.mxu0
    %v569 = vsel %vm190, %v495, 0
    %571 = vmatprep.subr.mxu0 0.0
    %572 = vmatpush1.msra.mxu0 %v76
    %573 = vmatprep.subr.mxu0 0.0
    %574 = vmatpush1.msra.mxu0 %v77
    %575 = vmatprep.subr.mxu0 0.0
    %576 = vmatpush1.msra.mxu0 %v78
    %577 = vmatprep.subr.mxu0 0.0
    %578 = vmatpush1.msra.mxu0 %v79
    %579 = vmatprep.subr.mxu0 0.0
    %580 = vmatpush1.msra.mxu0 0.0
    %581 = vmatprep.subr.mxu0 0.0
    %582 = vmatpush1.msra.mxu0 0.0
    %583 = vmatprep.subr.mxu0 0.0
    %584 = vmatpush1.msra.mxu0 0.0
    %585 = vmatprep.subr.mxu0 0.0
    %586 = vmatpush1.msra.mxu0 0.0
    %587 = vmatprep.subr.mxu0 0.0
    %588 = vmatpush1.msra.mxu0 0.0
    %589 = vmatprep.subr.mxu0 0.0
    %590 = vmatpush1.msra.mxu0 0.0
    %591 = vmatprep.subr.mxu0 0.0
    %592 = vmatpush1.msra.mxu0 0.0
    %593 = vmatprep.subr.mxu0 0.0
    %594 = vmatpush1.msra.mxu0 0.0
    %595 = vmatprep.subr.mxu0 0.0
    %596 = vmatpush1.msra.mxu0 0.0
    %597 = vmatprep.subr.mxu0 0.0
    %598 = vmatpush1.msra.mxu0 0.0
    %599 = vmatprep.subr.mxu0 0.0
    %600 = vmatpush1.msra.mxu0 0.0
    %601 = vmatprep.subr.mxu0 0.0
    %602 = vmatpush1.msra.mxu0 0.0
    %603 = vmatprep.subr.mxu0 0.0
    %604 = vmatpush1.msra.mxu0 0.0
    %605 = vmatprep.subr.mxu0 0.0
    %606 = vmatpush1.msra.mxu0 0.0
    %607 = vmatprep.subr.mxu0 0.0
    %608 = vmatpush1.msra.mxu0 0.0
    %609 = vmatprep.subr.mxu0 0.0
    %610 = vmatpush1.msra.mxu0 0.0
    %611 = vmatprep.subr.mxu0 0.0
    %612 = vmatpush1.msra.mxu0 0.0
    %613 = vmatprep.subr.mxu0 0.0
    %614 = vmatpush1.msra.mxu0 0.0
    %615 = vmatprep.subr.mxu0 0.0
    %616 = vmatpush1.msra.mxu0 0.0
    %617 = vmatprep.subr.mxu0 0.0
    %618 = vmatpush1.msra.mxu0 0.0
    %619 = vmatprep.subr.mxu0 0.0
    %620 = vmatpush1.msra.mxu0 0.0
    %621 = vmatprep.subr.mxu0 0.0
    %622 = vmatpush1.msra.mxu0 0.0
    %623 = vmatprep.subr.mxu0 0.0
    %624 = vmatpush1.msra.mxu0 0.0
    %625 = vmatprep.subr.mxu0 0.0
    %626 = vmatpush1.msra.mxu0 0.0
    %627 = vmatprep.subr.mxu0 0.0
    %628 = vmatpush1.msra.mxu0 0.0
    %629 = vmatprep.subr.mxu0 0.0
    %630 = vmatpush1.msra.mxu0 0.0
    %631 = vmatprep.subr.mxu0 0.0
    %632 = vmatpush1.msra.mxu0 0.0
    %633 = vmatprep.subr.mxu0 0.0
    %634 = vmatpush1.msra.mxu0 0.0
    %635 = vmatprep.mubr.f32.mxu0 0.0
    %636 = vmatmul.mubr.f32.gmra.mrb[0].mxu0 %v569
    %v637 = vpop.f32.mrb[0].mxu0
    %v638 = vadd.f32 %v565, %v637
    %v639 = vpop.f32.mrb[0].mxu0
    %640 = vdwg.mxu0
    %v641 = vadd.f32 %v638, %v103
    %v642 = vtanh.pop %v641
    %v643 = vld [vmem:[%s0] sm:$0xf]
    %v644 = vadd.f32 %v643, %v565
    %v645 = vtanh.pop %v644
    %646 = vmatprep.subr.mxu0 0.0
    %647 = vmatpush1.msra.mxu0 %v60
    %648 = vmatprep.subr.mxu0 0.0
    %649 = vmatpush1.msra.mxu0 %v61
    %650 = vmatprep.subr.mxu0 0.0
    %651 = vmatpush1.msra.mxu0 %v62
    %652 = vmatprep.subr.mxu0 0.0
    %653 = vmatpush1.msra.mxu0 %v63
    %654 = vmatprep.subr.mxu0 0.0
    %655 = vmatpush1.msra.mxu0 0.0
    %656 = vmatprep.subr.mxu0 0.0
    %657 = vmatpush1.msra.mxu0 0.0
    %658 = vmatprep.subr.mxu0 0.0
    %659 = vmatpush1.msra.mxu0 0.0
    %660 = vmatprep.subr.mxu0 0.0
    %661 = vmatpush1.msra.mxu0 0.0
    %662 = vmatprep.subr.mxu0 0.0
    %663 = vmatpush1.msra.mxu0 0.0
    %664 = vmatprep.subr.mxu0 0.0
    %665 = vmatpush1.msra.mxu0 0.0
    %666 = vmatprep.subr.mxu0 0.0
    %667 = vmatpush1.msra.mxu0 0.0
    %668 = vmatprep.subr.mxu0 0.0
    %669 = vmatpush1.msra.mxu0 0.0
    %670 = vmatprep.subr.mxu0 0.0
    %671 = vmatpush1.msra.mxu0 0.0
    %672 = vmatprep.subr.mxu0 0.0
    %673 = vmatpush1.msra.mxu0 0.0
    %674 = vmatprep.subr.mxu0 0.0
    %675 = vmatpush1.msra.mxu0 0.0
    %676 = vmatprep.subr.mxu0 0.0
    %677 = vmatpush1.msra.mxu0 0.0
    %678 = vmatprep.subr.mxu0 0.0
    %679 = vmatpush1.msra.mxu0 0.0
    %680 = vmatprep.subr.mxu0 0.0
    %681 = vmatpush1.msra.mxu0 0.0
    %682 = vmatprep.subr.mxu0 0.0
    %683 = vmatpush1.msra.mxu0 0.0
    %684 = vmatprep.subr.mxu0 0.0
    %685 = vmatpush1.msra.mxu0 0.0
    %686 = vmatprep.subr.mxu0 0.0
    %687 = vmatpush1.msra.mxu0 0.0
    %688 = vmatprep.subr.mxu0 0.0
    %689 = vmatpush1.msra.mxu0 0.0
    %690 = vmatprep.subr.mxu0 0.0
    %691 = vmatpush1.msra.mxu0 0.0
    %692 = vmatprep.subr.mxu0 0.0
    %693 = vmatpush1.msra.mxu0 0.0
    %694 = vmatprep.subr.mxu0 0.0
    %695 = vmatpush1.msra.mxu0 0.0
    %696 = vmatprep.subr.mxu0 0.0
    %697 = vmatpush1.msra.mxu0 0.0
    %698 = vmatprep.subr.mxu0 0.0
    %699 = vmatpush1.msra.mxu0 0.0
    %700 = vmatprep.subr.mxu0 0.0
    %701 = vmatpush1.msra.mxu0 0.0
    %702 = vmatprep.subr.mxu0 0.0
    %703 = vmatpush1.msra.mxu0 0.0
    %704 = vmatprep.subr.mxu0 0.0
    %705 = vmatpush1.msra.mxu0 0.0
    %706 = vmatprep.subr.mxu0 0.0
    %707 = vmatpush1.msra.mxu0 0.0
    %708 = vmatprep.subr.mxu0 0.0
    %709 = vmatpush1.msra.mxu0 0.0
    %710 = vmatprep.mubr.f32.mxu0 0.0
    %711 = vmatmul.mubr.f32.gmra.mrb[0].mxu0 %v340
    %v712 = vpop.f32.mrb[0].mxu0
    %v713 = vadd.f32 0.0, %v712
    %v714 = vpop.f32.mrb[0].mxu0
    %715 = vdwg.mxu0
    %716 = vmatprep.subr.mxu0 0.0
    %717 = vmatpush1.msra.mxu0 %v56
    %718 = vmatprep.subr.mxu0 0.0
    %719 = vmatpush1.msra.mxu0 %v57
    %720 = vmatprep.subr.mxu0 0.0
    %721 = vmatpush1.msra.mxu0 %v58
    %722 = vmatprep.subr.mxu0 0.0
    %723 = vmatpush1.msra.mxu0 %v59
    %724 = vmatprep.subr.mxu0 0.0
    %725 = vmatpush1.msra.mxu0 0.0
    %726 = vmatprep.subr.mxu0 0.0
    %727 = vmatpush1.msra.mxu0 0.0
    %728 = vmatprep.subr.mxu0 0.0
    %729 = vmatpush1.msra.mxu0 0.0
    %730 = vmatprep.subr.mxu0 0.0
    %731 = vmatpush1.msra.mxu0 0.0
    %732 = vmatprep.subr.mxu0 0.0
    %733 = vmatpush1.msra.mxu0 0.0
    %734 = vmatprep.subr.mxu0 0.0
    %735 = vmatpush1.msra.mxu0 0.0
    %736 = vmatprep.subr.mxu0 0.0
    %737 = vmatpush1.msra.mxu0 0.0
    %738 = vmatprep.subr.mxu0 0.0
    %739 = vmatpush1.msra.mxu0 0.0
    %740 = vmatprep.subr.mxu0 0.0
    %741 = vmatpush1.msra.mxu0 0.0
    %742 = vmatprep.subr.mxu0 0.0
    %743 = vmatpush1.msra.mxu0 0.0
    %744 = vmatprep.subr.mxu0 0.0
    %745 = vmatpush1.msra.mxu0 0.0
    %746 = vmatprep.subr.mxu0 0.0
    %747 = vmatpush1.msra.mxu0 0.0
    %748 = vmatprep.subr.mxu0 0.0
    %749 = vmatpush1.msra.mxu0 0.0
    %750 = vmatprep.subr.mxu0 0.0
    %751 = vmatpush1.msra.mxu0 0.0
    %752 = vmatprep.subr.mxu0 0.0
    %753 = vmatpush1.msra.mxu0 0.0
    %754 = vmatprep.subr.mxu0 0.0
    %755 = vmatpush1.msra.mxu0 0.0
    %756 = vmatprep.subr.mxu0 0.0
    %757 = vmatpush1.msra.mxu0 0.0
    %758 = vmatprep.subr.mxu0 0.0
    %759 = vmatpush1.msra.mxu0 0.0
    %760 = vmatprep.subr.mxu0 0.0
    %761 = vmatpush1.msra.mxu0 0.0
    %762 = vmatprep.subr.mxu0 0.0
    %763 = vmatpush1.msra.mxu0 0.0
    %764 = vmatprep.subr.mxu0 0.0
    %765 = vmatpush1.msra.mxu0 0.0
    %766 = vmatprep.subr.mxu0 0.0
    %767 = vmatpush1.msra.mxu0 0.0
    %768 = vmatprep.subr.mxu0 0.0
    %769 = vmatpush1.msra.mxu0 0.0
    %770 = vmatprep.subr.mxu0 0.0
    %771 = vmatpush1.msra.mxu0 0.0
    %772 = vmatprep.subr.mxu0 0.0
    %773 = vmatpush1.msra.mxu0 0.0
    %774 = vmatprep.subr.mxu0 0.0
    %775 = vmatpush1.msra.mxu0 0.0
    %776 = vmatprep.subr.mxu0 0.0
    %777 = vmatpush1.msra.mxu0 0.0
    %778 = vmatprep.subr.mxu0 0.0
    %779 = vmatpush1.msra.mxu0 0.0
    %780 = vmatprep.mubr.f32.mxu0 0.0
    %781 = vmatmul.mubr.f32.gmra.mrb[0].mxu0 %v569
    %v782 = vpop.f32.mrb[0].mxu0
    %v783 = vadd.f32 %v713, %v782
    %v784 = vpop.f32.mrb[0].mxu0
    %785 = vdwg.mxu0
    %v786 = vadd.f32 %v783, %v89
    %v787 = vtanh.pop %v786
    %v789 = vsel %vm190, %v787, 0
    %791 = vmatprep.subr.mxu0 0.0
    %792 = vmatpush1.msra.mxu0 %v64
    %793 = vmatprep.subr.mxu0 0.0
    %794 = vmatpush1.msra.mxu0 %v65
    %795 = vmatprep.subr.mxu0 0.0
    %796 = vmatpush1.msra.mxu0 %v66
    %797 = vmatprep.subr.mxu0 0.0
    %798 = vmatpush1.msra.mxu0 %v67
    %799 = vmatprep.subr.mxu0 0.0
    %800 = vmatpush1.msra.mxu0 0.0
    %801 = vmatprep.subr.mxu0 0.0
    %802 = vmatpush1.msra.mxu0 0.0
    %803 = vmatprep.subr.mxu0 0.0
    %804 = vmatpush1.msra.mxu0 0.0
    %805 = vmatprep.subr.mxu0 0.0
    %806 = vmatpush1.msra.mxu0 0.0
    %807 = vmatprep.subr.mxu0 0.0
    %808 = vmatpush1.msra.mxu0 0.0
    %809 = vmatprep.subr.mxu0 0.0
    %810 = vmatpush1.msra.mxu0 0.0
    %811 = vmatprep.subr.mxu0 0.0
    %812 = vmatpush1.msra.mxu0 0.0
    %813 = vmatprep.subr.mxu0 0.0
    %814 = vmatpush1.msra.mxu0 0.0
    %815 = vmatprep.subr.mxu0 0.0
    %816 = vmatpush1.msra.mxu0 0.0
    %817 = vmatprep.subr.mxu0 0.0
    %818 = vmatpush1.msra.mxu0 0.0
    %819 = vmatprep.subr.mxu0 0.0
    %820 = vmatpush1.msra.mxu0 0.0
    %821 = vmatprep.subr.mxu0 0.0
    %822 = vmatpush1.msra.mxu0 0.0
    %823 = vmatprep.subr.mxu0 0.0
    %824 = vmatpush1.msra.mxu0 0.0
    %825 = vmatprep.subr.mxu0 0.0
    %826 = vmatpush1.msra.mxu0 0.0
    %827 = vmatprep.subr.mxu0 0.0
    %828 = vmatpush1.msra.mxu0 0.0
    %829 = vmatprep.subr.mxu0 0.0
    %830 = vmatpush1.msra.mxu0 0.0
    %831 = vmatprep.subr.mxu0 0.0
    %832 = vmatpush1.msra.mxu0 0.0
    %833 = vmatprep.subr.mxu0 0.0
    %834 = vmatpush1.msra.mxu0 0.0
    %835 = vmatprep.subr.mxu0 0.0
    %836 = vmatpush1.msra.mxu0 0.0
    %837 = vmatprep.subr.mxu0 0.0
    %838 = vmatpush1.msra.mxu0 0.0
    %839 = vmatprep.subr.mxu0 0.0
    %840 = vmatpush1.msra.mxu0 0.0
    %841 = vmatprep.subr.mxu0 0.0
    %842 = vmatpush1.msra.mxu0 0.0
    %843 = vmatprep.subr.mxu0 0.0
    %844 = vmatpush1.msra.mxu0 0.0
    %845 = vmatprep.subr.mxu0 0.0
    %846 = vmatpush1.msra.mxu0 0.0
    %847 = vmatprep.subr.mxu0 0.0
    %848 = vmatpush1.msra.mxu0 0.0
    %849 = vmatprep.subr.mxu0 0.0
    %850 = vmatpush1.msra.mxu0 0.0
    %851 = vmatprep.subr.mxu0 0.0
    %852 = vmatpush1.msra.mxu0 0.0
    %853 = vmatprep.subr.mxu0 0.0
    %854 = vmatpush1.msra.mxu0 0.0
    %855 = vmatprep.mubr.f32.mxu0 0.0
    %856 = vmatmul.mubr.f32.gmra.mrb[0].mxu0 %v789
    %v857 = vpop.f32.mrb[0].mxu0
    %v858 = vadd.f32 %v96, %v857
    %v859 = vpop.f32.mrb[0].mxu0
    %860 = vdwg.mxu0
    %v861 = vsel %vm412, %v858, -inf
    %862 = vmax.xlane.f32.xlu0 %v861
    %v863 = vpop.xlane.xlu0 %862
    %v864 = vsub.f32 %v858, %v863
    %v865 = vmul.f32 %v864, 1.442695
    %v866 = vpow.pop %v865
    %v867 = vsel %vm412, %v866, 0.0
    %868 = vadd.xlane.f32.xlu0 %v867
    %v869 = vpop.xlane.xlu0 %868
    %v870 = vrcp.pop %v869
    %v871 = vmul.f32 %v866, %v870
    %v873 = vsel %vm424, %v871, 0
    %875 = vmatprep.subr.mxu0 0.0
    %876 = vmatpush1.msra.mxu0 %v68
    %877 = vmatprep.subr.mxu0 0.0
    %878 = vmatpush1.msra.mxu0 %v69
    %879 = vmatprep.subr.mxu0 0.0
    %880 = vmatpush1.msra.mxu0 %v70
    %881 = vmatprep.subr.mxu0 0.0
    %882 = vmatpush1.msra.mxu0 %v71
    %883 = vmatprep.subr.mxu0 0.0
    %884 = vmatpush1.msra.mxu0 %v72
    %885 = vmatprep.subr.mxu0 0.0
    %886 = vmatpush1.msra.mxu0 %v73
    %887 = vmatprep.subr.mxu0 0.0
    %888 = vmatpush1.msra.mxu0 %v74
    %889 = vmatprep.subr.mxu0 0.0
    %890 = vmatpush1.msra.mxu0 %v75
    %891 = vmatprep.subr.mxu0 0.0
    %892 = vmatpush1.msra.mxu0 0.0
    %893 = vmatprep.subr.mxu0 0.0
    %894 = vmatpush1.msra.mxu0 0.0
    %895 = vmatprep.subr.mxu0 0.0
    %896 = vmatpush1.msra.mxu0 0.0
    %897 = vmatprep.subr.mxu0 0.0
    %898 = vmatpush1.msra.mxu0 0.0
    %899 = vmatprep.subr.mxu0 0.0
    %900 = vmatpush1.msra.mxu0 0.0
    %901 = vmatprep.subr.mxu0 0.0
    %902 = vmatpush1.msra.mxu0 0.0
    %903 = vmatprep.subr.mxu0 0.0
    %904 = vmatpush1.msra.mxu0 0.0
    %905 = vmatprep.subr.mxu0 0.0
    %906 = vmatpush1.msra.mxu0 0.0
    %907 = vmatprep.subr.mxu0 0.0
    %908 = vmatpush1.msra.mxu0 0.0
    %909 = vmatprep.subr.mxu0 0.0
    %910 = vmatpush1.msra.mxu0 0.0
    %911 = vmatprep.subr.mxu0 0.0
    %912 = vmatpush1.msra.mxu0 0.0
    %913 = vmatprep.subr.mxu0 0.0
    %914 = vmatpush1.msra.mxu0 0.0
    %915 = vmatprep.subr.mxu0 0.0
    %916 = vmatpush1.msra.mxu0 0.0
    %917 = vmatprep.subr.mxu0 0.0
    %918 = vmatpush1.msra.mxu0 0.0
    %919 = vmatprep.subr.mxu0 0.0
    %920 = vmatpush1.msra.mxu0 0.0
    %921 = vmatprep.subr.mxu0 0.0
    %922 = vmatpush1.msra.mxu0 0.0
    %923 = vmatprep.subr.mxu0 0.0
    %924 = vmatpush1.msra.mxu0 0.0
    %925 = vmatprep.subr.mxu0 0.0
    %926 = vmatpush1.msra.mxu0 0.0
    %927 = vmatprep.subr.mxu0 0.0
    %928 = vmatpush1.msra.mxu0 0.0
    %929 = vmatprep.subr.mxu0 0.0
    %930 = vmatpush1.msra.mxu0 0.0
    %931 = vmatprep.subr.mxu0 0.0
    %932 = vmatpush1.msra.mxu0 0.0
    %933 = vmatprep.subr.mxu0 0.0
    %934 = vmatpush1.msra.mxu0 0.0
    %935 = vmatprep.subr.mxu0 0.0
    %936 = vmatpush1.msra.mxu0 0.0
    %937 = vmatprep.subr.mxu0 0.0
    %938 = vmatpush1.msra.mxu0 0.0
    %939 = vmatprep.mubr.f32.mxu0 0.0
    %940 = vmatmul.mubr.f32.gmra.mrb[0].mxu0 %v873
    %v941 = vpop.f32.mrb[0].mxu0
    %v942 = vadd.f32 0.0, %v941
    %v943 = vpop.f32.mrb[0].mxu0
    %944 = vdwg.mxu0
    %v946 = vsel %vm190, %v642, 0
    %948 = vmatprep.subr.mxu0 0.0
    %949 = vmatpush1.msra.mxu0 %v80
    %950 = vmatprep.subr.mxu0 0.0
    %951 = vmatpush1.msra.mxu0 %v81
    %952 = vmatprep.subr.mxu0 0.0
    %953 = vmatpush1.msra.mxu0 %v82
    %954 = vmatprep.subr.mxu0 0.0
    %955 = vmatpush1.msra.mxu0 %v83
    %956 = vmatprep.subr.mxu0 0.0
    %957 = vmatpush1.msra.mxu0 0.0
    %958 = vmatprep.subr.mxu0 0.0
    %959 = vmatpush1.msra.mxu0 0.0
    %960 = vmatprep.subr.mxu0 0.0
    %961 = vmatpush1.msra.mxu0 0.0
    %962 = vmatprep.subr.mxu0 0.0
    %963 = vmatpush1.msra.mxu0 0.0
    %964 = vmatprep.subr.mxu0 0.0
    %965 = vmatpush1.msra.mxu0 0.0
    %966 = vmatprep.subr.mxu0 0.0
    %967 = vmatpush1.msra.mxu0 0.0
    %968 = vmatprep.subr.mxu0 0.0
    %969 = vmatpush1.msra.mxu0 0.0
    %970 = vmatprep.subr.mxu0 0.0
    %971 = vmatpush1.msra.mxu0 0.0
    %972 = vmatprep.subr.mxu0 0.0
    %973 = vmatpush1.msra.mxu0 0.0
    %974 = vmatprep.subr.mxu0 0.0
    %975 = vmatpush1.msra.mxu0 0.0
    %976 = vmatprep.subr.mxu0 0.0
    %977 = vmatpush1.msra.mxu0 0.0
    %978 = vmatprep.subr.mxu0 0.0
    %979 = vmatpush1.msra.mxu0 0.0
    %980 = vmatprep.subr.mxu0 0.0
    %981 = vmatpush1.msra.mxu0 0.0
    %982 = vmatprep.subr.mxu0 0.0
    %983 = vmatpush1.msra.mxu0 0.0
    %984 = vmatprep.subr.mxu0 0.0
    %985 = vmatpush1.msra.mxu0 0.0
    %986 = vmatprep.subr.mxu0 0.0
    %987 = vmatpush1.msra.mxu0 0.0
    %988 = vmatprep.subr.mxu0 0.0
    %989 = vmatpush1.msra.mxu0 0.0
    %990 = vmatprep.subr.mxu0 0.0
    %991 = vmatpush1.msra.mxu0 0.0
    %992 = vmatprep.subr.mxu0 0.0
    %993 = vmatpush1.msra.mxu0 0.0
    %994 = vmatprep.subr.mxu0 0.0
    %995 = vmatpush1.msra.mxu0 0.0
    %996 = vmatprep.subr.mxu0 0.0
    %997 = vmatpush1.msra.mxu0 0.0
    %998 = vmatprep.subr.mxu0 0.0
    %999 = vmatpush1.msra.mxu0 0.0
    %1000 = vmatprep.subr.mxu0 0.0
    %1001 = vmatpush1.msra.mxu0 0.0
    %1002 = vmatprep.subr.mxu0 0.0
    %1003 = vmatpush1.msra.mxu0 0.0
    %1004 = vmatprep.subr.mxu0 0.0
    %1005 = vmatpush1.msra.mxu0 0.0
    %1006 = vmatprep.subr.mxu0 0.0
    %1007 = vmatpush1.msra.mxu0 0.0
    %1008 = vmatprep.subr.mxu0 0.0
    %1009 = vmatpush1.msra.mxu0 0.0
    %1010 = vmatprep.subr.mxu0 0.0
    %1011 = vmatpush1.msra.mxu0 0.0
    %1012 = vmatprep.mubr.f32.mxu0 0.0
    %1013 = vmatmul.mubr.f32.gmra.mrb[0].mxu0 %v946
    %v1014 = vpop.f32.mrb[0].mxu0
    %v1015 = vadd.f32 0.0, %v1014
    %v1016 = vpop.f32.mrb[0].mxu0
    %1017 = vdwg.mxu0
    %v1019 = vsel %vm190, %v942, 0
    %1021 = vmatprep.subr.mxu0 0.0
    %1022 = vmatpush1.msra.mxu0 %v76
    %1023 = vmatprep.subr.mxu0 0.0
    %1024 = vmatpush1.msra.mxu0 %v77
    %1025 = vmatprep.subr.mxu0 0.0
    %1026 = vmatpush1.msra.mxu0 %v78
    %1027 = vmatprep.subr.mxu0 0.0
    %1028 = vmatpush1.msra.mxu0 %v79
    %1029 = vmatprep.subr.mxu0 0.0
    %1030 = vmatpush1.msra.mxu0 0.0
    %1031 = vmatprep.subr.mxu0 0.0
    %1032 = vmatpush1.msra.mxu0 0.0
    %1033 = vmatprep.subr.mxu0 0.0
    %1034 = vmatpush1.msra.mxu0 0.0
    %1035 = vmatprep.subr.mxu0 0.0
    %1036 = vmatpush1.msra.mxu0 0.0
    %1037 = vmatprep.subr.mxu0 0.0
    %1038 = vmatpush1.msra.mxu0 0.0
    %1039 = vmatprep.subr.mxu0 0.0
    %1040 = vmatpush1.msra.mxu0 0.0
    %1041 = vmatprep.subr.mxu0 0.0
    %1042 = vmatpush1.msra.mxu0 0.0
    %1043 = vmatprep.subr.mxu0 0.0
    %1044 = vmatpush1.msra.mxu0 0.0
    %1045 = vmatprep.subr.mxu0 0.0
    %1046 = vmatpush1.msra.mxu0 0.0
    %1047 = vmatprep.subr.mxu0 0.0
    %1048 = vmatpush1.msra.mxu0 0.0
    %1049 = vmatprep.subr.mxu0 0.0
    %1050 = vmatpush1.msra.mxu0 0.0
    %1051 = vmatprep.subr.mxu0 0.0
    %1052 = vmatpush1.msra.mxu0 0.0
    %1053 = vmatprep.subr.mxu0 0.0
    %1054 = vmatpush1.msra.mxu0 0.0
    %1055 = vmatprep.subr.mxu0 0.0
    %1056 = vmatpush1.msra.mxu0 0.0
    %1057 = vmatprep.subr.mxu0 0.0
    %1058 = vmatpush1.msra.mxu0 0.0
    %1059 = vmatprep.subr.mxu0 0.0
    %1060 = vmatpush1.msra.mxu0 0.0
    %1061 = vmatprep.subr.mxu0 0.0
    %1062 = vmatpush1.msra.mxu0 0.0
    %1063 = vmatprep.subr.mxu0 0.0
    %1064 = vmatpush1.msra.mxu0 0.0
    %1065 = vmatprep.subr.mxu0 0.0
    %1066 = vmatpush1.msra.mxu0 0.0
    %1067 = vmatprep.subr.mxu0 0.0
    %1068 = vmatpush1.msra.mxu0 0.0
    %1069 = vmatprep.subr.mxu0 0.0
    %1070 = vmatpush1.msra.mxu0 0.0
    %1071 = vmatprep.subr.mxu0 0.0
    %1072 = vmatpush1.msra.mxu0 0.0
    %1073 = vmatprep.subr.mxu0 0.0
    %1074 = vmatpush1.msra.mxu0 0.0
    %1075 = vmatprep.subr.mxu0 0.0
    %1076 = vmatpush1.msra.mxu0 0.0
    %1077 = vmatprep.subr.mxu0 0.0
    %1078 = vmatpush1.msra.mxu0 0.0
    %1079 = vmatprep.subr.mxu0 0.0
    %1080 = vmatpush1.msra.mxu0 0.0
    %1081 = vmatprep.subr.mxu0 0.0
    %1082 = vmatpush1.msra.mxu0 0.0
    %1083 = vmatprep.subr.mxu0 0.0
    %1084 = vmatpush1.msra.mxu0 0.0
    %1085 = vmatprep.mubr.f32.mxu0 0.0
    %1086 = vmatmul.mubr.f32.gmra.mrb[0].mxu0 %v1019
    %v1087 = vpop.f32.mrb[0].mxu0
    %v1088 = vadd.f32 %v1015, %v1087
    %v1089 = vpop.f32.mrb[0].mxu0
    %1090 = vdwg.mxu0
    %v1091 = vadd.f32 %v1088, %v103
    %v1092 = vtanh.pop %v1091
    %s1093 = scalar_lea.vmem %s0, 4
    %v1094 = vld [vmem:[%s1093] sm:$0xf]
    %v1096 = vsel %vm190, %v645, 0
    %1098 = vmatprep.subr.mxu0 0.0
    %1099 = vmatpush1.msra.mxu0 %v80
    %1100 = vmatprep.subr.mxu0 0.0
    %1101 = vmatpush1.msra.mxu0 %v81
    %1102 = vmatprep.subr.mxu0 0.0
    %1103 = vmatpush1.msra.mxu0 %v82
    %1104 = vmatprep.subr.mxu0 0.0
    %1105 = vmatpush1.msra.mxu0 %v83
    %1106 = vmatprep.subr.mxu0 0.0
    %1107 = vmatpush1.msra.mxu0 0.0
    %1108 = vmatprep.subr.mxu0 0.0
    %1109 = vmatpush1.msra.mxu0 0.0
    %1110 = vmatprep.subr.mxu0 0.0
    %1111 = vmatpush1.msra.mxu0 0.0
    %1112 = vmatprep.subr.mxu0 0.0
    %1113 = vmatpush1.msra.mxu0 0.0
    %1114 = vmatprep.subr.mxu0 0.0
    %1115 = vmatpush1.msra.mxu0 0.0
    %1116 = vmatprep.subr.mxu0 0.0
    %1117 = vmatpush1.msra.mxu0 0.0
    %1118 = vmatprep.subr.mxu0 0.0
    %1119 = vmatpush1.msra.mxu0 0.0
    %1120 = vmatprep.subr.mxu0 0.0
    %1121 = vmatpush1.msra.mxu0 0.0
    %1122 = vmatprep.subr.mxu0 0.0
    %1123 = vmatpush1.msra.mxu0 0.0
    %1124 = vmatprep.subr.mxu0 0.0
    %1125 = vmatpush1.msra.mxu0 0.0
    %1126 = vmatprep.subr.mxu0 0.0
    %1127 = vmatpush1.msra.mxu0 0.0
    %1128 = vmatprep.subr.mxu0 0.0
    %1129 = vmatpush1.msra.mxu0 0.0
    %1130 = vmatprep.subr.mxu0 0.0
    %1131 = vmatpush1.msra.mxu0 0.0
    %1132 = vmatprep.subr.mxu0 0.0
    %1133 = vmatpush1.msra.mxu0 0.0
    %1134 = vmatprep.subr.mxu0 0.0
    %1135 = vmatpush1.msra.mxu0 0.0
    %1136 = vmatprep.subr.mxu0 0.0
    %1137 = vmatpush1.msra.mxu0 0.0
    %1138 = vmatprep.subr.mxu0 0.0
    %1139 = vmatpush1.msra.mxu0 0.0
    %1140 = vmatprep.subr.mxu0 0.0
    %1141 = vmatpush1.msra.mxu0 0.0
    %1142 = vmatprep.subr.mxu0 0.0
    %1143 = vmatpush1.msra.mxu0 0.0
    %1144 = vmatprep.subr.mxu0 0.0
    %1145 = vmatpush1.msra.mxu0 0.0
    %1146 = vmatprep.subr.mxu0 0.0
    %1147 = vmatpush1.msra.mxu0 0.0
    %1148 = vmatprep.subr.mxu0 0.0
    %1149 = vmatpush1.msra.mxu0 0.0
    %1150 = vmatprep.subr.mxu0 0.0
    %1151 = vmatpush1.msra.mxu0 0.0
    %1152 = vmatprep.subr.mxu0 0.0
    %1153 = vmatpush1.msra.mxu0 0.0
    %1154 = vmatprep.subr.mxu0 0.0
    %1155 = vmatpush1.msra.mxu0 0.0
    %1156 = vmatprep.subr.mxu0 0.0
    %1157 = vmatpush1.msra.mxu0 0.0
    %1158 = vmatprep.subr.mxu0 0.0
    %1159 = vmatpush1.msra.mxu0 0.0
    %1160 = vmatprep.subr.mxu0 0.0
    %1161 = vmatpush1.msra.mxu0 0.0
    %1162 = vmatprep.mubr.f32.mxu0 0.0
    %1163 = vmatmul.mubr.f32.gmra.mrb[0].mxu0 %v1096
    %v1164 = vpop.f32.mrb[0].mxu0
    %v1165 = vadd.f32 0.0, %v1164
    %v1166 = vpop.f32.mrb[0].mxu0
    %1167 = vdwg.mxu0
    %v1168 = vadd.f32 %v1094, %v1165
    %v1169 = vtanh.pop %v1168
    %1170 = vmatprep.subr.mxu0 0.0
    %1171 = vmatpush1.msra.mxu0 %v60
    %1172 = vmatprep.subr.mxu0 0.0
    %1173 = vmatpush1.msra.mxu0 %v61
    %1174 = vmatprep.subr.mxu0 0.0
    %1175 = vmatpush1.msra.mxu0 %v62
    %1176 = vmatprep.subr.mxu0 0.0
    %1177 = vmatpush1.msra.mxu0 %v63
    %1178 = vmatprep.subr.mxu0 0.0
    %1179 = vmatpush1.msra.mxu0 0.0
    %1180 = vmatprep.subr.mxu0 0.0
    %1181 = vmatpush1.msra.mxu0 0.0
    %1182 = vmatprep.subr.mxu0 0.0
    %1183 = vmatpush1.msra.mxu0 0.0
    %1184 = vmatprep.subr.mxu0 0.0
    %1185 = vmatpush1.msra.mxu0 0.0
    %1186 = vmatprep.subr.mxu0 0.0
    %1187 = vmatpush1.msra.mxu0 0.0
    %1188 = vmatprep.subr.mxu0 0.0
    %1189 = vmatpush1.msra.mxu0 0.0
    %1190 = vmatprep.subr.mxu0 0.0
    %1191 = vmatpush1.msra.mxu0 0.0
    %1192 = vmatprep.subr.mxu0 0.0
    %1193 = vmatpush1.msra.mxu0 0.0
    %1194 = vmatprep.subr.mxu0 0.0
    %1195 = vmatpush1.msra.mxu0 0.0
    %1196 = vmatprep.subr.mxu0 0.0
    %1197 = vmatpush1.msra.mxu0 0.0
    %1198 = vmatprep.subr.mxu0 0.0
    %1199 = vmatpush1.msra.mxu0 0.0
    %1200 = vmatprep.subr.mxu0 0.0
    %1201 = vmatpush1.msra.mxu0 0.0
    %1202 = vmatprep.subr.mxu0 0.0
    %1203 = vmatpush1.msra.mxu0 0.0
    %1204 = vmatprep.subr.mxu0 0.0
    %1205 = vmatpush1.msra.mxu0 0.0
    %1206 = vmatprep.subr.mxu0 0.0
    %1207 = vmatpush1.msra.mxu0 0.0
    %1208 = vmatprep.subr.mxu0 0.0
    %1209 = vmatpush1.msra.mxu0 0.0
    %1210 = vmatprep.subr.mxu0 0.0
    %1211 = vmatpush1.msra.mxu0 0.0
    %1212 = vmatprep.subr.mxu0 0.0
    %1213 = vmatpush1.msra.mxu0 0.0
    %1214 = vmatprep.subr.mxu0 0.0
    %1215 = vmatpush1.msra.mxu0 0.0
    %1216 = vmatprep.subr.mxu0 0.0
    %1217 = vmatpush1.msra.mxu0 0.0
    %1218 = vmatprep.subr.mxu0 0.0
    %1219 = vmatpush1.msra.mxu0 0.0
    %1220 = vmatprep.subr.mxu0 0.0
    %1221 = vmatpush1.msra.mxu0 0.0
    %1222 = vmatprep.subr.mxu0 0.0
    %1223 = vmatpush1.msra.mxu0 0.0
    %1224 = vmatprep.subr.mxu0 0.0
    %1225 = vmatpush1.msra.mxu0 0.0
    %1226 = vmatprep.subr.mxu0 0.0
    %1227 = vmatpush1.msra.mxu0 0.0
    %1228 = vmatprep.subr.mxu0 0.0
    %1229 = vmatpush1.msra.mxu0 0.0
    %1230 = vmatprep.subr.mxu0 0.0
    %1231 = vmatpush1.msra.mxu0 0.0
    %1232 = vmatprep.subr.mxu0 0.0
    %1233 = vmatpush1.msra.mxu0 0.0
    %1234 = vmatprep.mubr.f32.mxu0 0.0
    %1235 = vmatmul.mubr.f32.gmra.mrb[0].mxu0 %v789
    %v1236 = vpop.f32.mrb[0].mxu0
    %v1237 = vadd.f32 0.0, %v1236
    %v1238 = vpop.f32.mrb[0].mxu0
    %1239 = vdwg.mxu0
    %1240 = vmatprep.subr.mxu0 0.0
    %1241 = vmatpush1.msra.mxu0 %v56
    %1242 = vmatprep.subr.mxu0 0.0
    %1243 = vmatpush1.msra.mxu0 %v57
    %1244 = vmatprep.subr.mxu0 0.0
    %1245 = vmatpush1.msra.mxu0 %v58
    %1246 = vmatprep.subr.mxu0 0.0
    %1247 = vmatpush1.msra.mxu0 %v59
    %1248 = vmatprep.subr.mxu0 0.0
    %1249 = vmatpush1.msra.mxu0 0.0
    %1250 = vmatprep.subr.mxu0 0.0
    %1251 = vmatpush1.msra.mxu0 0.0
    %1252 = vmatprep.subr.mxu0 0.0
    %1253 = vmatpush1.msra.mxu0 0.0
    %1254 = vmatprep.subr.mxu0 0.0
    %1255 = vmatpush1.msra.mxu0 0.0
    %1256 = vmatprep.subr.mxu0 0.0
    %1257 = vmatpush1.msra.mxu0 0.0
    %1258 = vmatprep.subr.mxu0 0.0
    %1259 = vmatpush1.msra.mxu0 0.0
    %1260 = vmatprep.subr.mxu0 0.0
    %1261 = vmatpush1.msra.mxu0 0.0
    %1262 = vmatprep.subr.mxu0 0.0
    %1263 = vmatpush1.msra.mxu0 0.0
    %1264 = vmatprep.subr.mxu0 0.0
    %1265 = vmatpush1.msra.mxu0 0.0
    %1266 = vmatprep.subr.mxu0 0.0
    %1267 = vmatpush1.msra.mxu0 0.0
    %1268 = vmatprep.subr.mxu0 0.0
    %1269 = vmatpush1.msra.mxu0 0.0
    %1270 = vmatprep.subr.mxu0 0.0
    %1271 = vmatpush1.msra.mxu0 0.0
    %1272 = vmatprep.subr.mxu0 0.0
    %1273 = vmatpush1.msra.mxu0 0.0
    %1274 = vmatprep.subr.mxu0 0.0
    %1275 = vmatpush1.msra.mxu0 0.0
    %1276 = vmatprep.subr.mxu0 0.0
    %1277 = vmatpush1.msra.mxu0 0.0
    %1278 = vmatprep.subr.mxu0 0.0
    %1279 = vmatpush1.msra.mxu0 0.0
    %1280 = vmatprep.subr.mxu0 0.0
    %1281 = vmatpush1.msra.mxu0 0.0
    %1282 = vmatprep.subr.mxu0 0.0
    %1283 = vmatpush1.msra.mxu0 0.0
    %1284 = vmatprep.subr.mxu0 0.0
    %1285 = vmatpush1.msra.mxu0 0.0
    %1286 = vmatprep.subr.mxu0 0.0
    %1287 = vmatpush1.msra.mxu0 0.0
    %1288 = vmatprep.subr.mxu0 0.0
    %1289 = vmatpush1.msra.mxu0 0.0
    %1290 = vmatprep.subr.mxu0 0.0
    %1291 = vmatpush1.msra.mxu0 0.0
    %1292 = vmatprep.subr.mxu0 0.0
    %1293 = vmatpush1.msra.mxu0 0.0
    %1294 = vmatprep.subr.mxu0 0.0
    %1295 = vmatpush1.msra.mxu0 0.0
    %1296 = vmatprep.subr.mxu0 0.0
    %1297 = vmatpush1.msra.mxu0 0.0
    %1298 = vmatprep.subr.mxu0 0.0
    %1299 = vmatpush1.msra.mxu0 0.0
    %1300 = vmatprep.subr.mxu0 0.0
    %1301 = vmatpush1.msra.mxu0 0.0
    %1302 = vmatprep.subr.mxu0 0.0
    %1303 = vmatpush1.msra.mxu0 0.0
    %1304 = vmatprep.mubr.f32.mxu0 0.0
    %1305 = vmatmul.mubr.f32.gmra.mrb[0].mxu0 %v1019
    %v1306 = vpop.f32.mrb[0].mxu0
    %v1307 = vadd.f32 %v1237, %v1306
    %v1308 = vpop.f32.mrb[0].mxu0
    %1309 = vdwg.mxu0
    %v1310 = vadd.f32 %v1307, %v89
    %v1311 = vtanh.pop %v1310
    %v1313 = vsel %vm190, %v1311, 0
    %1315 = vmatprep.subr.mxu0 0.0
    %1316 = vmatpush1.msra.mxu0 %v64
    %1317 = vmatprep.subr.mxu0 0.0
    %1318 = vmatpush1.msra.mxu0 %v65
    %1319 = vmatprep.subr.mxu0 0.0
    %1320 = vmatpush1.msra.mxu0 %v66
    %1321 = vmatprep.subr.mxu0 0.0
    %1322 = vmatpush1.msra.mxu0 %v67
    %1323 = vmatprep.subr.mxu0 0.0
    %1324 = vmatpush1.msra.mxu0 0.0
    %1325 = vmatprep.subr.mxu0 0.0
    %1326 = vmatpush1.msra.mxu0 0.0
    %1327 = vmatprep.subr.mxu0 0.0
    %1328 = vmatpush1.msra.mxu0 0.0
    %1329 = vmatprep.subr.mxu0 0.0
    %1330 = vmatpush1.msra.mxu0 0.0
    %1331 = vmatprep.subr.mxu0 0.0
    %1332 = vmatpush1.msra.mxu0 0.0
    %1333 = vmatprep.subr.mxu0 0.0
    %1334 = vmatpush1.msra.mxu0 0.0
    %1335 = vmatprep.subr.mxu0 0.0
    %1336 = vmatpush1.msra.mxu0 0.0
    %1337 = vmatprep.subr.mxu0 0.0
    %1338 = vmatpush1.msra.mxu0 0.0
    %1339 = vmatprep.subr.mxu0 0.0
    %1340 = vmatpush1.msra.mxu0 0.0
    %1341 = vmatprep.subr.mxu0 0.0
    %1342 = vmatpush1.msra.mxu0 0.0
    %1343 = vmatprep.subr.mxu0 0.0
    %1344 = vmatpush1.msra.mxu0 0.0
    %1345 = vmatprep.subr.mxu0 0.0
    %1346 = vmatpush1.msra.mxu0 0.0
    %1347 = vmatprep.subr.mxu0 0.0
    %1348 = vmatpush1.msra.mxu0 0.0
    %1349 = vmatprep.subr.mxu0 0.0
    %1350 = vmatpush1.msra.mxu0 0.0
    %1351 = vmatprep.subr.mxu0 0.0
    %1352 = vmatpush1.msra.mxu0 0.0
    %1353 = vmatprep.subr.mxu0 0.0
    %1354 = vmatpush1.msra.mxu0 0.0
    %1355 = vmatprep.subr.mxu0 0.0
    %1356 = vmatpush1.msra.mxu0 0.0
    %1357 = vmatprep.subr.mxu0 0.0
    %1358 = vmatpush1.msra.mxu0 0.0
    %1359 = vmatprep.subr.mxu0 0.0
    %1360 = vmatpush1.msra.mxu0 0.0
    %1361 = vmatprep.subr.mxu0 0.0
    %1362 = vmatpush1.msra.mxu0 0.0
    %1363 = vmatprep.subr.mxu0 0.0
    %1364 = vmatpush1.msra.mxu0 0.0
    %1365 = vmatprep.subr.mxu0 0.0
    %1366 = vmatpush1.msra.mxu0 0.0
    %1367 = vmatprep.subr.mxu0 0.0
    %1368 = vmatpush1.msra.mxu0 0.0
    %1369 = vmatprep.subr.mxu0 0.0
    %1370 = vmatpush1.msra.mxu0 0.0
    %1371 = vmatprep.subr.mxu0 0.0
    %1372 = vmatpush1.msra.mxu0 0.0
    %1373 = vmatprep.subr.mxu0 0.0
    %1374 = vmatpush1.msra.mxu0 0.0
    %1375 = vmatprep.subr.mxu0 0.0
    %1376 = vmatpush1.msra.mxu0 0.0
    %1377 = vmatprep.subr.mxu0 0.0
    %1378 = vmatpush1.msra.mxu0 0.0
    %1379 = vmatprep.mubr.f32.mxu0 0.0
    %1380 = vmatmul.mubr.f32.gmra.mrb[0].mxu0 %v1313
    %v1381 = vpop.f32.mrb[0].mxu0
    %v1382 = vadd.f32 %v96, %v1381
    %v1383 = vpop.f32.mrb[0].mxu0
    %1384 = vdwg.mxu0
    %v1385 = vsel %vm412, %v1382, -inf
    %1386 = vmax.xlane.f32.xlu0 %v1385
    %v1387 = vpop.xlane.xlu0 %1386
    %v1388 = vsub.f32 %v1382, %v1387
    %v1389 = vmul.f32 %v1388, 1.442695
    %v1390 = vpow.pop %v1389
    %v1391 = vsel %vm412, %v1390, 0.0
    %1392 = vadd.xlane.f32.xlu0 %v1391
    %v1393 = vpop.xlane.xlu0 %1392
    %v1394 = vrcp.pop %v1393
    %v1395 = vmul.f32 %v1390, %v1394
    %v1397 = vsel %vm424, %v1395, 0
    %1399 = vmatprep.subr.mxu0 0.0
    %1400 = vmatpush1.msra.mxu0 %v68
    %1401 = vmatprep.subr.mxu0 0.0
    %1402 = vmatpush1.msra.mxu0 %v69
    %1403 = vmatprep.subr.mxu0 0.0
    %1404 = vmatpush1.msra.mxu0 %v70
    %1405 = vmatprep.subr.mxu0 0.0
    %1406 = vmatpush1.msra.mxu0 %v71
    %1407 = vmatprep.subr.mxu0 0.0
    %1408 = vmatpush1.msra.mxu0 %v72
    %1409 = vmatprep.subr.mxu0 0.0
    %1410 = vmatpush1.msra.mxu0 %v73
    %1411 = vmatprep.subr.mxu0 0.0
    %1412 = vmatpush1.msra.mxu0 %v74
    %1413 = vmatprep.subr.mxu0 0.0
    %1414 = vmatpush1.msra.mxu0 %v75
    %1415 = vmatprep.subr.mxu0 0.0
    %1416 = vmatpush1.msra.mxu0 0.0
    %1417 = vmatprep.subr.mxu0 0.0
    %1418 = vmatpush1.msra.mxu0 0.0
    %1419 = vmatprep.subr.mxu0 0.0
    %1420 = vmatpush1.msra.mxu0 0.0
    %1421 = vmatprep.subr.mxu0 0.0
    %1422 = vmatpush1.msra.mxu0 0.0
    %1423 = vmatprep.subr.mxu0 0.0
    %1424 = vmatpush1.msra.mxu0 0.0
    %1425 = vmatprep.subr.mxu0 0.0
    %1426 = vmatpush1.msra.mxu0 0.0
    %1427 = vmatprep.subr.mxu0 0.0
    %1428 = vmatpush1.msra.mxu0 0.0
    %1429 = vmatprep.subr.mxu0 0.0
    %1430 = vmatpush1.msra.mxu0 0.0
    %1431 = vmatprep.subr.mxu0 0.0
    %1432 = vmatpush1.msra.mxu0 0.0
    %1433 = vmatprep.subr.mxu0 0.0
    %1434 = vmatpush1.msra.mxu0 0.0
    %1435 = vmatprep.subr.mxu0 0.0
    %1436 = vmatpush1.msra.mxu0 0.0
    %1437 = vmatprep.subr.mxu0 0.0
    %1438 = vmatpush1.msra.mxu0 0.0
    %1439 = vmatprep.subr.mxu0 0.0
    %1440 = vmatpush1.msra.mxu0 0.0
    %1441 = vmatprep.subr.mxu0 0.0
    %1442 = vmatpush1.msra.mxu0 0.0
    %1443 = vmatprep.subr.mxu0 0.0
    %1444 = vmatpush1.msra.mxu0 0.0
    %1445 = vmatprep.subr.mxu0 0.0
    %1446 = vmatpush1.msra.mxu0 0.0
    %1447 = vmatprep.subr.mxu0 0.0
    %1448 = vmatpush1.msra.mxu0 0.0
    %1449 = vmatprep.subr.mxu0 0.0
    %1450 = vmatpush1.msra.mxu0 0.0
    %1451 = vmatprep.subr.mxu0 0.0
    %1452 = vmatpush1.msra.mxu0 0.0
    %1453 = vmatprep.subr.mxu0 0.0
    %1454 = vmatpush1.msra.mxu0 0.0
    %1455 = vmatprep.subr.mxu0 0.0
    %1456 = vmatpush1.msra.mxu0 0.0
    %1457 = vmatprep.subr.mxu0 0.0
    %1458 = vmatpush1.msra.mxu0 0.0
    %1459 = vmatprep.subr.mxu0 0.0
    %1460 = vmatpush1.msra.mxu0 0.0
    %1461 = vmatprep.subr.mxu0 0.0
    %1462 = vmatpush1.msra.mxu0 0.0
    %1463 = vmatprep.mubr.f32.mxu0 0.0
    %1464 = vmatmul.mubr.f32.gmra.mrb[0].mxu0 %v1397
    %v1465 = vpop.f32.mrb[0].mxu0
    %v1466 = vadd.f32 0.0, %v1465
    %v1467 = vpop.f32.mrb[0].mxu0
    %1468 = vdwg.mxu0
    %v1470 = vsel %vm190, %v1092, 0
    %1472 = vmatprep.subr.mxu0 0.0
    %1473 = vmatpush1.msra.mxu0 %v80
    %1474 = vmatprep.subr.mxu0 0.0
    %1475 = vmatpush1.msra.mxu0 %v81
    %1476 = vmatprep.subr.mxu0 0.0
    %1477 = vmatpush1.msra.mxu0 %v82
    %1478 = vmatprep.subr.mxu0 0.0
    %1479 = vmatpush1.msra.mxu0 %v83
    %1480 = vmatprep.subr.mxu0 0.0
    %1481 = vmatpush1.msra.mxu0 0.0
    %1482 = vmatprep.subr.mxu0 0.0
    %1483 = vmatpush1.msra.mxu0 0.0
    %1484 = vmatprep.subr.mxu0 0.0
    %1485 = vmatpush1.msra.mxu0 0.0
    %1486 = vmatprep.subr.mxu0 0.0
    %1487 = vmatpush1.msra.mxu0 0.0
    %1488 = vmatprep.subr.mxu0 0.0
    %1489 = vmatpush1.msra.mxu0 0.0
    %1490 = vmatprep.subr.mxu0 0.0
    %1491 = vmatpush1.msra.mxu0 0.0
    %1492 = vmatprep.subr.mxu0 0.0
    %1493 = vmatpush1.msra.mxu0 0.0
    %1494 = vmatprep.subr.mxu0 0.0
    %1495 = vmatpush1.msra.mxu0 0.0
    %1496 = vmatprep.subr.mxu0 0.0
    %1497 = vmatpush1.msra.mxu0 0.0
    %1498 = vmatprep.subr.mxu0 0.0
    %1499 = vmatpush1.msra.mxu0 0.0
    %1500 = vmatprep.subr.mxu0 0.0
    %1501 = vmatpush1.msra.mxu0 0.0
    %1502 = vmatprep.subr.mxu0 0.0
    %1503 = vmatpush1.msra.mxu0 0.0
    %1504 = vmatprep.subr.mxu0 0.0
    %1505 = vmatpush1.msra.mxu0 0.0
    %1506 = vmatprep.subr.mxu0 0.0
    %1507 = vmatpush1.msra.mxu0 0.0
    %1508 = vmatprep.subr.mxu0 0.0
    %1509 = vmatpush1.msra.mxu0 0.0
    %1510 = vmatprep.subr.mxu0 0.0
    %1511 = vmatpush1.msra.mxu0 0.0
    %1512 = vmatprep.subr.mxu0 0.0
    %1513 = vmatpush1.msra.mxu0 0.0
    %1514 = vmatprep.subr.mxu0 0.0
    %1515 = vmatpush1.msra.mxu0 0.0
    %1516 = vmatprep.subr.mxu0 0.0
    %1517 = vmatpush1.msra.mxu0 0.0
    %1518 = vmatprep.subr.mxu0 0.0
    %1519 = vmatpush1.msra.mxu0 0.0
    %1520 = vmatprep.subr.mxu0 0.0
    %1521 = vmatpush1.msra.mxu0 0.0
    %1522 = vmatprep.subr.mxu0 0.0
    %1523 = vmatpush1.msra.mxu0 0.0
    %1524 = vmatprep.subr.mxu0 0.0
    %1525 = vmatpush1.msra.mxu0 0.0
    %1526 = vmatprep.subr.mxu0 0.0
    %1527 = vmatpush1.msra.mxu0 0.0
    %1528 = vmatprep.subr.mxu0 0.0
    %1529 = vmatpush1.msra.mxu0 0.0
    %1530 = vmatprep.subr.mxu0 0.0
    %1531 = vmatpush1.msra.mxu0 0.0
    %1532 = vmatprep.subr.mxu0 0.0
    %1533 = vmatpush1.msra.mxu0 0.0
    %1534 = vmatprep.subr.mxu0 0.0
    %1535 = vmatpush1.msra.mxu0 0.0
    %1536 = vmatprep.mubr.f32.mxu0 0.0
    %1537 = vmatmul.mubr.f32.gmra.mrb[0].mxu0 %v1470
    %v1538 = vpop.f32.mrb[0].mxu0
    %v1539 = vadd.f32 0.0, %v1538
    %v1540 = vpop.f32.mrb[0].mxu0
    %1541 = vdwg.mxu0
    %v1543 = vsel %vm190, %v1466, 0
    %1545 = vmatprep.subr.mxu0 0.0
    %1546 = vmatpush1.msra.mxu0 %v76
    %1547 = vmatprep.subr.mxu0 0.0
    %1548 = vmatpush1.msra.mxu0 %v77
    %1549 = vmatprep.subr.mxu0 0.0
    %1550 = vmatpush1.msra.mxu0 %v78
    %1551 = vmatprep.subr.mxu0 0.0
    %1552 = vmatpush1.msra.mxu0 %v79
    %1553 = vmatprep.subr.mxu0 0.0
    %1554 = vmatpush1.msra.mxu0 0.0
    %1555 = vmatprep.subr.mxu0 0.0
    %1556 = vmatpush1.msra.mxu0 0.0
    %1557 = vmatprep.subr.mxu0 0.0
    %1558 = vmatpush1.msra.mxu0 0.0
    %1559 = vmatprep.subr.mxu0 0.0
    %1560 = vmatpush1.msra.mxu0 0.0
    %1561 = vmatprep.subr.mxu0 0.0
    %1562 = vmatpush1.msra.mxu0 0.0
    %1563 = vmatprep.subr.mxu0 0.0
    %1564 = vmatpush1.msra.mxu0 0.0
    %1565 = vmatprep.subr.mxu0 0.0
    %1566 = vmatpush1.msra.mxu0 0.0
    %1567 = vmatprep.subr.mxu0 0.0
    %1568 = vmatpush1.msra.mxu0 0.0
    %1569 = vmatprep.subr.mxu0 0.0
    %1570 = vmatpush1.msra.mxu0 0.0
    %1571 = vmatprep.subr.mxu0 0.0
    %1572 = vmatpush1.msra.mxu0 0.0
    %1573 = vmatprep.subr.mxu0 0.0
    %1574 = vmatpush1.msra.mxu0 0.0
    %1575 = vmatprep.subr.mxu0 0.0
    %1576 = vmatpush1.msra.mxu0 0.0
    %1577 = vmatprep.subr.mxu0 0.0
    %1578 = vmatpush1.msra.mxu0 0.0
    %1579 = vmatprep.subr.mxu0 0.0
    %1580 = vmatpush1.msra.mxu0 0.0
    %1581 = vmatprep.subr.mxu0 0.0
    %1582 = vmatpush1.msra.mxu0 0.0
    %1583 = vmatprep.subr.mxu0 0.0
    %1584 = vmatpush1.msra.mxu0 0.0
    %1585 = vmatprep.subr.mxu0 0.0
    %1586 = vmatpush1.msra.mxu0 0.0
    %1587 = vmatprep.subr.mxu0 0.0
    %1588 = vmatpush1.msra.mxu0 0.0
    %1589 = vmatprep.subr.mxu0 0.0
    %1590 = vmatpush1.msra.mxu0 0.0
    %1591 = vmatprep.subr.mxu0 0.0
    %1592 = vmatpush1.msra.mxu0 0.0
    %1593 = vmatprep.subr.mxu0 0.0
    %1594 = vmatpush1.msra.mxu0 0.0
    %1595 = vmatprep.subr.mxu0 0.0
    %1596 = vmatpush1.msra.mxu0 0.0
    %1597 = vmatprep.subr.mxu0 0.0
    %1598 = vmatpush1.msra.mxu0 0.0
    %1599 = vmatprep.subr.mxu0 0.0
    %1600 = vmatpush1.msra.mxu0 0.0
    %1601 = vmatprep.subr.mxu0 0.0
    %1602 = vmatpush1.msra.mxu0 0.0
    %1603 = vmatprep.subr.mxu0 0.0
    %1604 = vmatpush1.msra.mxu0 0.0
    %1605 = vmatprep.subr.mxu0 0.0
    %1606 = vmatpush1.msra.mxu0 0.0
    %1607 = vmatprep.subr.mxu0 0.0
    %1608 = vmatpush1.msra.mxu0 0.0
    %1609 = vmatprep.mubr.f32.mxu0 0.0
    %1610 = vmatmul.mubr.f32.gmra.mrb[0].mxu0 %v1543
    %v1611 = vpop.f32.mrb[0].mxu0
    %v1612 = vadd.f32 %v1539, %v1611
    %v1613 = vpop.f32.mrb[0].mxu0
    %1614 = vdwg.mxu0
    %v1615 = vadd.f32 %v1612, %v103
    %v1616 = vtanh.pop %v1615
    %s1617 = scalar_lea.vmem %s0, 8
    %v1618 = vld [vmem:[%s1617] sm:$0xf]
    %v1620 = vsel %vm190, %v1169, 0
    %1622 = vmatprep.subr.mxu0 0.0
    %1623 = vmatpush1.msra.mxu0 %v80
    %1624 = vmatprep.subr.mxu0 0.0
    %1625 = vmatpush1.msra.mxu0 %v81
    %1626 = vmatprep.subr.mxu0 0.0
    %1627 = vmatpush1.msra.mxu0 %v82
    %1628 = vmatprep.subr.mxu0 0.0
    %1629 = vmatpush1.msra.mxu0 %v83
    %1630 = vmatprep.subr.mxu0 0.0
    %1631 = vmatpush1.msra.mxu0 0.0
    %1632 = vmatprep.subr.mxu0 0.0
    %1633 = vmatpush1.msra.mxu0 0.0
    %1634 = vmatprep.subr.mxu0 0.0
    %1635 = vmatpush1.msra.mxu0 0.0
    %1636 = vmatprep.subr.mxu0 0.0
    %1637 = vmatpush1.msra.mxu0 0.0
    %1638 = vmatprep.subr.mxu0 0.0
    %1639 = vmatpush1.msra.mxu0 0.0
    %1640 = vmatprep.subr.mxu0 0.0
    %1641 = vmatpush1.msra.mxu0 0.0
    %1642 = vmatprep.subr.mxu0 0.0
    %1643 = vmatpush1.msra.mxu0 0.0
    %1644 = vmatprep.subr.mxu0 0.0
    %1645 = vmatpush1.msra.mxu0 0.0
    %1646 = vmatprep.subr.mxu0 0.0
    %1647 = vmatpush1.msra.mxu0 0.0
    %1648 = vmatprep.subr.mxu0 0.0
    %1649 = vmatpush1.msra.mxu0 0.0
    %1650 = vmatprep.subr.mxu0 0.0
    %1651 = vmatpush1.msra.mxu0 0.0
    %1652 = vmatprep.subr.mxu0 0.0
    %1653 = vmatpush1.msra.mxu0 0.0
    %1654 = vmatprep.subr.mxu0 0.0
    %1655 = vmatpush1.msra.mxu0 0.0
    %1656 = vmatprep.subr.mxu0 0.0
    %1657 = vmatpush1.msra.mxu0 0.0
    %1658 = vmatprep.subr.mxu0 0.0
    %1659 = vmatpush1.msra.mxu0 0.0
    %1660 = vmatprep.subr.mxu0 0.0
    %1661 = vmatpush1.msra.mxu0 0.0
    %1662 = vmatprep.subr.mxu0 0.0
    %1663 = vmatpush1.msra.mxu0 0.0
    %1664 = vmatprep.subr.mxu0 0.0
    %1665 = vmatpush1.msra.mxu0 0.0
    %1666 = vmatprep.subr.mxu0 0.0
    %1667 = vmatpush1.msra.mxu0 0.0
    %1668 = vmatprep.subr.mxu0 0.0
    %1669 = vmatpush1.msra.mxu0 0.0
    %1670 = vmatprep.subr.mxu0 0.0
    %1671 = vmatpush1.msra.mxu0 0.0
    %1672 = vmatprep.subr.mxu0 0.0
    %1673 = vmatpush1.msra.mxu0 0.0
    %1674 = vmatprep.subr.mxu0 0.0
    %1675 = vmatpush1.msra.mxu0 0.0
    %1676 = vmatprep.subr.mxu0 0.0
    %1677 = vmatpush1.msra.mxu0 0.0
    %1678 = vmatprep.subr.mxu0 0.0
    %1679 = vmatpush1.msra.mxu0 0.0
    %1680 = vmatprep.subr.mxu0 0.0
    %1681 = vmatpush1.msra.mxu0 0.0
    %1682 = vmatprep.subr.mxu0 0.0
    %1683 = vmatpush1.msra.mxu0 0.0
    %1684 = vmatprep.subr.mxu0 0.0
    %1685 = vmatpush1.msra.mxu0 0.0
    %1686 = vmatprep.mubr.f32.mxu0 0.0
    %1687 = vmatmul.mubr.f32.gmra.mrb[0].mxu0 %v1620
    %v1688 = vpop.f32.mrb[0].mxu0
    %v1689 = vadd.f32 0.0, %v1688
    %v1690 = vpop.f32.mrb[0].mxu0
    %1691 = vdwg.mxu0
    %v1692 = vadd.f32 %v1618, %v1689
    %v1693 = vtanh.pop %v1692
    %1694 = vmatprep.subr.mxu0 0.0
    %1695 = vmatpush1.msra.mxu0 %v60
    %1696 = vmatprep.subr.mxu0 0.0
    %1697 = vmatpush1.msra.mxu0 %v61
    %1698 = vmatprep.subr.mxu0 0.0
    %1699 = vmatpush1.msra.mxu0 %v62
    %1700 = vmatprep.subr.mxu0 0.0
    %1701 = vmatpush1.msra.mxu0 %v63
    %1702 = vmatprep.subr.mxu0 0.0
    %1703 = vmatpush1.msra.mxu0 0.0
    %1704 = vmatprep.subr.mxu0 0.0
    %1705 = vmatpush1.msra.mxu0 0.0
    %1706 = vmatprep.subr.mxu0 0.0
    %1707 = vmatpush1.msra.mxu0 0.0
    %1708 = vmatprep.subr.mxu0 0.0
    %1709 = vmatpush1.msra.mxu0 0.0
    %1710 = vmatprep.subr.mxu0 0.0
    %1711 = vmatpush1.msra.mxu0 0.0
    %1712 = vmatprep.subr.mxu0 0.0
    %1713 = vmatpush1.msra.mxu0 0.0
    %1714 = vmatprep.subr.mxu0 0.0
    %1715 = vmatpush1.msra.mxu0 0.0
    %1716 = vmatprep.subr.mxu0 0.0
    %1717 = vmatpush1.msra.mxu0 0.0
    %1718 = vmatprep.subr.mxu0 0.0
    %1719 = vmatpush1.msra.mxu0 0.0
    %1720 = vmatprep.subr.mxu0 0.0
    %1721 = vmatpush1.msra.mxu0 0.0
    %1722 = vmatprep.subr.mxu0 0.0
    %1723 = vmatpush1.msra.mxu0 0.0
    %1724 = vmatprep.subr.mxu0 0.0
    %1725 = vmatpush1.msra.mxu0 0.0
    %1726 = vmatprep.subr.mxu0 0.0
    %1727 = vmatpush1.msra.mxu0 0.0
    %1728 = vmatprep.subr.mxu0 0.0
    %1729 = vmatpush1.msra.mxu0 0.0
    %1730 = vmatprep.subr.mxu0 0.0
    %1731 = vmatpush1.msra.mxu0 0.0
    %1732 = vmatprep.subr.mxu0 0.0
    %1733 = vmatpush1.msra.mxu0 0.0
    %1734 = vmatprep.subr.mxu0 0.0
    %1735 = vmatpush1.msra.mxu0 0.0
    %1736 = vmatprep.subr.mxu0 0.0
    %1737 = vmatpush1.msra.mxu0 0.0
    %1738 = vmatprep.subr.mxu0 0.0
    %1739 = vmatpush1.msra.mxu0 0.0
    %1740 = vmatprep.subr.mxu0 0.0
    %1741 = vmatpush1.msra.mxu0 0.0
    %1742 = vmatprep.subr.mxu0 0.0
    %1743 = vmatpush1.msra.mxu0 0.0
    %1744 = vmatprep.subr.mxu0 0.0
    %1745 = vmatpush1.msra.mxu0 0.0
    %1746 = vmatprep.subr.mxu0 0.0
    %1747 = vmatpush1.msra.mxu0 0.0
    %1748 = vmatprep.subr.mxu0 0.0
    %1749 = vmatpush1.msra.mxu0 0.0
    %1750 = vmatprep.subr.mxu0 0.0
    %1751 = vmatpush1.msra.mxu0 0.0
    %1752 = vmatprep.subr.mxu0 0.0
    %1753 = vmatpush1.msra.mxu0 0.0
    %1754 = vmatprep.subr.mxu0 0.0
    %1755 = vmatpush1.msra.mxu0 0.0
    %1756 = vmatprep.subr.mxu0 0.0
    %1757 = vmatpush1.msra.mxu0 0.0
    %1758 = vmatprep.mubr.f32.mxu0 0.0
    %1759 = vmatmul.mubr.f32.gmra.mrb[0].mxu0 %v1313
    %v1760 = vpop.f32.mrb[0].mxu0
    %v1761 = vadd.f32 0.0, %v1760
    %v1762 = vpop.f32.mrb[0].mxu0
    %1763 = vdwg.mxu0
    %1764 = vmatprep.subr.mxu0 0.0
    %1765 = vmatpush1.msra.mxu0 %v56
    %1766 = vmatprep.subr.mxu0 0.0
    %1767 = vmatpush1.msra.mxu0 %v57
    %1768 = vmatprep.subr.mxu0 0.0
    %1769 = vmatpush1.msra.mxu0 %v58
    %1770 = vmatprep.subr.mxu0 0.0
    %1771 = vmatpush1.msra.mxu0 %v59
    %1772 = vmatprep.subr.mxu0 0.0
    %1773 = vmatpush1.msra.mxu0 0.0
    %1774 = vmatprep.subr.mxu0 0.0
    %1775 = vmatpush1.msra.mxu0 0.0
    %1776 = vmatprep.subr.mxu0 0.0
    %1777 = vmatpush1.msra.mxu0 0.0
    %1778 = vmatprep.subr.mxu0 0.0
    %1779 = vmatpush1.msra.mxu0 0.0
    %1780 = vmatprep.subr.mxu0 0.0
    %1781 = vmatpush1.msra.mxu0 0.0
    %1782 = vmatprep.subr.mxu0 0.0
    %1783 = vmatpush1.msra.mxu0 0.0
    %1784 = vmatprep.subr.mxu0 0.0
    %1785 = vmatpush1.msra.mxu0 0.0
    %1786 = vmatprep.subr.mxu0 0.0
    %1787 = vmatpush1.msra.mxu0 0.0
    %1788 = vmatprep.subr.mxu0 0.0
    %1789 = vmatpush1.msra.mxu0 0.0
    %1790 = vmatprep.subr.mxu0 0.0
    %1791 = vmatpush1.msra.mxu0 0.0
    %1792 = vmatprep.subr.mxu0 0.0
    %1793 = vmatpush1.msra.mxu0 0.0
    %1794 = vmatprep.subr.mxu0 0.0
    %1795 = vmatpush1.msra.mxu0 0.0
    %1796 = vmatprep.subr.mxu0 0.0
    %1797 = vmatpush1.msra.mxu0 0.0
    %1798 = vmatprep.subr.mxu0 0.0
    %1799 = vmatpush1.msra.mxu0 0.0
    %1800 = vmatprep.subr.mxu0 0.0
    %1801 = vmatpush1.msra.mxu0 0.0
    %1802 = vmatprep.subr.mxu0 0.0
    %1803 = vmatpush1.msra.mxu0 0.0
    %1804 = vmatprep.subr.mxu0 0.0
    %1805 = vmatpush1.msra.mxu0 0.0
    %1806 = vmatprep.subr.mxu0 0.0
    %1807 = vmatpush1.msra.mxu0 0.0
    %1808 = vmatprep.subr.mxu0 0.0
    %1809 = vmatpush1.msra.mxu0 0.0
    %1810 = vmatprep.subr.mxu0 0.0
    %1811 = vmatpush1.msra.mxu0 0.0
    %1812 = vmatprep.subr.mxu0 0.0
    %1813 = vmatpush1.msra.mxu0 0.0
    %1814 = vmatprep.subr.mxu0 0.0
    %1815 = vmatpush1.msra.mxu0 0.0
    %1816 = vmatprep.subr.mxu0 0.0
    %1817 = vmatpush1.msra.mxu0 0.0
    %1818 = vmatprep.subr.mxu0 0.0
    %1819 = vmatpush1.msra.mxu0 0.0
    %1820 = vmatprep.subr.mxu0 0.0
    %1821 = vmatpush1.msra.mxu0 0.0
    %1822 = vmatprep.subr.mxu0 0.0
    %1823 = vmatpush1.msra.mxu0 0.0
    %1824 = vmatprep.subr.mxu0 0.0
    %1825 = vmatpush1.msra.mxu0 0.0
    %1826 = vmatprep.subr.mxu0 0.0
    %1827 = vmatpush1.msra.mxu0 0.0
    %1828 = vmatprep.mubr.f32.mxu0 0.0
    %1829 = vmatmul.mubr.f32.gmra.mrb[0].mxu0 %v1543
    %v1830 = vpop.f32.mrb[0].mxu0
    %v1831 = vadd.f32 %v1761, %v1830
    %v1832 = vpop.f32.mrb[0].mxu0
    %1833 = vdwg.mxu0
    %v1834 = vadd.f32 %v1831, %v89
    %v1835 = vtanh.pop %v1834
    %v1837 = vsel %vm190, %v1835, 0
    %1839 = vmatprep.subr.mxu0 0.0
    %1840 = vmatpush1.msra.mxu0 %v64
    %1841 = vmatprep.subr.mxu0 0.0
    %1842 = vmatpush1.msra.mxu0 %v65
    %1843 = vmatprep.subr.mxu0 0.0
    %1844 = vmatpush1.msra.mxu0 %v66
    %1845 = vmatprep.subr.mxu0 0.0
    %1846 = vmatpush1.msra.mxu0 %v67
    %1847 = vmatprep.subr.mxu0 0.0
    %1848 = vmatpush1.msra.mxu0 0.0
    %1849 = vmatprep.subr.mxu0 0.0
    %1850 = vmatpush1.msra.mxu0 0.0
    %1851 = vmatprep.subr.mxu0 0.0
    %1852 = vmatpush1.msra.mxu0 0.0
    %1853 = vmatprep.subr.mxu0 0.0
    %1854 = vmatpush1.msra.mxu0 0.0
    %1855 = vmatprep.subr.mxu0 0.0
    %1856 = vmatpush1.msra.mxu0 0.0
    %1857 = vmatprep.subr.mxu0 0.0
    %1858 = vmatpush1.msra.mxu0 0.0
    %1859 = vmatprep.subr.mxu0 0.0
    %1860 = vmatpush1.msra.mxu0 0.0
    %1861 = vmatprep.subr.mxu0 0.0
    %1862 = vmatpush1.msra.mxu0 0.0
    %1863 = vmatprep.subr.mxu0 0.0
    %1864 = vmatpush1.msra.mxu0 0.0
    %1865 = vmatprep.subr.mxu0 0.0
    %1866 = vmatpush1.msra.mxu0 0.0
    %1867 = vmatprep.subr.mxu0 0.0
    %1868 = vmatpush1.msra.mxu0 0.0
    %1869 = vmatprep.subr.mxu0 0.0
    %1870 = vmatpush1.msra.mxu0 0.0
    %1871 = vmatprep.subr.mxu0 0.0
    %1872 = vmatpush1.msra.mxu0 0.0
    %1873 = vmatprep.subr.mxu0 0.0
    %1874 = vmatpush1.msra.mxu0 0.0
    %1875 = vmatprep.subr.mxu0 0.0
    %1876 = vmatpush1.msra.mxu0 0.0
    %1877 = vmatprep.subr.mxu0 0.0
    %1878 = vmatpush1.msra.mxu0 0.0
    %1879 = vmatprep.subr.mxu0 0.0
    %1880 = vmatpush1.msra.mxu0 0.0
    %1881 = vmatprep.subr.mxu0 0.0
    %1882 = vmatpush1.msra.mxu0 0.0
    %1883 = vmatprep.subr.mxu0 0.0
    %1884 = vmatpush1.msra.mxu0 0.0
    %1885 = vmatprep.subr.mxu0 0.0
    %1886 = vmatpush1.msra.mxu0 0.0
    %1887 = vmatprep.subr.mxu0 0.0
    %1888 = vmatpush1.msra.mxu0 0.0
    %1889 = vmatprep.subr.mxu0 0.0
    %1890 = vmatpush1.msra.mxu0 0.0
    %1891 = vmatprep.subr.mxu0 0.0
    %1892 = vmatpush1.msra.mxu0 0.0
    %1893 = vmatprep.subr.mxu0 0.0
    %1894 = vmatpush1.msra.mxu0 0.0
    %1895 = vmatprep.subr.mxu0 0.0
    %1896 = vmatpush1.msra.mxu0 0.0
    %1897 = vmatprep.subr.mxu0 0.0
    %1898 = vmatpush1.msra.mxu0 0.0
    %1899 = vmatprep.subr.mxu0 0.0
    %1900 = vmatpush1.msra.mxu0 0.0
    %1901 = vmatprep.subr.mxu0 0.0
    %1902 = vmatpush1.msra.mxu0 0.0
    %1903 = vmatprep.mubr.f32.mxu0 0.0
    %1904 = vmatmul.mubr.f32.gmra.mrb[0].mxu0 %v1837
    %v1905 = vpop.f32.mrb[0].mxu0
    %v1906 = vadd.f32 %v96, %v1905
    %v1907 = vpop.f32.mrb[0].mxu0
    %1908 = vdwg.mxu0
    %v1909 = vsel %vm412, %v1906, -inf
    %1910 = vmax.xlane.f32.xlu0 %v1909
    %v1911 = vpop.xlane.xlu0 %1910
    %v1912 = vsub.f32 %v1906, %v1911
    %v1913 = vmul.f32 %v1912, 1.442695
    %v1914 = vpow.pop %v1913
    %v1915 = vsel %vm412, %v1914, 0.0
    %1916 = vadd.xlane.f32.xlu0 %v1915
    %v1917 = vpop.xlane.xlu0 %1916
    %v1918 = vrcp.pop %v1917
    %v1919 = vmul.f32 %v1914, %v1918
    %v1921 = vsel %vm424, %v1919, 0
    %1923 = vmatprep.subr.mxu0 0.0
    %1924 = vmatpush1.msra.mxu0 %v68
    %1925 = vmatprep.subr.mxu0 0.0
    %1926 = vmatpush1.msra.mxu0 %v69
    %1927 = vmatprep.subr.mxu0 0.0
    %1928 = vmatpush1.msra.mxu0 %v70
    %1929 = vmatprep.subr.mxu0 0.0
    %1930 = vmatpush1.msra.mxu0 %v71
    %1931 = vmatprep.subr.mxu0 0.0
    %1932 = vmatpush1.msra.mxu0 %v72
    %1933 = vmatprep.subr.mxu0 0.0
    %1934 = vmatpush1.msra.mxu0 %v73
    %1935 = vmatprep.subr.mxu0 0.0
    %1936 = vmatpush1.msra.mxu0 %v74
    %1937 = vmatprep.subr.mxu0 0.0
    %1938 = vmatpush1.msra.mxu0 %v75
    %1939 = vmatprep.subr.mxu0 0.0
    %1940 = vmatpush1.msra.mxu0 0.0
    %1941 = vmatprep.subr.mxu0 0.0
    %1942 = vmatpush1.msra.mxu0 0.0
    %1943 = vmatprep.subr.mxu0 0.0
    %1944 = vmatpush1.msra.mxu0 0.0
    %1945 = vmatprep.subr.mxu0 0.0
    %1946 = vmatpush1.msra.mxu0 0.0
    %1947 = vmatprep.subr.mxu0 0.0
    %1948 = vmatpush1.msra.mxu0 0.0
    %1949 = vmatprep.subr.mxu0 0.0
    %1950 = vmatpush1.msra.mxu0 0.0
    %1951 = vmatprep.subr.mxu0 0.0
    %1952 = vmatpush1.msra.mxu0 0.0
    %1953 = vmatprep.subr.mxu0 0.0
    %1954 = vmatpush1.msra.mxu0 0.0
    %1955 = vmatprep.subr.mxu0 0.0
    %1956 = vmatpush1.msra.mxu0 0.0
    %1957 = vmatprep.subr.mxu0 0.0
    %1958 = vmatpush1.msra.mxu0 0.0
    %1959 = vmatprep.subr.mxu0 0.0
    %1960 = vmatpush1.msra.mxu0 0.0
    %1961 = vmatprep.subr.mxu0 0.0
    %1962 = vmatpush1.msra.mxu0 0.0
    %1963 = vmatprep.subr.mxu0 0.0
    %1964 = vmatpush1.msra.mxu0 0.0
    %1965 = vmatprep.subr.mxu0 0.0
    %1966 = vmatpush1.msra.mxu0 0.0
    %1967 = vmatprep.subr.mxu0 0.0
    %1968 = vmatpush1.msra.mxu0 0.0
    %1969 = vmatprep.subr.mxu0 0.0
    %1970 = vmatpush1.msra.mxu0 0.0
    %1971 = vmatprep.subr.mxu0 0.0
    %1972 = vmatpush1.msra.mxu0 0.0
    %1973 = vmatprep.subr.mxu0 0.0
    %1974 = vmatpush1.msra.mxu0 0.0
    %1975 = vmatprep.subr.mxu0 0.0
    %1976 = vmatpush1.msra.mxu0 0.0
    %1977 = vmatprep.subr.mxu0 0.0
    %1978 = vmatpush1.msra.mxu0 0.0
    %1979 = vmatprep.subr.mxu0 0.0
    %1980 = vmatpush1.msra.mxu0 0.0
    %1981 = vmatprep.subr.mxu0 0.0
    %1982 = vmatpush1.msra.mxu0 0.0
    %1983 = vmatprep.subr.mxu0 0.0
    %1984 = vmatpush1.msra.mxu0 0.0
    %1985 = vmatprep.subr.mxu0 0.0
    %1986 = vmatpush1.msra.mxu0 0.0
    %1987 = vmatprep.mubr.f32.mxu0 0.0
    %1988 = vmatmul.mubr.f32.gmra.mrb[0].mxu0 %v1921
    %v1989 = vpop.f32.mrb[0].mxu0
    %v1990 = vadd.f32 0.0, %v1989
    %v1991 = vpop.f32.mrb[0].mxu0
    %1992 = vdwg.mxu0
    %v1994 = vsel %vm190, %v1616, 0
    %1996 = vmatprep.subr.mxu0 0.0
    %1997 = vmatpush1.msra.mxu0 %v80
    %1998 = vmatprep.subr.mxu0 0.0
    %1999 = vmatpush1.msra.mxu0 %v81
    %2000 = vmatprep.subr.mxu0 0.0
    %2001 = vmatpush1.msra.mxu0 %v82
    %2002 = vmatprep.subr.mxu0 0.0
    %2003 = vmatpush1.msra.mxu0 %v83
    %2004 = vmatprep.subr.mxu0 0.0
    %2005 = vmatpush1.msra.mxu0 0.0
    %2006 = vmatprep.subr.mxu0 0.0
    %2007 = vmatpush1.msra.mxu0 0.0
    %2008 = vmatprep.subr.mxu0 0.0
    %2009 = vmatpush1.msra.mxu0 0.0
    %2010 = vmatprep.subr.mxu0 0.0
    %2011 = vmatpush1.msra.mxu0 0.0
    %2012 = vmatprep.subr.mxu0 0.0
    %2013 = vmatpush1.msra.mxu0 0.0
    %2014 = vmatprep.subr.mxu0 0.0
    %2015 = vmatpush1.msra.mxu0 0.0
    %2016 = vmatprep.subr.mxu0 0.0
    %2017 = vmatpush1.msra.mxu0 0.0
    %2018 = vmatprep.subr.mxu0 0.0
    %2019 = vmatpush1.msra.mxu0 0.0
    %2020 = vmatprep.subr.mxu0 0.0
    %2021 = vmatpush1.msra.mxu0 0.0
    %2022 = vmatprep.subr.mxu0 0.0
    %2023 = vmatpush1.msra.mxu0 0.0
    %2024 = vmatprep.subr.mxu0 0.0
    %2025 = vmatpush1.msra.mxu0 0.0
    %2026 = vmatprep.subr.mxu0 0.0
    %2027 = vmatpush1.msra.mxu0 0.0
    %2028 = vmatprep.subr.mxu0 0.0
    %2029 = vmatpush1.msra.mxu0 0.0
    %2030 = vmatprep.subr.mxu0 0.0
    %2031 = vmatpush1.msra.mxu0 0.0
    %2032 = vmatprep.subr.mxu0 0.0
    %2033 = vmatpush1.msra.mxu0 0.0
    %2034 = vmatprep.subr.mxu0 0.0
    %2035 = vmatpush1.msra.mxu0 0.0
    %2036 = vmatprep.subr.mxu0 0.0
    %2037 = vmatpush1.msra.mxu0 0.0
    %2038 = vmatprep.subr.mxu0 0.0
    %2039 = vmatpush1.msra.mxu0 0.0
    %2040 = vmatprep.subr.mxu0 0.0
    %2041 = vmatpush1.msra.mxu0 0.0
    %2042 = vmatprep.subr.mxu0 0.0
    %2043 = vmatpush1.msra.mxu0 0.0
    %2044 = vmatprep.subr.mxu0 0.0
    %2045 = vmatpush1.msra.mxu0 0.0
    %2046 = vmatprep.subr.mxu0 0.0
    %2047 = vmatpush1.msra.mxu0 0.0
    %2048 = vmatprep.subr.mxu0 0.0
    %2049 = vmatpush1.msra.mxu0 0.0
    %2050 = vmatprep.subr.mxu0 0.0
    %2051 = vmatpush1.msra.mxu0 0.0
    %2052 = vmatprep.subr.mxu0 0.0
    %2053 = vmatpush1.msra.mxu0 0.0
    %2054 = vmatprep.subr.mxu0 0.0
    %2055 = vmatpush1.msra.mxu0 0.0
    %2056 = vmatprep.subr.mxu0 0.0
    %2057 = vmatpush1.msra.mxu0 0.0
    %2058 = vmatprep.subr.mxu0 0.0
    %2059 = vmatpush1.msra.mxu0 0.0
    %2060 = vmatprep.mubr.f32.mxu0 0.0
    %2061 = vmatmul.mubr.f32.gmra.mrb[0].mxu0 %v1994
    %v2062 = vpop.f32.mrb[0].mxu0
    %v2063 = vadd.f32 0.0, %v2062
    %v2064 = vpop.f32.mrb[0].mxu0
    %2065 = vdwg.mxu0
    %v2067 = vsel %vm190, %v1990, 0
    %2069 = vmatprep.subr.mxu0 0.0
    %2070 = vmatpush1.msra.mxu0 %v76
    %2071 = vmatprep.subr.mxu0 0.0
    %2072 = vmatpush1.msra.mxu0 %v77
    %2073 = vmatprep.subr.mxu0 0.0
    %2074 = vmatpush1.msra.mxu0 %v78
    %2075 = vmatprep.subr.mxu0 0.0
    %2076 = vmatpush1.msra.mxu0 %v79
    %2077 = vmatprep.subr.mxu0 0.0
    %2078 = vmatpush1.msra.mxu0 0.0
    %2079 = vmatprep.subr.mxu0 0.0
    %2080 = vmatpush1.msra.mxu0 0.0
    %2081 = vmatprep.subr.mxu0 0.0
    %2082 = vmatpush1.msra.mxu0 0.0
    %2083 = vmatprep.subr.mxu0 0.0
    %2084 = vmatpush1.msra.mxu0 0.0
    %2085 = vmatprep.subr.mxu0 0.0
    %2086 = vmatpush1.msra.mxu0 0.0
    %2087 = vmatprep.subr.mxu0 0.0
    %2088 = vmatpush1.msra.mxu0 0.0
    %2089 = vmatprep.subr.mxu0 0.0
    %2090 = vmatpush1.msra.mxu0 0.0
    %2091 = vmatprep.subr.mxu0 0.0
    %2092 = vmatpush1.msra.mxu0 0.0
    %2093 = vmatprep.subr.mxu0 0.0
    %2094 = vmatpush1.msra.mxu0 0.0
    %2095 = vmatprep.subr.mxu0 0.0
    %2096 = vmatpush1.msra.mxu0 0.0
    %2097 = vmatprep.subr.mxu0 0.0
    %2098 = vmatpush1.msra.mxu0 0.0
    %2099 = vmatprep.subr.mxu0 0.0
    %2100 = vmatpush1.msra.mxu0 0.0
    %2101 = vmatprep.subr.mxu0 0.0
    %2102 = vmatpush1.msra.mxu0 0.0
    %2103 = vmatprep.subr.mxu0 0.0
    %2104 = vmatpush1.msra.mxu0 0.0
    %2105 = vmatprep.subr.mxu0 0.0
    %2106 = vmatpush1.msra.mxu0 0.0
    %2107 = vmatprep.subr.mxu0 0.0
    %2108 = vmatpush1.msra.mxu0 0.0
    %2109 = vmatprep.subr.mxu0 0.0
    %2110 = vmatpush1.msra.mxu0 0.0
    %2111 = vmatprep.subr.mxu0 0.0
    %2112 = vmatpush1.msra.mxu0 0.0
    %2113 = vmatprep.subr.mxu0 0.0
    %2114 = vmatpush1.msra.mxu0 0.0
    %2115 = vmatprep.subr.mxu0 0.0
    %2116 = vmatpush1.msra.mxu0 0.0
    %2117 = vmatprep.subr.mxu0 0.0
    %2118 = vmatpush1.msra.mxu0 0.0
    %2119 = vmatprep.subr.mxu0 0.0
    %2120 = vmatpush1.msra.mxu0 0.0
    %2121 = vmatprep.subr.mxu0 0.0
    %2122 = vmatpush1.msra.mxu0 0.0
    %2123 = vmatprep.subr.mxu0 0.0
    %2124 = vmatpush1.msra.mxu0 0.0
    %2125 = vmatprep.subr.mxu0 0.0
    %2126 = vmatpush1.msra.mxu0 0.0
    %2127 = vmatprep.subr.mxu0 0.0
    %2128 = vmatpush1.msra.mxu0 0.0
    %2129 = vmatprep.subr.mxu0 0.0
    %2130 = vmatpush1.msra.mxu0 0.0
    %2131 = vmatprep.subr.mxu0 0.0
    %2132 = vmatpush1.msra.mxu0 0.0
    %2133 = vmatprep.mubr.f32.mxu0 0.0
    %2134 = vmatmul.mubr.f32.gmra.mrb[0].mxu0 %v2067
    %v2135 = vpop.f32.mrb[0].mxu0
    %v2136 = vadd.f32 %v2063, %v2135
    %v2137 = vpop.f32.mrb[0].mxu0
    %2138 = vdwg.mxu0
    %v2139 = vadd.f32 %v2136, %v103
    %v2140 = vtanh.pop %v2139
    %s2141 = scalar_lea.vmem %s0, 12
    %v2142 = vld [vmem:[%s2141] sm:$0xf]
    %v2144 = vsel %vm190, %v1693, 0
    %2146 = vmatprep.subr.mxu0 0.0
    %2147 = vmatpush1.msra.mxu0 %v80
    %2148 = vmatprep.subr.mxu0 0.0
    %2149 = vmatpush1.msra.mxu0 %v81
    %2150 = vmatprep.subr.mxu0 0.0
    %2151 = vmatpush1.msra.mxu0 %v82
    %2152 = vmatprep.subr.mxu0 0.0
    %2153 = vmatpush1.msra.mxu0 %v83
    %2154 = vmatprep.subr.mxu0 0.0
    %2155 = vmatpush1.msra.mxu0 0.0
    %2156 = vmatprep.subr.mxu0 0.0
    %2157 = vmatpush1.msra.mxu0 0.0
    %2158 = vmatprep.subr.mxu0 0.0
    %2159 = vmatpush1.msra.mxu0 0.0
    %2160 = vmatprep.subr.mxu0 0.0
    %2161 = vmatpush1.msra.mxu0 0.0
    %2162 = vmatprep.subr.mxu0 0.0
    %2163 = vmatpush1.msra.mxu0 0.0
    %2164 = vmatprep.subr.mxu0 0.0
    %2165 = vmatpush1.msra.mxu0 0.0
    %2166 = vmatprep.subr.mxu0 0.0
    %2167 = vmatpush1.msra.mxu0 0.0
    %2168 = vmatprep.subr.mxu0 0.0
    %2169 = vmatpush1.msra.mxu0 0.0
    %2170 = vmatprep.subr.mxu0 0.0
    %2171 = vmatpush1.msra.mxu0 0.0
    %2172 = vmatprep.subr.mxu0 0.0
    %2173 = vmatpush1.msra.mxu0 0.0
    %2174 = vmatprep.subr.mxu0 0.0
    %2175 = vmatpush1.msra.mxu0 0.0
    %2176 = vmatprep.subr.mxu0 0.0
    %2177 = vmatpush1.msra.mxu0 0.0
    %2178 = vmatprep.subr.mxu0 0.0
    %2179 = vmatpush1.msra.mxu0 0.0
    %2180 = vmatprep.subr.mxu0 0.0
    %2181 = vmatpush1.msra.mxu0 0.0
    %2182 = vmatprep.subr.mxu0 0.0
    %2183 = vmatpush1.msra.mxu0 0.0
    %2184 = vmatprep.subr.mxu0 0.0
    %2185 = vmatpush1.msra.mxu0 0.0
    %2186 = vmatprep.subr.mxu0 0.0
    %2187 = vmatpush1.msra.mxu0 0.0
    %2188 = vmatprep.subr.mxu0 0.0
    %2189 = vmatpush1.msra.mxu0 0.0
    %2190 = vmatprep.subr.mxu0 0.0
    %2191 = vmatpush1.msra.mxu0 0.0
    %2192 = vmatprep.subr.mxu0 0.0
    %2193 = vmatpush1.msra.mxu0 0.0
    %2194 = vmatprep.subr.mxu0 0.0
    %2195 = vmatpush1.msra.mxu0 0.0
    %2196 = vmatprep.subr.mxu0 0.0
    %2197 = vmatpush1.msra.mxu0 0.0
    %2198 = vmatprep.subr.mxu0 0.0
    %2199 = vmatpush1.msra.mxu0 0.0
    %2200 = vmatprep.subr.mxu0 0.0
    %2201 = vmatpush1.msra.mxu0 0.0
    %2202 = vmatprep.subr.mxu0 0.0
    %2203 = vmatpush1.msra.mxu0 0.0
    %2204 = vmatprep.subr.mxu0 0.0
    %2205 = vmatpush1.msra.mxu0 0.0
    %2206 = vmatprep.subr.mxu0 0.0
    %2207 = vmatpush1.msra.mxu0 0.0
    %2208 = vmatprep.subr.mxu0 0.0
    %2209 = vmatpush1.msra.mxu0 0.0
    %2210 = vmatprep.mubr.f32.mxu0 0.0
    %2211 = vmatmul.mubr.f32.gmra.mrb[0].mxu0 %v2144
    %v2212 = vpop.f32.mrb[0].mxu0
    %v2213 = vadd.f32 0.0, %v2212
    %v2214 = vpop.f32.mrb[0].mxu0
    %2215 = vdwg.mxu0
    %v2216 = vadd.f32 %v2142, %v2213
    %v2217 = vtanh.pop %v2216
    %2218 = vmatprep.subr.mxu0 0.0
    %2219 = vmatpush1.msra.mxu0 %v60
    %2220 = vmatprep.subr.mxu0 0.0
    %2221 = vmatpush1.msra.mxu0 %v61
    %2222 = vmatprep.subr.mxu0 0.0
    %2223 = vmatpush1.msra.mxu0 %v62
    %2224 = vmatprep.subr.mxu0 0.0
    %2225 = vmatpush1.msra.mxu0 %v63
    %2226 = vmatprep.subr.mxu0 0.0
    %2227 = vmatpush1.msra.mxu0 0.0
    %2228 = vmatprep.subr.mxu0 0.0
    %2229 = vmatpush1.msra.mxu0 0.0
    %2230 = vmatprep.subr.mxu0 0.0
    %2231 = vmatpush1.msra.mxu0 0.0
    %2232 = vmatprep.subr.mxu0 0.0
    %2233 = vmatpush1.msra.mxu0 0.0
    %2234 = vmatprep.subr.mxu0 0.0
    %2235 = vmatpush1.msra.mxu0 0.0
    %2236 = vmatprep.subr.mxu0 0.0
    %2237 = vmatpush1.msra.mxu0 0.0
    %2238 = vmatprep.subr.mxu0 0.0
    %2239 = vmatpush1.msra.mxu0 0.0
    %2240 = vmatprep.subr.mxu0 0.0
    %2241 = vmatpush1.msra.mxu0 0.0
    %2242 = vmatprep.subr.mxu0 0.0
    %2243 = vmatpush1.msra.mxu0 0.0
    %2244 = vmatprep.subr.mxu0 0.0
    %2245 = vmatpush1.msra.mxu0 0.0
    %2246 = vmatprep.subr.mxu0 0.0
    %2247 = vmatpush1.msra.mxu0 0.0
    %2248 = vmatprep.subr.mxu0 0.0
    %2249 = vmatpush1.msra.mxu0 0.0
    %2250 = vmatprep.subr.mxu0 0.0
    %2251 = vmatpush1.msra.mxu0 0.0
    %2252 = vmatprep.subr.mxu0 0.0
    %2253 = vmatpush1.msra.mxu0 0.0
    %2254 = vmatprep.subr.mxu0 0.0
    %2255 = vmatpush1.msra.mxu0 0.0
    %2256 = vmatprep.subr.mxu0 0.0
    %2257 = vmatpush1.msra.mxu0 0.0
    %2258 = vmatprep.subr.mxu0 0.0
    %2259 = vmatpush1.msra.mxu0 0.0
    %2260 = vmatprep.subr.mxu0 0.0
    %2261 = vmatpush1.msra.mxu0 0.0
    %2262 = vmatprep.subr.mxu0 0.0
    %2263 = vmatpush1.msra.mxu0 0.0
    %2264 = vmatprep.subr.mxu0 0.0
    %2265 = vmatpush1.msra.mxu0 0.0
    %2266 = vmatprep.subr.mxu0 0.0
    %2267 = vmatpush1.msra.mxu0 0.0
    %2268 = vmatprep.subr.mxu0 0.0
    %2269 = vmatpush1.msra.mxu0 0.0
    %2270 = vmatprep.subr.mxu0 0.0
    %2271 = vmatpush1.msra.mxu0 0.0
    %2272 = vmatprep.subr.mxu0 0.0
    %2273 = vmatpush1.msra.mxu0 0.0
    %2274 = vmatprep.subr.mxu0 0.0
    %2275 = vmatpush1.msra.mxu0 0.0
    %2276 = vmatprep.subr.mxu0 0.0
    %2277 = vmatpush1.msra.mxu0 0.0
    %2278 = vmatprep.subr.mxu0 0.0
    %2279 = vmatpush1.msra.mxu0 0.0
    %2280 = vmatprep.subr.mxu0 0.0
    %2281 = vmatpush1.msra.mxu0 0.0
    %2282 = vmatprep.mubr.f32.mxu0 0.0
    %2283 = vmatmul.mubr.f32.gmra.mrb[0].mxu0 %v1837
    %v2284 = vpop.f32.mrb[0].mxu0
    %v2285 = vadd.f32 0.0, %v2284
    %v2286 = vpop.f32.mrb[0].mxu0
    %2287 = vdwg.mxu0
    %2288 = vmatprep.subr.mxu0 0.0
    %2289 = vmatpush1.msra.mxu0 %v56
    %2290 = vmatprep.subr.mxu0 0.0
    %2291 = vmatpush1.msra.mxu0 %v57
    %2292 = vmatprep.subr.mxu0 0.0
    %2293 = vmatpush1.msra.mxu0 %v58
    %2294 = vmatprep.subr.mxu0 0.0
    %2295 = vmatpush1.msra.mxu0 %v59
    %2296 = vmatprep.subr.mxu0 0.0
    %2297 = vmatpush1.msra.mxu0 0.0
    %2298 = vmatprep.subr.mxu0 0.0
    %2299 = vmatpush1.msra.mxu0 0.0
    %2300 = vmatprep.subr.mxu0 0.0
    %2301 = vmatpush1.msra.mxu0 0.0
    %2302 = vmatprep.subr.mxu0 0.0
    %2303 = vmatpush1.msra.mxu0 0.0
    %2304 = vmatprep.subr.mxu0 0.0
    %2305 = vmatpush1.msra.mxu0 0.0
    %2306 = vmatprep.subr.mxu0 0.0
    %2307 = vmatpush1.msra.mxu0 0.0
    %2308 = vmatprep.subr.mxu0 0.0
    %2309 = vmatpush1.msra.mxu0 0.0
    %2310 = vmatprep.subr.mxu0 0.0
    %2311 = vmatpush1.msra.mxu0 0.0
    %2312 = vmatprep.subr.mxu0 0.0
    %2313 = vmatpush1.msra.mxu0 0.0
    %2314 = vmatprep.subr.mxu0 0.0
    %2315 = vmatpush1.msra.mxu0 0.0
    %2316 = vmatprep.subr.mxu0 0.0
    %2317 = vmatpush1.msra.mxu0 0.0
    %2318 = vmatprep.subr.mxu0 0.0
    %2319 = vmatpush1.msra.mxu0 0.0
    %2320 = vmatprep.subr.mxu0 0.0
    %2321 = vmatpush1.msra.mxu0 0.0
    %2322 = vmatprep.subr.mxu0 0.0
    %2323 = vmatpush1.msra.mxu0 0.0
    %2324 = vmatprep.subr.mxu0 0.0
    %2325 = vmatpush1.msra.mxu0 0.0
    %2326 = vmatprep.subr.mxu0 0.0
    %2327 = vmatpush1.msra.mxu0 0.0
    %2328 = vmatprep.subr.mxu0 0.0
    %2329 = vmatpush1.msra.mxu0 0.0
    %2330 = vmatprep.subr.mxu0 0.0
    %2331 = vmatpush1.msra.mxu0 0.0
    %2332 = vmatprep.subr.mxu0 0.0
    %2333 = vmatpush1.msra.mxu0 0.0
    %2334 = vmatprep.subr.mxu0 0.0
    %2335 = vmatpush1.msra.mxu0 0.0
    %2336 = vmatprep.subr.mxu0 0.0
    %2337 = vmatpush1.msra.mxu0 0.0
    %2338 = vmatprep.subr.mxu0 0.0
    %2339 = vmatpush1.msra.mxu0 0.0
    %2340 = vmatprep.subr.mxu0 0.0
    %2341 = vmatpush1.msra.mxu0 0.0
    %2342 = vmatprep.subr.mxu0 0.0
    %2343 = vmatpush1.msra.mxu0 0.0
    %2344 = vmatprep.subr.mxu0 0.0
    %2345 = vmatpush1.msra.mxu0 0.0
    %2346 = vmatprep.subr.mxu0 0.0
    %2347 = vmatpush1.msra.mxu0 0.0
    %2348 = vmatprep.subr.mxu0 0.0
    %2349 = vmatpush1.msra.mxu0 0.0
    %2350 = vmatprep.subr.mxu0 0.0
    %2351 = vmatpush1.msra.mxu0 0.0
    %2352 = vmatprep.mubr.f32.mxu0 0.0
    %2353 = vmatmul.mubr.f32.gmra.mrb[0].mxu0 %v2067
    %v2354 = vpop.f32.mrb[0].mxu0
    %v2355 = vadd.f32 %v2285, %v2354
    %v2356 = vpop.f32.mrb[0].mxu0
    %2357 = vdwg.mxu0
    %v2358 = vadd.f32 %v2355, %v89
    %v2359 = vtanh.pop %v2358
    %v2361 = vsel %vm190, %v2359, 0
    %2363 = vmatprep.subr.mxu0 0.0
    %2364 = vmatpush1.msra.mxu0 %v64
    %2365 = vmatprep.subr.mxu0 0.0
    %2366 = vmatpush1.msra.mxu0 %v65
    %2367 = vmatprep.subr.mxu0 0.0
    %2368 = vmatpush1.msra.mxu0 %v66
    %2369 = vmatprep.subr.mxu0 0.0
    %2370 = vmatpush1.msra.mxu0 %v67
    %2371 = vmatprep.subr.mxu0 0.0
    %2372 = vmatpush1.msra.mxu0 0.0
    %2373 = vmatprep.subr.mxu0 0.0
    %2374 = vmatpush1.msra.mxu0 0.0
    %2375 = vmatprep.subr.mxu0 0.0
    %2376 = vmatpush1.msra.mxu0 0.0
    %2377 = vmatprep.subr.mxu0 0.0
    %2378 = vmatpush1.msra.mxu0 0.0
    %2379 = vmatprep.subr.mxu0 0.0
    %2380 = vmatpush1.msra.mxu0 0.0
    %2381 = vmatprep.subr.mxu0 0.0
    %2382 = vmatpush1.msra.mxu0 0.0
    %2383 = vmatprep.subr.mxu0 0.0
    %2384 = vmatpush1.msra.mxu0 0.0
    %2385 = vmatprep.subr.mxu0 0.0
    %2386 = vmatpush1.msra.mxu0 0.0
    %2387 = vmatprep.subr.mxu0 0.0
    %2388 = vmatpush1.msra.mxu0 0.0
    %2389 = vmatprep.subr.mxu0 0.0
    %2390 = vmatpush1.msra.mxu0 0.0
    %2391 = vmatprep.subr.mxu0 0.0
    %2392 = vmatpush1.msra.mxu0 0.0
    %2393 = vmatprep.subr.mxu0 0.0
    %2394 = vmatpush1.msra.mxu0 0.0
    %2395 = vmatprep.subr.mxu0 0.0
    %2396 = vmatpush1.msra.mxu0 0.0
    %2397 = vmatprep.subr.mxu0 0.0
    %2398 = vmatpush1.msra.mxu0 0.0
    %2399 = vmatprep.subr.mxu0 0.0
    %2400 = vmatpush1.msra.mxu0 0.0
    %2401 = vmatprep.subr.mxu0 0.0
    %2402 = vmatpush1.msra.mxu0 0.0
    %2403 = vmatprep.subr.mxu0 0.0
    %2404 = vmatpush1.msra.mxu0 0.0
    %2405 = vmatprep.subr.mxu0 0.0
    %2406 = vmatpush1.msra.mxu0 0.0
    %2407 = vmatprep.subr.mxu0 0.0
    %2408 = vmatpush1.msra.mxu0 0.0
    %2409 = vmatprep.subr.mxu0 0.0
    %2410 = vmatpush1.msra.mxu0 0.0
    %2411 = vmatprep.subr.mxu0 0.0
    %2412 = vmatpush1.msra.mxu0 0.0
    %2413 = vmatprep.subr.mxu0 0.0
    %2414 = vmatpush1.msra.mxu0 0.0
    %2415 = vmatprep.subr.mxu0 0.0
    %2416 = vmatpush1.msra.mxu0 0.0
    %2417 = vmatprep.subr.mxu0 0.0
    %2418 = vmatpush1.msra.mxu0 0.0
    %2419 = vmatprep.subr.mxu0 0.0
    %2420 = vmatpush1.msra.mxu0 0.0
    %2421 = vmatprep.subr.mxu0 0.0
    %2422 = vmatpush1.msra.mxu0 0.0
    %2423 = vmatprep.subr.mxu0 0.0
    %2424 = vmatpush1.msra.mxu0 0.0
    %2425 = vmatprep.subr.mxu0 0.0
    %2426 = vmatpush1.msra.mxu0 0.0
    %2427 = vmatprep.mubr.f32.mxu0 0.0
    %2428 = vmatmul.mubr.f32.gmra.mrb[0].mxu0 %v2361
    %v2429 = vpop.f32.mrb[0].mxu0
    %v2430 = vadd.f32 %v96, %v2429
    %v2431 = vpop.f32.mrb[0].mxu0
    %2432 = vdwg.mxu0
    %v2433 = vsel %vm412, %v2430, -inf
    %2434 = vmax.xlane.f32.xlu0 %v2433
    %v2435 = vpop.xlane.xlu0 %2434
    %v2436 = vsub.f32 %v2430, %v2435
    %v2437 = vmul.f32 %v2436, 1.442695
    %v2438 = vpow.pop %v2437
    %v2439 = vsel %vm412, %v2438, 0.0
    %2440 = vadd.xlane.f32.xlu0 %v2439
    %v2441 = vpop.xlane.xlu0 %2440
    %v2442 = vrcp.pop %v2441
    %v2443 = vmul.f32 %v2438, %v2442
    %v2445 = vsel %vm424, %v2443, 0
    %2447 = vmatprep.subr.mxu0 0.0
    %2448 = vmatpush1.msra.mxu0 %v68
    %2449 = vmatprep.subr.mxu0 0.0
    %2450 = vmatpush1.msra.mxu0 %v69
    %2451 = vmatprep.subr.mxu0 0.0
    %2452 = vmatpush1.msra.mxu0 %v70
    %2453 = vmatprep.subr.mxu0 0.0
    %2454 = vmatpush1.msra.mxu0 %v71
    %2455 = vmatprep.subr.mxu0 0.0
    %2456 = vmatpush1.msra.mxu0 %v72
    %2457 = vmatprep.subr.mxu0 0.0
    %2458 = vmatpush1.msra.mxu0 %v73
    %2459 = vmatprep.subr.mxu0 0.0
    %2460 = vmatpush1.msra.mxu0 %v74
    %2461 = vmatprep.subr.mxu0 0.0
    %2462 = vmatpush1.msra.mxu0 %v75
    %2463 = vmatprep.subr.mxu0 0.0
    %2464 = vmatpush1.msra.mxu0 0.0
    %2465 = vmatprep.subr.mxu0 0.0
    %2466 = vmatpush1.msra.mxu0 0.0
    %2467 = vmatprep.subr.mxu0 0.0
    %2468 = vmatpush1.msra.mxu0 0.0
    %2469 = vmatprep.subr.mxu0 0.0
    %2470 = vmatpush1.msra.mxu0 0.0
    %2471 = vmatprep.subr.mxu0 0.0
    %2472 = vmatpush1.msra.mxu0 0.0
    %2473 = vmatprep.subr.mxu0 0.0
    %2474 = vmatpush1.msra.mxu0 0.0
    %2475 = vmatprep.subr.mxu0 0.0
    %2476 = vmatpush1.msra.mxu0 0.0
    %2477 = vmatprep.subr.mxu0 0.0
    %2478 = vmatpush1.msra.mxu0 0.0
    %2479 = vmatprep.subr.mxu0 0.0
    %2480 = vmatpush1.msra.mxu0 0.0
    %2481 = vmatprep.subr.mxu0 0.0
    %2482 = vmatpush1.msra.mxu0 0.0
    %2483 = vmatprep.subr.mxu0 0.0
    %2484 = vmatpush1.msra.mxu0 0.0
    %2485 = vmatprep.subr.mxu0 0.0
    %2486 = vmatpush1.msra.mxu0 0.0
    %2487 = vmatprep.subr.mxu0 0.0
    %2488 = vmatpush1.msra.mxu0 0.0
    %2489 = vmatprep.subr.mxu0 0.0
    %2490 = vmatpush1.msra.mxu0 0.0
    %2491 = vmatprep.subr.mxu0 0.0
    %2492 = vmatpush1.msra.mxu0 0.0
    %2493 = vmatprep.subr.mxu0 0.0
    %2494 = vmatpush1.msra.mxu0 0.0
    %2495 = vmatprep.subr.mxu0 0.0
    %2496 = vmatpush1.msra.mxu0 0.0
    %2497 = vmatprep.subr.mxu0 0.0
    %2498 = vmatpush1.msra.mxu0 0.0
    %2499 = vmatprep.subr.mxu0 0.0
    %2500 = vmatpush1.msra.mxu0 0.0
    %2501 = vmatprep.subr.mxu0 0.0
    %2502 = vmatpush1.msra.mxu0 0.0
    %2503 = vmatprep.subr.mxu0 0.0
    %2504 = vmatpush1.msra.mxu0 0.0
    %2505 = vmatprep.subr.mxu0 0.0
    %2506 = vmatpush1.msra.mxu0 0.0
    %2507 = vmatprep.subr.mxu0 0.0
    %2508 = vmatpush1.msra.mxu0 0.0
    %2509 = vmatprep.subr.mxu0 0.0
    %2510 = vmatpush1.msra.mxu0 0.0
    %2511 = vmatprep.mubr.f32.mxu0 0.0
    %2512 = vmatmul.mubr.f32.gmra.mrb[0].mxu0 %v2445
    %v2513 = vpop.f32.mrb[0].mxu0
    %v2514 = vadd.f32 0.0, %v2513
    %v2515 = vpop.f32.mrb[0].mxu0
    %2516 = vdwg.mxu0
    %v2518 = vsel %vm190, %v2140, 0
    %2520 = vmatprep.subr.mxu0 0.0
    %2521 = vmatpush1.msra.mxu0 %v80
    %2522 = vmatprep.subr.mxu0 0.0
    %2523 = vmatpush1.msra.mxu0 %v81
    %2524 = vmatprep.subr.mxu0 0.0
    %2525 = vmatpush1.msra.mxu0 %v82
    %2526 = vmatprep.subr.mxu0 0.0
    %2527 = vmatpush1.msra.mxu0 %v83
    %2528 = vmatprep.subr.mxu0 0.0
    %2529 = vmatpush1.msra.mxu0 0.0
    %2530 = vmatprep.subr.mxu0 0.0
    %2531 = vmatpush1.msra.mxu0 0.0
    %2532 = vmatprep.subr.mxu0 0.0
    %2533 = vmatpush1.msra.mxu0 0.0
    %2534 = vmatprep.subr.mxu0 0.0
    %2535 = vmatpush1.msra.mxu0 0.0
    %2536 = vmatprep.subr.mxu0 0.0
    %2537 = vmatpush1.msra.mxu0 0.0
    %2538 = vmatprep.subr.mxu0 0.0
    %2539 = vmatpush1.msra.mxu0 0.0
    %2540 = vmatprep.subr.mxu0 0.0
    %2541 = vmatpush1.msra.mxu0 0.0
    %2542 = vmatprep.subr.mxu0 0.0
    %2543 = vmatpush1.msra.mxu0 0.0
    %2544 = vmatprep.subr.mxu0 0.0
    %2545 = vmatpush1.msra.mxu0 0.0
    %2546 = vmatprep.subr.mxu0 0.0
    %2547 = vmatpush1.msra.mxu0 0.0
    %2548 = vmatprep.subr.mxu0 0.0
    %2549 = vmatpush1.msra.mxu0 0.0
    %2550 = vmatprep.subr.mxu0 0.0
    %2551 = vmatpush1.msra.mxu0 0.0
    %2552 = vmatprep.subr.mxu0 0.0
    %2553 = vmatpush1.msra.mxu0 0.0
    %2554 = vmatprep.subr.mxu0 0.0
    %2555 = vmatpush1.msra.mxu0 0.0
    %2556 = vmatprep.subr.mxu0 0.0
    %2557 = vmatpush1.msra.mxu0 0.0
    %2558 = vmatprep.subr.mxu0 0.0
    %2559 = vmatpush1.msra.mxu0 0.0
    %2560 = vmatprep.subr.mxu0 0.0
    %2561 = vmatpush1.msra.mxu0 0.0
    %2562 = vmatprep.subr.mxu0 0.0
    %2563 = vmatpush1.msra.mxu0 0.0
    %2564 = vmatprep.subr.mxu0 0.0
    %2565 = vmatpush1.msra.mxu0 0.0
    %2566 = vmatprep.subr.mxu0 0.0
    %2567 = vmatpush1.msra.mxu0 0.0
    %2568 = vmatprep.subr.mxu0 0.0
    %2569 = vmatpush1.msra.mxu0 0.0
    %2570 = vmatprep.subr.mxu0 0.0
    %2571 = vmatpush1.msra.mxu0 0.0
    %2572 = vmatprep.subr.mxu0 0.0
    %2573 = vmatpush1.msra.mxu0 0.0
    %2574 = vmatprep.subr.mxu0 0.0
    %2575 = vmatpush1.msra.mxu0 0.0
    %2576 = vmatprep.subr.mxu0 0.0
    %2577 = vmatpush1.msra.mxu0 0.0
    %2578 = vmatprep.subr.mxu0 0.0
    %2579 = vmatpush1.msra.mxu0 0.0
    %2580 = vmatprep.subr.mxu0 0.0
    %2581 = vmatpush1.msra.mxu0 0.0
    %2582 = vmatprep.subr.mxu0 0.0
    %2583 = vmatpush1.msra.mxu0 0.0
    %2584 = vmatprep.mubr.f32.mxu0 0.0
    %2585 = vmatmul.mubr.f32.gmra.mrb[0].mxu0 %v2518
    %v2586 = vpop.f32.mrb[0].mxu0
    %v2587 = vadd.f32 0.0, %v2586
    %v2588 = vpop.f32.mrb[0].mxu0
    %2589 = vdwg.mxu0
    %v2591 = vsel %vm190, %v2514, 0
    %2593 = vmatprep.subr.mxu0 0.0
    %2594 = vmatpush1.msra.mxu0 %v76
    %2595 = vmatprep.subr.mxu0 0.0
    %2596 = vmatpush1.msra.mxu0 %v77
    %2597 = vmatprep.subr.mxu0 0.0
    %2598 = vmatpush1.msra.mxu0 %v78
    %2599 = vmatprep.subr.mxu0 0.0
    %2600 = vmatpush1.msra.mxu0 %v79
    %2601 = vmatprep.subr.mxu0 0.0
    %2602 = vmatpush1.msra.mxu0 0.0
    %2603 = vmatprep.subr.mxu0 0.0
    %2604 = vmatpush1.msra.mxu0 0.0
    %2605 = vmatprep.subr.mxu0 0.0
    %2606 = vmatpush1.msra.mxu0 0.0
    %2607 = vmatprep.subr.mxu0 0.0
    %2608 = vmatpush1.msra.mxu0 0.0
    %2609 = vmatprep.subr.mxu0 0.0
    %2610 = vmatpush1.msra.mxu0 0.0
    %2611 = vmatprep.subr.mxu0 0.0
    %2612 = vmatpush1.msra.mxu0 0.0
    %2613 = vmatprep.subr.mxu0 0.0
    %2614 = vmatpush1.msra.mxu0 0.0
    %2615 = vmatprep.subr.mxu0 0.0
    %2616 = vmatpush1.msra.mxu0 0.0
    %2617 = vmatprep.subr.mxu0 0.0
    %2618 = vmatpush1.msra.mxu0 0.0
    %2619 = vmatprep.subr.mxu0 0.0
    %2620 = vmatpush1.msra.mxu0 0.0
    %2621 = vmatprep.subr.mxu0 0.0
    %2622 = vmatpush1.msra.mxu0 0.0
    %2623 = vmatprep.subr.mxu0 0.0
    %2624 = vmatpush1.msra.mxu0 0.0
    %2625 = vmatprep.subr.mxu0 0.0
    %2626 = vmatpush1.msra.mxu0 0.0
    %2627 = vmatprep.subr.mxu0 0.0
    %2628 = vmatpush1.msra.mxu0 0.0
    %2629 = vmatprep.subr.mxu0 0.0
    %2630 = vmatpush1.msra.mxu0 0.0
    %2631 = vmatprep.subr.mxu0 0.0
    %2632 = vmatpush1.msra.mxu0 0.0
    %2633 = vmatprep.subr.mxu0 0.0
    %2634 = vmatpush1.msra.mxu0 0.0
    %2635 = vmatprep.subr.mxu0 0.0
    %2636 = vmatpush1.msra.mxu0 0.0
    %2637 = vmatprep.subr.mxu0 0.0
    %2638 = vmatpush1.msra.mxu0 0.0
    %2639 = vmatprep.subr.mxu0 0.0
    %2640 = vmatpush1.msra.mxu0 0.0
    %2641 = vmatprep.subr.mxu0 0.0
    %2642 = vmatpush1.msra.mxu0 0.0
    %2643 = vmatprep.subr.mxu0 0.0
    %2644 = vmatpush1.msra.mxu0 0.0
    %2645 = vmatprep.subr.mxu0 0.0
    %2646 = vmatpush1.msra.mxu0 0.0
    %2647 = vmatprep.subr.mxu0 0.0
    %2648 = vmatpush1.msra.mxu0 0.0
    %2649 = vmatprep.subr.mxu0 0.0
    %2650 = vmatpush1.msra.mxu0 0.0
    %2651 = vmatprep.subr.mxu0 0.0
    %2652 = vmatpush1.msra.mxu0 0.0
    %2653 = vmatprep.subr.mxu0 0.0
    %2654 = vmatpush1.msra.mxu0 0.0
    %2655 = vmatprep.subr.mxu0 0.0
    %2656 = vmatpush1.msra.mxu0 0.0
    %2657 = vmatprep.mubr.f32.mxu0 0.0
    %2658 = vmatmul.mubr.f32.gmra.mrb[0].mxu0 %v2591
    %v2659 = vpop.f32.mrb[0].mxu0
    %v2660 = vadd.f32 %v2587, %v2659
    %v2661 = vpop.f32.mrb[0].mxu0
    %2662 = vdwg.mxu0
    %v2663 = vadd.f32 %v2660, %v103
    %v2664 = vtanh.pop %v2663
    %s2665 = scalar_lea.vmem %s0, 16
    %v2666 = vld [vmem:[%s2665] sm:$0xf]
    %v2668 = vsel %vm190, %v2217, 0
    %2670 = vmatprep.subr.mxu0 0.0
    %2671 = vmatpush1.msra.mxu0 %v80
    %2672 = vmatprep.subr.mxu0 0.0
    %2673 = vmatpush1.msra.mxu0 %v81
    %2674 = vmatprep.subr.mxu0 0.0
    %2675 = vmatpush1.msra.mxu0 %v82
    %2676 = vmatprep.subr.mxu0 0.0
    %2677 = vmatpush1.msra.mxu0 %v83
    %2678 = vmatprep.subr.mxu0 0.0
    %2679 = vmatpush1.msra.mxu0 0.0
    %2680 = vmatprep.subr.mxu0 0.0
    %2681 = vmatpush1.msra.mxu0 0.0
    %2682 = vmatprep.subr.mxu0 0.0
    %2683 = vmatpush1.msra.mxu0 0.0
    %2684 = vmatprep.subr.mxu0 0.0
    %2685 = vmatpush1.msra.mxu0 0.0
    %2686 = vmatprep.subr.mxu0 0.0
    %2687 = vmatpush1.msra.mxu0 0.0
    %2688 = vmatprep.subr.mxu0 0.0
    %2689 = vmatpush1.msra.mxu0 0.0
    %2690 = vmatprep.subr.mxu0 0.0
    %2691 = vmatpush1.msra.mxu0 0.0
    %2692 = vmatprep.subr.mxu0 0.0
    %2693 = vmatpush1.msra.mxu0 0.0
    %2694 = vmatprep.subr.mxu0 0.0
    %2695 = vmatpush1.msra.mxu0 0.0
    %2696 = vmatprep.subr.mxu0 0.0
    %2697 = vmatpush1.msra.mxu0 0.0
    %2698 = vmatprep.subr.mxu0 0.0
    %2699 = vmatpush1.msra.mxu0 0.0
    %2700 = vmatprep.subr.mxu0 0.0
    %2701 = vmatpush1.msra.mxu0 0.0
    %2702 = vmatprep.subr.mxu0 0.0
    %2703 = vmatpush1.msra.mxu0 0.0
    %2704 = vmatprep.subr.mxu0 0.0
    %2705 = vmatpush1.msra.mxu0 0.0
    %2706 = vmatprep.subr.mxu0 0.0
    %2707 = vmatpush1.msra.mxu0 0.0
    %2708 = vmatprep.subr.mxu0 0.0
    %2709 = vmatpush1.msra.mxu0 0.0
    %2710 = vmatprep.subr.mxu0 0.0
    %2711 = vmatpush1.msra.mxu0 0.0
    %2712 = vmatprep.subr.mxu0 0.0
    %2713 = vmatpush1.msra.mxu0 0.0
    %2714 = vmatprep.subr.mxu0 0.0
    %2715 = vmatpush1.msra.mxu0 0.0
    %2716 = vmatprep.subr.mxu0 0.0
    %2717 = vmatpush1.msra.mxu0 0.0
    %2718 = vmatprep.subr.mxu0 0.0
    %2719 = vmatpush1.msra.mxu0 0.0
    %2720 = vmatprep.subr.mxu0 0.0
    %2721 = vmatpush1.msra.mxu0 0.0
    %2722 = vmatprep.subr.mxu0 0.0
    %2723 = vmatpush1.msra.mxu0 0.0
    %2724 = vmatprep.subr.mxu0 0.0
    %2725 = vmatpush1.msra.mxu0 0.0
    %2726 = vmatprep.subr.mxu0 0.0
    %2727 = vmatpush1.msra.mxu0 0.0
    %2728 = vmatprep.subr.mxu0 0.0
    %2729 = vmatpush1.msra.mxu0 0.0
    %2730 = vmatprep.subr.mxu0 0.0
    %2731 = vmatpush1.msra.mxu0 0.0
    %2732 = vmatprep.subr.mxu0 0.0
    %2733 = vmatpush1.msra.mxu0 0.0
    %2734 = vmatprep.mubr.f32.mxu0 0.0
    %2735 = vmatmul.mubr.f32.gmra.mrb[0].mxu0 %v2668
    %v2736 = vpop.f32.mrb[0].mxu0
    %v2737 = vadd.f32 0.0, %v2736
    %v2738 = vpop.f32.mrb[0].mxu0
    %2739 = vdwg.mxu0
    %v2740 = vadd.f32 %v2666, %v2737
    %v2741 = vtanh.pop %v2740
    %2742 = vmatprep.subr.mxu0 0.0
    %2743 = vmatpush1.msra.mxu0 %v60
    %2744 = vmatprep.subr.mxu0 0.0
    %2745 = vmatpush1.msra.mxu0 %v61
    %2746 = vmatprep.subr.mxu0 0.0
    %2747 = vmatpush1.msra.mxu0 %v62
    %2748 = vmatprep.subr.mxu0 0.0
    %2749 = vmatpush1.msra.mxu0 %v63
    %2750 = vmatprep.subr.mxu0 0.0
    %2751 = vmatpush1.msra.mxu0 0.0
    %2752 = vmatprep.subr.mxu0 0.0
    %2753 = vmatpush1.msra.mxu0 0.0
    %2754 = vmatprep.subr.mxu0 0.0
    %2755 = vmatpush1.msra.mxu0 0.0
    %2756 = vmatprep.subr.mxu0 0.0
    %2757 = vmatpush1.msra.mxu0 0.0
    %2758 = vmatprep.subr.mxu0 0.0
    %2759 = vmatpush1.msra.mxu0 0.0
    %2760 = vmatprep.subr.mxu0 0.0
    %2761 = vmatpush1.msra.mxu0 0.0
    %2762 = vmatprep.subr.mxu0 0.0
    %2763 = vmatpush1.msra.mxu0 0.0
    %2764 = vmatprep.subr.mxu0 0.0
    %2765 = vmatpush1.msra.mxu0 0.0
    %2766 = vmatprep.subr.mxu0 0.0
    %2767 = vmatpush1.msra.mxu0 0.0
    %2768 = vmatprep.subr.mxu0 0.0
    %2769 = vmatpush1.msra.mxu0 0.0
    %2770 = vmatprep.subr.mxu0 0.0
    %2771 = vmatpush1.msra.mxu0 0.0
    %2772 = vmatprep.subr.mxu0 0.0
    %2773 = vmatpush1.msra.mxu0 0.0
    %2774 = vmatprep.subr.mxu0 0.0
    %2775 = vmatpush1.msra.mxu0 0.0
    %2776 = vmatprep.subr.mxu0 0.0
    %2777 = vmatpush1.msra.mxu0 0.0
    %2778 = vmatprep.subr.mxu0 0.0
    %2779 = vmatpush1.msra.mxu0 0.0
    %2780 = vmatprep.subr.mxu0 0.0
    %2781 = vmatpush1.msra.mxu0 0.0
    %2782 = vmatprep.subr.mxu0 0.0
    %2783 = vmatpush1.msra.mxu0 0.0
    %2784 = vmatprep.subr.mxu0 0.0
    %2785 = vmatpush1.msra.mxu0 0.0
    %2786 = vmatprep.subr.mxu0 0.0
    %2787 = vmatpush1.msra.mxu0 0.0
    %2788 = vmatprep.subr.mxu0 0.0
    %2789 = vmatpush1.msra.mxu0 0.0
    %2790 = vmatprep.subr.mxu0 0.0
    %2791 = vmatpush1.msra.mxu0 0.0
    %2792 = vmatprep.subr.mxu0 0.0
    %2793 = vmatpush1.msra.mxu0 0.0
    %2794 = vmatprep.subr.mxu0 0.0
    %2795 = vmatpush1.msra.mxu0 0.0
    %2796 = vmatprep.subr.mxu0 0.0
    %2797 = vmatpush1.msra.mxu0 0.0
    %2798 = vmatprep.subr.mxu0 0.0
    %2799 = vmatpush1.msra.mxu0 0.0
    %2800 = vmatprep.subr.mxu0 0.0
    %2801 = vmatpush1.msra.mxu0 0.0
    %2802 = vmatprep.subr.mxu0 0.0
    %2803 = vmatpush1.msra.mxu0 0.0
    %2804 = vmatprep.subr.mxu0 0.0
    %2805 = vmatpush1.msra.mxu0 0.0
    %2806 = vmatprep.mubr.f32.mxu0 0.0
    %2807 = vmatmul.mubr.f32.gmra.mrb[0].mxu0 %v2361
    %v2808 = vpop.f32.mrb[0].mxu0
    %v2809 = vadd.f32 0.0, %v2808
    %v2810 = vpop.f32.mrb[0].mxu0
    %2811 = vdwg.mxu0
    %2812 = vmatprep.subr.mxu0 0.0
    %2813 = vmatpush1.msra.mxu0 %v56
    %2814 = vmatprep.subr.mxu0 0.0
    %2815 = vmatpush1.msra.mxu0 %v57
    %2816 = vmatprep.subr.mxu0 0.0
    %2817 = vmatpush1.msra.mxu0 %v58
    %2818 = vmatprep.subr.mxu0 0.0
    %2819 = vmatpush1.msra.mxu0 %v59
    %2820 = vmatprep.subr.mxu0 0.0
    %2821 = vmatpush1.msra.mxu0 0.0
    %2822 = vmatprep.subr.mxu0 0.0
    %2823 = vmatpush1.msra.mxu0 0.0
    %2824 = vmatprep.subr.mxu0 0.0
    %2825 = vmatpush1.msra.mxu0 0.0
    %2826 = vmatprep.subr.mxu0 0.0
    %2827 = vmatpush1.msra.mxu0 0.0
    %2828 = vmatprep.subr.mxu0 0.0
    %2829 = vmatpush1.msra.mxu0 0.0
    %2830 = vmatprep.subr.mxu0 0.0
    %2831 = vmatpush1.msra.mxu0 0.0
    %2832 = vmatprep.subr.mxu0 0.0
    %2833 = vmatpush1.msra.mxu0 0.0
    %2834 = vmatprep.subr.mxu0 0.0
    %2835 = vmatpush1.msra.mxu0 0.0
    %2836 = vmatprep.subr.mxu0 0.0
    %2837 = vmatpush1.msra.mxu0 0.0
    %2838 = vmatprep.subr.mxu0 0.0
    %2839 = vmatpush1.msra.mxu0 0.0
    %2840 = vmatprep.subr.mxu0 0.0
    %2841 = vmatpush1.msra.mxu0 0.0
    %2842 = vmatprep.subr.mxu0 0.0
    %2843 = vmatpush1.msra.mxu0 0.0
    %2844 = vmatprep.subr.mxu0 0.0
    %2845 = vmatpush1.msra.mxu0 0.0
    %2846 = vmatprep.subr.mxu0 0.0
    %2847 = vmatpush1.msra.mxu0 0.0
    %2848 = vmatprep.subr.mxu0 0.0
    %2849 = vmatpush1.msra.mxu0 0.0
    %2850 = vmatprep.subr.mxu0 0.0
    %2851 = vmatpush1.msra.mxu0 0.0
    %2852 = vmatprep.subr.mxu0 0.0
    %2853 = vmatpush1.msra.mxu0 0.0
    %2854 = vmatprep.subr.mxu0 0.0
    %2855 = vmatpush1.msra.mxu0 0.0
    %2856 = vmatprep.subr.mxu0 0.0
    %2857 = vmatpush1.msra.mxu0 0.0
    %2858 = vmatprep.subr.mxu0 0.0
    %2859 = vmatpush1.msra.mxu0 0.0
    %2860 = vmatprep.subr.mxu0 0.0
    %2861 = vmatpush1.msra.mxu0 0.0
    %2862 = vmatprep.subr.mxu0 0.0
    %2863 = vmatpush1.msra.mxu0 0.0
    %2864 = vmatprep.subr.mxu0 0.0
    %2865 = vmatpush1.msra.mxu0 0.0
    %2866 = vmatprep.subr.mxu0 0.0
    %2867 = vmatpush1.msra.mxu0 0.0
    %2868 = vmatprep.subr.mxu0 0.0
    %2869 = vmatpush1.msra.mxu0 0.0
    %2870 = vmatprep.subr.mxu0 0.0
    %2871 = vmatpush1.msra.mxu0 0.0
    %2872 = vmatprep.subr.mxu0 0.0
    %2873 = vmatpush1.msra.mxu0 0.0
    %2874 = vmatprep.subr.mxu0 0.0
    %2875 = vmatpush1.msra.mxu0 0.0
    %2876 = vmatprep.mubr.f32.mxu0 0.0
    %2877 = vmatmul.mubr.f32.gmra.mrb[0].mxu0 %v2591
    %v2878 = vpop.f32.mrb[0].mxu0
    %v2879 = vadd.f32 %v2809, %v2878
    %v2880 = vpop.f32.mrb[0].mxu0
    %2881 = vdwg.mxu0
    %v2882 = vadd.f32 %v2879, %v89
    %v2883 = vtanh.pop %v2882
    %v2885 = vsel %vm190, %v2883, 0
    %2887 = vmatprep.subr.mxu0 0.0
    %2888 = vmatpush1.msra.mxu0 %v64
    %2889 = vmatprep.subr.mxu0 0.0
    %2890 = vmatpush1.msra.mxu0 %v65
    %2891 = vmatprep.subr.mxu0 0.0
    %2892 = vmatpush1.msra.mxu0 %v66
    %2893 = vmatprep.subr.mxu0 0.0
    %2894 = vmatpush1.msra.mxu0 %v67
    %2895 = vmatprep.subr.mxu0 0.0
    %2896 = vmatpush1.msra.mxu0 0.0
    %2897 = vmatprep.subr.mxu0 0.0
    %2898 = vmatpush1.msra.mxu0 0.0
    %2899 = vmatprep.subr.mxu0 0.0
    %2900 = vmatpush1.msra.mxu0 0.0
    %2901 = vmatprep.subr.mxu0 0.0
    %2902 = vmatpush1.msra.mxu0 0.0
    %2903 = vmatprep.subr.mxu0 0.0
    %2904 = vmatpush1.msra.mxu0 0.0
    %2905 = vmatprep.subr.mxu0 0.0
    %2906 = vmatpush1.msra.mxu0 0.0
    %2907 = vmatprep.subr.mxu0 0.0
    %2908 = vmatpush1.msra.mxu0 0.0
    %2909 = vmatprep.subr.mxu0 0.0
    %2910 = vmatpush1.msra.mxu0 0.0
    %2911 = vmatprep.subr.mxu0 0.0
    %2912 = vmatpush1.msra.mxu0 0.0
    %2913 = vmatprep.subr.mxu0 0.0
    %2914 = vmatpush1.msra.mxu0 0.0
    %2915 = vmatprep.subr.mxu0 0.0
    %2916 = vmatpush1.msra.mxu0 0.0
    %2917 = vmatprep.subr.mxu0 0.0
    %2918 = vmatpush1.msra.mxu0 0.0
    %2919 = vmatprep.subr.mxu0 0.0
    %2920 = vmatpush1.msra.mxu0 0.0
    %2921 = vmatprep.subr.mxu0 0.0
    %2922 = vmatpush1.msra.mxu0 0.0
    %2923 = vmatprep.subr.mxu0 0.0
    %2924 = vmatpush1.msra.mxu0 0.0
    %2925 = vmatprep.subr.mxu0 0.0
    %2926 = vmatpush1.msra.mxu0 0.0
    %2927 = vmatprep.subr.mxu0 0.0
    %2928 = vmatpush1.msra.mxu0 0.0
    %2929 = vmatprep.subr.mxu0 0.0
    %2930 = vmatpush1.msra.mxu0 0.0
    %2931 = vmatprep.subr.mxu0 0.0
    %2932 = vmatpush1.msra.mxu0 0.0
    %2933 = vmatprep.subr.mxu0 0.0
    %2934 = vmatpush1.msra.mxu0 0.0
    %2935 = vmatprep.subr.mxu0 0.0
    %2936 = vmatpush1.msra.mxu0 0.0
    %2937 = vmatprep.subr.mxu0 0.0
    %2938 = vmatpush1.msra.mxu0 0.0
    %2939 = vmatprep.subr.mxu0 0.0
    %2940 = vmatpush1.msra.mxu0 0.0
    %2941 = vmatprep.subr.mxu0 0.0
    %2942 = vmatpush1.msra.mxu0 0.0
    %2943 = vmatprep.subr.mxu0 0.0
    %2944 = vmatpush1.msra.mxu0 0.0
    %2945 = vmatprep.subr.mxu0 0.0
    %2946 = vmatpush1.msra.mxu0 0.0
    %2947 = vmatprep.subr.mxu0 0.0
    %2948 = vmatpush1.msra.mxu0 0.0
    %2949 = vmatprep.subr.mxu0 0.0
    %2950 = vmatpush1.msra.mxu0 0.0
    %2951 = vmatprep.mubr.f32.mxu0 0.0
    %2952 = vmatmul.mubr.f32.gmra.mrb[0].mxu0 %v2885
    %v2953 = vpop.f32.mrb[0].mxu0
    %v2954 = vadd.f32 %v96, %v2953
    %v2955 = vpop.f32.mrb[0].mxu0
    %2956 = vdwg.mxu0
    %v2957 = vsel %vm412, %v2954, -inf
    %2958 = vmax.xlane.f32.xlu0 %v2957
    %v2959 = vpop.xlane.xlu0 %2958
    %v2960 = vsub.f32 %v2954, %v2959
    %v2961 = vmul.f32 %v2960, 1.442695
    %v2962 = vpow.pop %v2961
    %v2963 = vsel %vm412, %v2962, 0.0
    %2964 = vadd.xlane.f32.xlu0 %v2963
    %v2965 = vpop.xlane.xlu0 %2964
    %v2966 = vrcp.pop %v2965
    %v2967 = vmul.f32 %v2962, %v2966
    %v2969 = vsel %vm424, %v2967, 0
    %2971 = vmatprep.subr.mxu0 0.0
    %2972 = vmatpush1.msra.mxu0 %v68
    %2973 = vmatprep.subr.mxu0 0.0
    %2974 = vmatpush1.msra.mxu0 %v69
    %2975 = vmatprep.subr.mxu0 0.0
    %2976 = vmatpush1.msra.mxu0 %v70
    %2977 = vmatprep.subr.mxu0 0.0
    %2978 = vmatpush1.msra.mxu0 %v71
    %2979 = vmatprep.subr.mxu0 0.0
    %2980 = vmatpush1.msra.mxu0 %v72
    %2981 = vmatprep.subr.mxu0 0.0
    %2982 = vmatpush1.msra.mxu0 %v73
    %2983 = vmatprep.subr.mxu0 0.0
    %2984 = vmatpush1.msra.mxu0 %v74
    %2985 = vmatprep.subr.mxu0 0.0
    %2986 = vmatpush1.msra.mxu0 %v75
    %2987 = vmatprep.subr.mxu0 0.0
    %2988 = vmatpush1.msra.mxu0 0.0
    %2989 = vmatprep.subr.mxu0 0.0
    %2990 = vmatpush1.msra.mxu0 0.0
    %2991 = vmatprep.subr.mxu0 0.0
    %2992 = vmatpush1.msra.mxu0 0.0
    %2993 = vmatprep.subr.mxu0 0.0
    %2994 = vmatpush1.msra.mxu0 0.0
    %2995 = vmatprep.subr.mxu0 0.0
    %2996 = vmatpush1.msra.mxu0 0.0
    %2997 = vmatprep.subr.mxu0 0.0
    %2998 = vmatpush1.msra.mxu0 0.0
    %2999 = vmatprep.subr.mxu0 0.0
    %3000 = vmatpush1.msra.mxu0 0.0
    %3001 = vmatprep.subr.mxu0 0.0
    %3002 = vmatpush1.msra.mxu0 0.0
    %3003 = vmatprep.subr.mxu0 0.0
    %3004 = vmatpush1.msra.mxu0 0.0
    %3005 = vmatprep.subr.mxu0 0.0
    %3006 = vmatpush1.msra.mxu0 0.0
    %3007 = vmatprep.subr.mxu0 0.0
    %3008 = vmatpush1.msra.mxu0 0.0
    %3009 = vmatprep.subr.mxu0 0.0
    %3010 = vmatpush1.msra.mxu0 0.0
    %3011 = vmatprep.subr.mxu0 0.0
    %3012 = vmatpush1.msra.mxu0 0.0
    %3013 = vmatprep.subr.mxu0 0.0
    %3014 = vmatpush1.msra.mxu0 0.0
    %3015 = vmatprep.subr.mxu0 0.0
    %3016 = vmatpush1.msra.mxu0 0.0
    %3017 = vmatprep.subr.mxu0 0.0
    %3018 = vmatpush1.msra.mxu0 0.0
    %3019 = vmatprep.subr.mxu0 0.0
    %3020 = vmatpush1.msra.mxu0 0.0
    %3021 = vmatprep.subr.mxu0 0.0
    %3022 = vmatpush1.msra.mxu0 0.0
    %3023 = vmatprep.subr.mxu0 0.0
    %3024 = vmatpush1.msra.mxu0 0.0
    %3025 = vmatprep.subr.mxu0 0.0
    %3026 = vmatpush1.msra.mxu0 0.0
    %3027 = vmatprep.subr.mxu0 0.0
    %3028 = vmatpush1.msra.mxu0 0.0
    %3029 = vmatprep.subr.mxu0 0.0
    %3030 = vmatpush1.msra.mxu0 0.0
    %3031 = vmatprep.subr.mxu0 0.0
    %3032 = vmatpush1.msra.mxu0 0.0
    %3033 = vmatprep.subr.mxu0 0.0
    %3034 = vmatpush1.msra.mxu0 0.0
    %3035 = vmatprep.mubr.f32.mxu0 0.0
    %3036 = vmatmul.mubr.f32.gmra.mrb[0].mxu0 %v2969
    %v3037 = vpop.f32.mrb[0].mxu0
    %v3038 = vadd.f32 0.0, %v3037
    %v3039 = vpop.f32.mrb[0].mxu0
    %3040 = vdwg.mxu0
    %v3042 = vsel %vm190, %v2664, 0
    %3044 = vmatprep.subr.mxu0 0.0
    %3045 = vmatpush1.msra.mxu0 %v80
    %3046 = vmatprep.subr.mxu0 0.0
    %3047 = vmatpush1.msra.mxu0 %v81
    %3048 = vmatprep.subr.mxu0 0.0
    %3049 = vmatpush1.msra.mxu0 %v82
    %3050 = vmatprep.subr.mxu0 0.0
    %3051 = vmatpush1.msra.mxu0 %v83
    %3052 = vmatprep.subr.mxu0 0.0
    %3053 = vmatpush1.msra.mxu0 0.0
    %3054 = vmatprep.subr.mxu0 0.0
    %3055 = vmatpush1.msra.mxu0 0.0
    %3056 = vmatprep.subr.mxu0 0.0
    %3057 = vmatpush1.msra.mxu0 0.0
    %3058 = vmatprep.subr.mxu0 0.0
    %3059 = vmatpush1.msra.mxu0 0.0
    %3060 = vmatprep.subr.mxu0 0.0
    %3061 = vmatpush1.msra.mxu0 0.0
    %3062 = vmatprep.subr.mxu0 0.0
    %3063 = vmatpush1.msra.mxu0 0.0
    %3064 = vmatprep.subr.mxu0 0.0
    %3065 = vmatpush1.msra.mxu0 0.0
    %3066 = vmatprep.subr.mxu0 0.0
    %3067 = vmatpush1.msra.mxu0 0.0
    %3068 = vmatprep.subr.mxu0 0.0
    %3069 = vmatpush1.msra.mxu0 0.0
    %3070 = vmatprep.subr.mxu0 0.0
    %3071 = vmatpush1.msra.mxu0 0.0
    %3072 = vmatprep.subr.mxu0 0.0
    %3073 = vmatpush1.msra.mxu0 0.0
    %3074 = vmatprep.subr.mxu0 0.0
    %3075 = vmatpush1.msra.mxu0 0.0
    %3076 = vmatprep.subr.mxu0 0.0
    %3077 = vmatpush1.msra.mxu0 0.0
    %3078 = vmatprep.subr.mxu0 0.0
    %3079 = vmatpush1.msra.mxu0 0.0
    %3080 = vmatprep.subr.mxu0 0.0
    %3081 = vmatpush1.msra.mxu0 0.0
    %3082 = vmatprep.subr.mxu0 0.0
    %3083 = vmatpush1.msra.mxu0 0.0
    %3084 = vmatprep.subr.mxu0 0.0
    %3085 = vmatpush1.msra.mxu0 0.0
    %3086 = vmatprep.subr.mxu0 0.0
    %3087 = vmatpush1.msra.mxu0 0.0
    %3088 = vmatprep.subr.mxu0 0.0
    %3089 = vmatpush1.msra.mxu0 0.0
    %3090 = vmatprep.subr.mxu0 0.0
    %3091 = vmatpush1.msra.mxu0 0.0
    %3092 = vmatprep.subr.mxu0 0.0
    %3093 = vmatpush1.msra.mxu0 0.0
    %3094 = vmatprep.subr.mxu0 0.0
    %3095 = vmatpush1.msra.mxu0 0.0
    %3096 = vmatprep.subr.mxu0 0.0
    %3097 = vmatpush1.msra.mxu0 0.0
    %3098 = vmatprep.subr.mxu0 0.0
    %3099 = vmatpush1.msra.mxu0 0.0
    %3100 = vmatprep.subr.mxu0 0.0
    %3101 = vmatpush1.msra.mxu0 0.0
    %3102 = vmatprep.subr.mxu0 0.0
    %3103 = vmatpush1.msra.mxu0 0.0
    %3104 = vmatprep.subr.mxu0 0.0
    %3105 = vmatpush1.msra.mxu0 0.0
    %3106 = vmatprep.subr.mxu0 0.0
    %3107 = vmatpush1.msra.mxu0 0.0
    %3108 = vmatprep.mubr.f32.mxu0 0.0
    %3109 = vmatmul.mubr.f32.gmra.mrb[0].mxu0 %v3042
    %v3110 = vpop.f32.mrb[0].mxu0
    %v3111 = vadd.f32 0.0, %v3110
    %v3112 = vpop.f32.mrb[0].mxu0
    %3113 = vdwg.mxu0
    %v3115 = vsel %vm190, %v3038, 0
    %3117 = vmatprep.subr.mxu0 0.0
    %3118 = vmatpush1.msra.mxu0 %v76
    %3119 = vmatprep.subr.mxu0 0.0
    %3120 = vmatpush1.msra.mxu0 %v77
    %3121 = vmatprep.subr.mxu0 0.0
    %3122 = vmatpush1.msra.mxu0 %v78
    %3123 = vmatprep.subr.mxu0 0.0
    %3124 = vmatpush1.msra.mxu0 %v79
    %3125 = vmatprep.subr.mxu0 0.0
    %3126 = vmatpush1.msra.mxu0 0.0
    %3127 = vmatprep.subr.mxu0 0.0
    %3128 = vmatpush1.msra.mxu0 0.0
    %3129 = vmatprep.subr.mxu0 0.0
    %3130 = vmatpush1.msra.mxu0 0.0
    %3131 = vmatprep.subr.mxu0 0.0
    %3132 = vmatpush1.msra.mxu0 0.0
    %3133 = vmatprep.subr.mxu0 0.0
    %3134 = vmatpush1.msra.mxu0 0.0
    %3135 = vmatprep.subr.mxu0 0.0
    %3136 = vmatpush1.msra.mxu0 0.0
    %3137 = vmatprep.subr.mxu0 0.0
    %3138 = vmatpush1.msra.mxu0 0.0
    %3139 = vmatprep.subr.mxu0 0.0
    %3140 = vmatpush1.msra.mxu0 0.0
    %3141 = vmatprep.subr.mxu0 0.0
    %3142 = vmatpush1.msra.mxu0 0.0
    %3143 = vmatprep.subr.mxu0 0.0
    %3144 = vmatpush1.msra.mxu0 0.0
    %3145 = vmatprep.subr.mxu0 0.0
    %3146 = vmatpush1.msra.mxu0 0.0
    %3147 = vmatprep.subr.mxu0 0.0
    %3148 = vmatpush1.msra.mxu0 0.0
    %3149 = vmatprep.subr.mxu0 0.0
    %3150 = vmatpush1.msra.mxu0 0.0
    %3151 = vmatprep.subr.mxu0 0.0
    %3152 = vmatpush1.msra.mxu0 0.0
    %3153 = vmatprep.subr.mxu0 0.0
    %3154 = vmatpush1.msra.mxu0 0.0
    %3155 = vmatprep.subr.mxu0 0.0
    %3156 = vmatpush1.msra.mxu0 0.0
    %3157 = vmatprep.subr.mxu0 0.0
    %3158 = vmatpush1.msra.mxu0 0.0
    %3159 = vmatprep.subr.mxu0 0.0
    %3160 = vmatpush1.msra.mxu0 0.0
    %3161 = vmatprep.subr.mxu0 0.0
    %3162 = vmatpush1.msra.mxu0 0.0
    %3163 = vmatprep.subr.mxu0 0.0
    %3164 = vmatpush1.msra.mxu0 0.0
    %3165 = vmatprep.subr.mxu0 0.0
    %3166 = vmatpush1.msra.mxu0 0.0
    %3167 = vmatprep.subr.mxu0 0.0
    %3168 = vmatpush1.msra.mxu0 0.0
    %3169 = vmatprep.subr.mxu0 0.0
    %3170 = vmatpush1.msra.mxu0 0.0
    %3171 = vmatprep.subr.mxu0 0.0
    %3172 = vmatpush1.msra.mxu0 0.0
    %3173 = vmatprep.subr.mxu0 0.0
    %3174 = vmatpush1.msra.mxu0 0.0
    %3175 = vmatprep.subr.mxu0 0.0
    %3176 = vmatpush1.msra.mxu0 0.0
    %3177 = vmatprep.subr.mxu0 0.0
    %3178 = vmatpush1.msra.mxu0 0.0
    %3179 = vmatprep.subr.mxu0 0.0
    %3180 = vmatpush1.msra.mxu0 0.0
    %3181 = vmatprep.mubr.f32.mxu0 0.0
    %3182 = vmatmul.mubr.f32.gmra.mrb[0].mxu0 %v3115
    %v3183 = vpop.f32.mrb[0].mxu0
    %v3184 = vadd.f32 %v3111, %v3183
    %v3185 = vpop.f32.mrb[0].mxu0
    %3186 = vdwg.mxu0
    %v3187 = vadd.f32 %v3184, %v103
    %v3188 = vtanh.pop %v3187
    %s3189 = scalar_lea.vmem %s0, 20
    %v3190 = vld [vmem:[%s3189] sm:$0xf]
    %v3192 = vsel %vm190, %v2741, 0
    %3194 = vmatprep.subr.mxu0 0.0
    %3195 = vmatpush1.msra.mxu0 %v80
    %3196 = vmatprep.subr.mxu0 0.0
    %3197 = vmatpush1.msra.mxu0 %v81
    %3198 = vmatprep.subr.mxu0 0.0
    %3199 = vmatpush1.msra.mxu0 %v82
    %3200 = vmatprep.subr.mxu0 0.0
    %3201 = vmatpush1.msra.mxu0 %v83
    %3202 = vmatprep.subr.mxu0 0.0
    %3203 = vmatpush1.msra.mxu0 0.0
    %3204 = vmatprep.subr.mxu0 0.0
    %3205 = vmatpush1.msra.mxu0 0.0
    %3206 = vmatprep.subr.mxu0 0.0
    %3207 = vmatpush1.msra.mxu0 0.0
    %3208 = vmatprep.subr.mxu0 0.0
    %3209 = vmatpush1.msra.mxu0 0.0
    %3210 = vmatprep.subr.mxu0 0.0
    %3211 = vmatpush1.msra.mxu0 0.0
    %3212 = vmatprep.subr.mxu0 0.0
    %3213 = vmatpush1.msra.mxu0 0.0
    %3214 = vmatprep.subr.mxu0 0.0
    %3215 = vmatpush1.msra.mxu0 0.0
    %3216 = vmatprep.subr.mxu0 0.0
    %3217 = vmatpush1.msra.mxu0 0.0
    %3218 = vmatprep.subr.mxu0 0.0
    %3219 = vmatpush1.msra.mxu0 0.0
    %3220 = vmatprep.subr.mxu0 0.0
    %3221 = vmatpush1.msra.mxu0 0.0
    %3222 = vmatprep.subr.mxu0 0.0
    %3223 = vmatpush1.msra.mxu0 0.0
    %3224 = vmatprep.subr.mxu0 0.0
    %3225 = vmatpush1.msra.mxu0 0.0
    %3226 = vmatprep.subr.mxu0 0.0
    %3227 = vmatpush1.msra.mxu0 0.0
    %3228 = vmatprep.subr.mxu0 0.0
    %3229 = vmatpush1.msra.mxu0 0.0
    %3230 = vmatprep.subr.mxu0 0.0
    %3231 = vmatpush1.msra.mxu0 0.0
    %3232 = vmatprep.subr.mxu0 0.0
    %3233 = vmatpush1.msra.mxu0 0.0
    %3234 = vmatprep.subr.mxu0 0.0
    %3235 = vmatpush1.msra.mxu0 0.0
    %3236 = vmatprep.subr.mxu0 0.0
    %3237 = vmatpush1.msra.mxu0 0.0
    %3238 = vmatprep.subr.mxu0 0.0
    %3239 = vmatpush1.msra.mxu0 0.0
    %3240 = vmatprep.subr.mxu0 0.0
    %3241 = vmatpush1.msra.mxu0 0.0
    %3242 = vmatprep.subr.mxu0 0.0
    %3243 = vmatpush1.msra.mxu0 0.0
    %3244 = vmatprep.subr.mxu0 0.0
    %3245 = vmatpush1.msra.mxu0 0.0
    %3246 = vmatprep.subr.mxu0 0.0
    %3247 = vmatpush1.msra.mxu0 0.0
    %3248 = vmatprep.subr.mxu0 0.0
    %3249 = vmatpush1.msra.mxu0 0.0
    %3250 = vmatprep.subr.mxu0 0.0
    %3251 = vmatpush1.msra.mxu0 0.0
    %3252 = vmatprep.subr.mxu0 0.0
    %3253 = vmatpush1.msra.mxu0 0.0
    %3254 = vmatprep.subr.mxu0 0.0
    %3255 = vmatpush1.msra.mxu0 0.0
    %3256 = vmatprep.subr.mxu0 0.0
    %3257 = vmatpush1.msra.mxu0 0.0
    %3258 = vmatprep.mubr.f32.mxu0 0.0
    %3259 = vmatmul.mubr.f32.gmra.mrb[0].mxu0 %v3192
    %v3260 = vpop.f32.mrb[0].mxu0
    %v3261 = vadd.f32 0.0, %v3260
    %v3262 = vpop.f32.mrb[0].mxu0
    %3263 = vdwg.mxu0
    %v3264 = vadd.f32 %v3190, %v3261
    %v3265 = vtanh.pop %v3264
    %3266 = vmatprep.subr.mxu0 0.0
    %3267 = vmatpush1.msra.mxu0 %v60
    %3268 = vmatprep.subr.mxu0 0.0
    %3269 = vmatpush1.msra.mxu0 %v61
    %3270 = vmatprep.subr.mxu0 0.0
    %3271 = vmatpush1.msra.mxu0 %v62
    %3272 = vmatprep.subr.mxu0 0.0
    %3273 = vmatpush1.msra.mxu0 %v63
    %3274 = vmatprep.subr.mxu0 0.0
    %3275 = vmatpush1.msra.mxu0 0.0
    %3276 = vmatprep.subr.mxu0 0.0
    %3277 = vmatpush1.msra.mxu0 0.0
    %3278 = vmatprep.subr.mxu0 0.0
    %3279 = vmatpush1.msra.mxu0 0.0
    %3280 = vmatprep.subr.mxu0 0.0
    %3281 = vmatpush1.msra.mxu0 0.0
    %3282 = vmatprep.subr.mxu0 0.0
    %3283 = vmatpush1.msra.mxu0 0.0
    %3284 = vmatprep.subr.mxu0 0.0
    %3285 = vmatpush1.msra.mxu0 0.0
    %3286 = vmatprep.subr.mxu0 0.0
    %3287 = vmatpush1.msra.mxu0 0.0
    %3288 = vmatprep.subr.mxu0 0.0
    %3289 = vmatpush1.msra.mxu0 0.0
    %3290 = vmatprep.subr.mxu0 0.0
    %3291 = vmatpush1.msra.mxu0 0.0
    %3292 = vmatprep.subr.mxu0 0.0
    %3293 = vmatpush1.msra.mxu0 0.0
    %3294 = vmatprep.subr.mxu0 0.0
    %3295 = vmatpush1.msra.mxu0 0.0
    %3296 = vmatprep.subr.mxu0 0.0
    %3297 = vmatpush1.msra.mxu0 0.0
    %3298 = vmatprep.subr.mxu0 0.0
    %3299 = vmatpush1.msra.mxu0 0.0
    %3300 = vmatprep.subr.mxu0 0.0
    %3301 = vmatpush1.msra.mxu0 0.0
    %3302 = vmatprep.subr.mxu0 0.0
    %3303 = vmatpush1.msra.mxu0 0.0
    %3304 = vmatprep.subr.mxu0 0.0
    %3305 = vmatpush1.msra.mxu0 0.0
    %3306 = vmatprep.subr.mxu0 0.0
    %3307 = vmatpush1.msra.mxu0 0.0
    %3308 = vmatprep.subr.mxu0 0.0
    %3309 = vmatpush1.msra.mxu0 0.0
    %3310 = vmatprep.subr.mxu0 0.0
    %3311 = vmatpush1.msra.mxu0 0.0
    %3312 = vmatprep.subr.mxu0 0.0
    %3313 = vmatpush1.msra.mxu0 0.0
    %3314 = vmatprep.subr.mxu0 0.0
    %3315 = vmatpush1.msra.mxu0 0.0
    %3316 = vmatprep.subr.mxu0 0.0
    %3317 = vmatpush1.msra.mxu0 0.0
    %3318 = vmatprep.subr.mxu0 0.0
    %3319 = vmatpush1.msra.mxu0 0.0
    %3320 = vmatprep.subr.mxu0 0.0
    %3321 = vmatpush1.msra.mxu0 0.0
    %3322 = vmatprep.subr.mxu0 0.0
    %3323 = vmatpush1.msra.mxu0 0.0
    %3324 = vmatprep.subr.mxu0 0.0
    %3325 = vmatpush1.msra.mxu0 0.0
    %3326 = vmatprep.subr.mxu0 0.0
    %3327 = vmatpush1.msra.mxu0 0.0
    %3328 = vmatprep.subr.mxu0 0.0
    %3329 = vmatpush1.msra.mxu0 0.0
    %3330 = vmatprep.mubr.f32.mxu0 0.0
    %3331 = vmatmul.mubr.f32.gmra.mrb[0].mxu0 %v2885
    %v3332 = vpop.f32.mrb[0].mxu0
    %v3333 = vadd.f32 0.0, %v3332
    %v3334 = vpop.f32.mrb[0].mxu0
    %3335 = vdwg.mxu0
    %3336 = vmatprep.subr.mxu0 0.0
    %3337 = vmatpush1.msra.mxu0 %v56
    %3338 = vmatprep.subr.mxu0 0.0
    %3339 = vmatpush1.msra.mxu0 %v57
    %3340 = vmatprep.subr.mxu0 0.0
    %3341 = vmatpush1.msra.mxu0 %v58
    %3342 = vmatprep.subr.mxu0 0.0
    %3343 = vmatpush1.msra.mxu0 %v59
    %3344 = vmatprep.subr.mxu0 0.0
    %3345 = vmatpush1.msra.mxu0 0.0
    %3346 = vmatprep.subr.mxu0 0.0
    %3347 = vmatpush1.msra.mxu0 0.0
    %3348 = vmatprep.subr.mxu0 0.0
    %3349 = vmatpush1.msra.mxu0 0.0
    %3350 = vmatprep.subr.mxu0 0.0
    %3351 = vmatpush1.msra.mxu0 0.0
    %3352 = vmatprep.subr.mxu0 0.0
    %3353 = vmatpush1.msra.mxu0 0.0
    %3354 = vmatprep.subr.mxu0 0.0
    %3355 = vmatpush1.msra.mxu0 0.0
    %3356 = vmatprep.subr.mxu0 0.0
    %3357 = vmatpush1.msra.mxu0 0.0
    %3358 = vmatprep.subr.mxu0 0.0
    %3359 = vmatpush1.msra.mxu0 0.0
    %3360 = vmatprep.subr.mxu0 0.0
    %3361 = vmatpush1.msra.mxu0 0.0
    %3362 = vmatprep.subr.mxu0 0.0
    %3363 = vmatpush1.msra.mxu0 0.0
    %3364 = vmatprep.subr.mxu0 0.0
    %3365 = vmatpush1.msra.mxu0 0.0
    %3366 = vmatprep.subr.mxu0 0.0
    %3367 = vmatpush1.msra.mxu0 0.0
    %3368 = vmatprep.subr.mxu0 0.0
    %3369 = vmatpush1.msra.mxu0 0.0
    %3370 = vmatprep.subr.mxu0 0.0
    %3371 = vmatpush1.msra.mxu0 0.0
    %3372 = vmatprep.subr.mxu0 0.0
    %3373 = vmatpush1.msra.mxu0 0.0
    %3374 = vmatprep.subr.mxu0 0.0
    %3375 = vmatpush1.msra.mxu0 0.0
    %3376 = vmatprep.subr.mxu0 0.0
    %3377 = vmatpush1.msra.mxu0 0.0
    %3378 = vmatprep.subr.mxu0 0.0
    %3379 = vmatpush1.msra.mxu0 0.0
    %3380 = vmatprep.subr.mxu0 0.0
    %3381 = vmatpush1.msra.mxu0 0.0
    %3382 = vmatprep.subr.mxu0 0.0
    %3383 = vmatpush1.msra.mxu0 0.0
    %3384 = vmatprep.subr.mxu0 0.0
    %3385 = vmatpush1.msra.mxu0 0.0
    %3386 = vmatprep.subr.mxu0 0.0
    %3387 = vmatpush1.msra.mxu0 0.0
    %3388 = vmatprep.subr.mxu0 0.0
    %3389 = vmatpush1.msra.mxu0 0.0
    %3390 = vmatprep.subr.mxu0 0.0
    %3391 = vmatpush1.msra.mxu0 0.0
    %3392 = vmatprep.subr.mxu0 0.0
    %3393 = vmatpush1.msra.mxu0 0.0
    %3394 = vmatprep.subr.mxu0 0.0
    %3395 = vmatpush1.msra.mxu0 0.0
    %3396 = vmatprep.subr.mxu0 0.0
    %3397 = vmatpush1.msra.mxu0 0.0
    %3398 = vmatprep.subr.mxu0 0.0
    %3399 = vmatpush1.msra.mxu0 0.0
    %3400 = vmatprep.mubr.f32.mxu0 0.0
    %3401 = vmatmul.mubr.f32.gmra.mrb[0].mxu0 %v3115
    %v3402 = vpop.f32.mrb[0].mxu0
    %v3403 = vadd.f32 %v3333, %v3402
    %v3404 = vpop.f32.mrb[0].mxu0
    %3405 = vdwg.mxu0
    %v3406 = vadd.f32 %v3403, %v89
    %v3407 = vtanh.pop %v3406
    %v3409 = vsel %vm190, %v3407, 0
    %3411 = vmatprep.subr.mxu0 0.0
    %3412 = vmatpush1.msra.mxu0 %v64
    %3413 = vmatprep.subr.mxu0 0.0
    %3414 = vmatpush1.msra.mxu0 %v65
    %3415 = vmatprep.subr.mxu0 0.0
    %3416 = vmatpush1.msra.mxu0 %v66
    %3417 = vmatprep.subr.mxu0 0.0
    %3418 = vmatpush1.msra.mxu0 %v67
    %3419 = vmatprep.subr.mxu0 0.0
    %3420 = vmatpush1.msra.mxu0 0.0
    %3421 = vmatprep.subr.mxu0 0.0
    %3422 = vmatpush1.msra.mxu0 0.0
    %3423 = vmatprep.subr.mxu0 0.0
    %3424 = vmatpush1.msra.mxu0 0.0
    %3425 = vmatprep.subr.mxu0 0.0
    %3426 = vmatpush1.msra.mxu0 0.0
    %3427 = vmatprep.subr.mxu0 0.0
    %3428 = vmatpush1.msra.mxu0 0.0
    %3429 = vmatprep.subr.mxu0 0.0
    %3430 = vmatpush1.msra.mxu0 0.0
    %3431 = vmatprep.subr.mxu0 0.0
    %3432 = vmatpush1.msra.mxu0 0.0
    %3433 = vmatprep.subr.mxu0 0.0
    %3434 = vmatpush1.msra.mxu0 0.0
    %3435 = vmatprep.subr.mxu0 0.0
    %3436 = vmatpush1.msra.mxu0 0.0
    %3437 = vmatprep.subr.mxu0 0.0
    %3438 = vmatpush1.msra.mxu0 0.0
    %3439 = vmatprep.subr.mxu0 0.0
    %3440 = vmatpush1.msra.mxu0 0.0
    %3441 = vmatprep.subr.mxu0 0.0
    %3442 = vmatpush1.msra.mxu0 0.0
    %3443 = vmatprep.subr.mxu0 0.0
    %3444 = vmatpush1.msra.mxu0 0.0
    %3445 = vmatprep.subr.mxu0 0.0
    %3446 = vmatpush1.msra.mxu0 0.0
    %3447 = vmatprep.subr.mxu0 0.0
    %3448 = vmatpush1.msra.mxu0 0.0
    %3449 = vmatprep.subr.mxu0 0.0
    %3450 = vmatpush1.msra.mxu0 0.0
    %3451 = vmatprep.subr.mxu0 0.0
    %3452 = vmatpush1.msra.mxu0 0.0
    %3453 = vmatprep.subr.mxu0 0.0
    %3454 = vmatpush1.msra.mxu0 0.0
    %3455 = vmatprep.subr.mxu0 0.0
    %3456 = vmatpush1.msra.mxu0 0.0
    %3457 = vmatprep.subr.mxu0 0.0
    %3458 = vmatpush1.msra.mxu0 0.0
    %3459 = vmatprep.subr.mxu0 0.0
    %3460 = vmatpush1.msra.mxu0 0.0
    %3461 = vmatprep.subr.mxu0 0.0
    %3462 = vmatpush1.msra.mxu0 0.0
    %3463 = vmatprep.subr.mxu0 0.0
    %3464 = vmatpush1.msra.mxu0 0.0
    %3465 = vmatprep.subr.mxu0 0.0
    %3466 = vmatpush1.msra.mxu0 0.0
    %3467 = vmatprep.subr.mxu0 0.0
    %3468 = vmatpush1.msra.mxu0 0.0
    %3469 = vmatprep.subr.mxu0 0.0
    %3470 = vmatpush1.msra.mxu0 0.0
    %3471 = vmatprep.subr.mxu0 0.0
    %3472 = vmatpush1.msra.mxu0 0.0
    %3473 = vmatprep.subr.mxu0 0.0
    %3474 = vmatpush1.msra.mxu0 0.0
    %3475 = vmatprep.mubr.f32.mxu0 0.0
    %3476 = vmatmul.mubr.f32.gmra.mrb[0].mxu0 %v3409
    %v3477 = vpop.f32.mrb[0].mxu0
    %v3478 = vadd.f32 %v96, %v3477
    %v3479 = vpop.f32.mrb[0].mxu0
    %3480 = vdwg.mxu0
    %v3481 = vsel %vm412, %v3478, -inf
    %3482 = vmax.xlane.f32.xlu0 %v3481
    %v3483 = vpop.xlane.xlu0 %3482
    %v3484 = vsub.f32 %v3478, %v3483
    %v3485 = vmul.f32 %v3484, 1.442695
    %v3486 = vpow.pop %v3485
    %v3487 = vsel %vm412, %v3486, 0.0
    %3488 = vadd.xlane.f32.xlu0 %v3487
    %v3489 = vpop.xlane.xlu0 %3488
    %v3490 = vrcp.pop %v3489
    %v3491 = vmul.f32 %v3486, %v3490
    %v3493 = vsel %vm424, %v3491, 0
    %3495 = vmatprep.subr.mxu0 0.0
    %3496 = vmatpush1.msra.mxu0 %v68
    %3497 = vmatprep.subr.mxu0 0.0
    %3498 = vmatpush1.msra.mxu0 %v69
    %3499 = vmatprep.subr.mxu0 0.0
    %3500 = vmatpush1.msra.mxu0 %v70
    %3501 = vmatprep.subr.mxu0 0.0
    %3502 = vmatpush1.msra.mxu0 %v71
    %3503 = vmatprep.subr.mxu0 0.0
    %3504 = vmatpush1.msra.mxu0 %v72
    %3505 = vmatprep.subr.mxu0 0.0
    %3506 = vmatpush1.msra.mxu0 %v73
    %3507 = vmatprep.subr.mxu0 0.0
    %3508 = vmatpush1.msra.mxu0 %v74
    %3509 = vmatprep.subr.mxu0 0.0
    %3510 = vmatpush1.msra.mxu0 %v75
    %3511 = vmatprep.subr.mxu0 0.0
    %3512 = vmatpush1.msra.mxu0 0.0
    %3513 = vmatprep.subr.mxu0 0.0
    %3514 = vmatpush1.msra.mxu0 0.0
    %3515 = vmatprep.subr.mxu0 0.0
    %3516 = vmatpush1.msra.mxu0 0.0
    %3517 = vmatprep.subr.mxu0 0.0
    %3518 = vmatpush1.msra.mxu0 0.0
    %3519 = vmatprep.subr.mxu0 0.0
    %3520 = vmatpush1.msra.mxu0 0.0
    %3521 = vmatprep.subr.mxu0 0.0
    %3522 = vmatpush1.msra.mxu0 0.0
    %3523 = vmatprep.subr.mxu0 0.0
    %3524 = vmatpush1.msra.mxu0 0.0
    %3525 = vmatprep.subr.mxu0 0.0
    %3526 = vmatpush1.msra.mxu0 0.0
    %3527 = vmatprep.subr.mxu0 0.0
    %3528 = vmatpush1.msra.mxu0 0.0
    %3529 = vmatprep.subr.mxu0 0.0
    %3530 = vmatpush1.msra.mxu0 0.0
    %3531 = vmatprep.subr.mxu0 0.0
    %3532 = vmatpush1.msra.mxu0 0.0
    %3533 = vmatprep.subr.mxu0 0.0
    %3534 = vmatpush1.msra.mxu0 0.0
    %3535 = vmatprep.subr.mxu0 0.0
    %3536 = vmatpush1.msra.mxu0 0.0
    %3537 = vmatprep.subr.mxu0 0.0
    %3538 = vmatpush1.msra.mxu0 0.0
    %3539 = vmatprep.subr.mxu0 0.0
    %3540 = vmatpush1.msra.mxu0 0.0
    %3541 = vmatprep.subr.mxu0 0.0
    %3542 = vmatpush1.msra.mxu0 0.0
    %3543 = vmatprep.subr.mxu0 0.0
    %3544 = vmatpush1.msra.mxu0 0.0
    %3545 = vmatprep.subr.mxu0 0.0
    %3546 = vmatpush1.msra.mxu0 0.0
    %3547 = vmatprep.subr.mxu0 0.0
    %3548 = vmatpush1.msra.mxu0 0.0
    %3549 = vmatprep.subr.mxu0 0.0
    %3550 = vmatpush1.msra.mxu0 0.0
    %3551 = vmatprep.subr.mxu0 0.0
    %3552 = vmatpush1.msra.mxu0 0.0
    %3553 = vmatprep.subr.mxu0 0.0
    %3554 = vmatpush1.msra.mxu0 0.0
    %3555 = vmatprep.subr.mxu0 0.0
    %3556 = vmatpush1.msra.mxu0 0.0
    %3557 = vmatprep.subr.mxu0 0.0
    %3558 = vmatpush1.msra.mxu0 0.0
    %3559 = vmatprep.mubr.f32.mxu0 0.0
    %3560 = vmatmul.mubr.f32.gmra.mrb[0].mxu0 %v3493
    %v3561 = vpop.f32.mrb[0].mxu0
    %v3562 = vadd.f32 0.0, %v3561
    %v3563 = vpop.f32.mrb[0].mxu0
    %3564 = vdwg.mxu0
    %v3566 = vsel %vm190, %v3188, 0
    %3568 = vmatprep.subr.mxu0 0.0
    %3569 = vmatpush1.msra.mxu0 %v80
    %3570 = vmatprep.subr.mxu0 0.0
    %3571 = vmatpush1.msra.mxu0 %v81
    %3572 = vmatprep.subr.mxu0 0.0
    %3573 = vmatpush1.msra.mxu0 %v82
    %3574 = vmatprep.subr.mxu0 0.0
    %3575 = vmatpush1.msra.mxu0 %v83
    %3576 = vmatprep.subr.mxu0 0.0
    %3577 = vmatpush1.msra.mxu0 0.0
    %3578 = vmatprep.subr.mxu0 0.0
    %3579 = vmatpush1.msra.mxu0 0.0
    %3580 = vmatprep.subr.mxu0 0.0
    %3581 = vmatpush1.msra.mxu0 0.0
    %3582 = vmatprep.subr.mxu0 0.0
    %3583 = vmatpush1.msra.mxu0 0.0
    %3584 = vmatprep.subr.mxu0 0.0
    %3585 = vmatpush1.msra.mxu0 0.0
    %3586 = vmatprep.subr.mxu0 0.0
    %3587 = vmatpush1.msra.mxu0 0.0
    %3588 = vmatprep.subr.mxu0 0.0
    %3589 = vmatpush1.msra.mxu0 0.0
    %3590 = vmatprep.subr.mxu0 0.0
    %3591 = vmatpush1.msra.mxu0 0.0
    %3592 = vmatprep.subr.mxu0 0.0
    %3593 = vmatpush1.msra.mxu0 0.0
    %3594 = vmatprep.subr.mxu0 0.0
    %3595 = vmatpush1.msra.mxu0 0.0
    %3596 = vmatprep.subr.mxu0 0.0
    %3597 = vmatpush1.msra.mxu0 0.0
    %3598 = vmatprep.subr.mxu0 0.0
    %3599 = vmatpush1.msra.mxu0 0.0
    %3600 = vmatprep.subr.mxu0 0.0
    %3601 = vmatpush1.msra.mxu0 0.0
    %3602 = vmatprep.subr.mxu0 0.0
    %3603 = vmatpush1.msra.mxu0 0.0
    %3604 = vmatprep.subr.mxu0 0.0
    %3605 = vmatpush1.msra.mxu0 0.0
    %3606 = vmatprep.subr.mxu0 0.0
    %3607 = vmatpush1.msra.mxu0 0.0
    %3608 = vmatprep.subr.mxu0 0.0
    %3609 = vmatpush1.msra.mxu0 0.0
    %3610 = vmatprep.subr.mxu0 0.0
    %3611 = vmatpush1.msra.mxu0 0.0
    %3612 = vmatprep.subr.mxu0 0.0
    %3613 = vmatpush1.msra.mxu0 0.0
    %3614 = vmatprep.subr.mxu0 0.0
    %3615 = vmatpush1.msra.mxu0 0.0
    %3616 = vmatprep.subr.mxu0 0.0
    %3617 = vmatpush1.msra.mxu0 0.0
    %3618 = vmatprep.subr.mxu0 0.0
    %3619 = vmatpush1.msra.mxu0 0.0
    %3620 = vmatprep.subr.mxu0 0.0
    %3621 = vmatpush1.msra.mxu0 0.0
    %3622 = vmatprep.subr.mxu0 0.0
    %3623 = vmatpush1.msra.mxu0 0.0
    %3624 = vmatprep.subr.mxu0 0.0
    %3625 = vmatpush1.msra.mxu0 0.0
    %3626 = vmatprep.subr.mxu0 0.0
    %3627 = vmatpush1.msra.mxu0 0.0
    %3628 = vmatprep.subr.mxu0 0.0
    %3629 = vmatpush1.msra.mxu0 0.0
    %3630 = vmatprep.subr.mxu0 0.0
    %3631 = vmatpush1.msra.mxu0 0.0
    %3632 = vmatprep.mubr.f32.mxu0 0.0
    %3633 = vmatmul.mubr.f32.gmra.mrb[0].mxu0 %v3566
    %v3634 = vpop.f32.mrb[0].mxu0
    %v3635 = vadd.f32 0.0, %v3634
    %v3636 = vpop.f32.mrb[0].mxu0
    %3637 = vdwg.mxu0
    %v3639 = vsel %vm190, %v3562, 0
    %3641 = vmatprep.subr.mxu0 0.0
    %3642 = vmatpush1.msra.mxu0 %v76
    %3643 = vmatprep.subr.mxu0 0.0
    %3644 = vmatpush1.msra.mxu0 %v77
    %3645 = vmatprep.subr.mxu0 0.0
    %3646 = vmatpush1.msra.mxu0 %v78
    %3647 = vmatprep.subr.mxu0 0.0
    %3648 = vmatpush1.msra.mxu0 %v79
    %3649 = vmatprep.subr.mxu0 0.0
    %3650 = vmatpush1.msra.mxu0 0.0
    %3651 = vmatprep.subr.mxu0 0.0
    %3652 = vmatpush1.msra.mxu0 0.0
    %3653 = vmatprep.subr.mxu0 0.0
    %3654 = vmatpush1.msra.mxu0 0.0
    %3655 = vmatprep.subr.mxu0 0.0
    %3656 = vmatpush1.msra.mxu0 0.0
    %3657 = vmatprep.subr.mxu0 0.0
    %3658 = vmatpush1.msra.mxu0 0.0
    %3659 = vmatprep.subr.mxu0 0.0
    %3660 = vmatpush1.msra.mxu0 0.0
    %3661 = vmatprep.subr.mxu0 0.0
    %3662 = vmatpush1.msra.mxu0 0.0
    %3663 = vmatprep.subr.mxu0 0.0
    %3664 = vmatpush1.msra.mxu0 0.0
    %3665 = vmatprep.subr.mxu0 0.0
    %3666 = vmatpush1.msra.mxu0 0.0
    %3667 = vmatprep.subr.mxu0 0.0
    %3668 = vmatpush1.msra.mxu0 0.0
    %3669 = vmatprep.subr.mxu0 0.0
    %3670 = vmatpush1.msra.mxu0 0.0
    %3671 = vmatprep.subr.mxu0 0.0
    %3672 = vmatpush1.msra.mxu0 0.0
    %3673 = vmatprep.subr.mxu0 0.0
    %3674 = vmatpush1.msra.mxu0 0.0
    %3675 = vmatprep.subr.mxu0 0.0
    %3676 = vmatpush1.msra.mxu0 0.0
    %3677 = vmatprep.subr.mxu0 0.0
    %3678 = vmatpush1.msra.mxu0 0.0
    %3679 = vmatprep.subr.mxu0 0.0
    %3680 = vmatpush1.msra.mxu0 0.0
    %3681 = vmatprep.subr.mxu0 0.0
    %3682 = vmatpush1.msra.mxu0 0.0
    %3683 = vmatprep.subr.mxu0 0.0
    %3684 = vmatpush1.msra.mxu0 0.0
    %3685 = vmatprep.subr.mxu0 0.0
    %3686 = vmatpush1.msra.mxu0 0.0
    %3687 = vmatprep.subr.mxu0 0.0
    %3688 = vmatpush1.msra.mxu0 0.0
    %3689 = vmatprep.subr.mxu0 0.0
    %3690 = vmatpush1.msra.mxu0 0.0
    %3691 = vmatprep.subr.mxu0 0.0
    %3692 = vmatpush1.msra.mxu0 0.0
    %3693 = vmatprep.subr.mxu0 0.0
    %3694 = vmatpush1.msra.mxu0 0.0
    %3695 = vmatprep.subr.mxu0 0.0
    %3696 = vmatpush1.msra.mxu0 0.0
    %3697 = vmatprep.subr.mxu0 0.0
    %3698 = vmatpush1.msra.mxu0 0.0
    %3699 = vmatprep.subr.mxu0 0.0
    %3700 = vmatpush1.msra.mxu0 0.0
    %3701 = vmatprep.subr.mxu0 0.0
    %3702 = vmatpush1.msra.mxu0 0.0
    %3703 = vmatprep.subr.mxu0 0.0
    %3704 = vmatpush1.msra.mxu0 0.0
    %3705 = vmatprep.mubr.f32.mxu0 0.0
    %3706 = vmatmul.mubr.f32.gmra.mrb[0].mxu0 %v3639
    %v3707 = vpop.f32.mrb[0].mxu0
    %v3708 = vadd.f32 %v3635, %v3707
    %v3709 = vpop.f32.mrb[0].mxu0
    %3710 = vdwg.mxu0
    %v3711 = vadd.f32 %v3708, %v103
    %v3712 = vtanh.pop %v3711
    %s3713 = scalar_lea.vmem %s0, 24
    %v3714 = vld [vmem:[%s3713] sm:$0xf]
    %v3716 = vsel %vm190, %v3265, 0
    %3718 = vmatprep.subr.mxu0 0.0
    %3719 = vmatpush1.msra.mxu0 %v80
    %3720 = vmatprep.subr.mxu0 0.0
    %3721 = vmatpush1.msra.mxu0 %v81
    %3722 = vmatprep.subr.mxu0 0.0
    %3723 = vmatpush1.msra.mxu0 %v82
    %3724 = vmatprep.subr.mxu0 0.0
    %3725 = vmatpush1.msra.mxu0 %v83
    %3726 = vmatprep.subr.mxu0 0.0
    %3727 = vmatpush1.msra.mxu0 0.0
    %3728 = vmatprep.subr.mxu0 0.0
    %3729 = vmatpush1.msra.mxu0 0.0
    %3730 = vmatprep.subr.mxu0 0.0
    %3731 = vmatpush1.msra.mxu0 0.0
    %3732 = vmatprep.subr.mxu0 0.0
    %3733 = vmatpush1.msra.mxu0 0.0
    %3734 = vmatprep.subr.mxu0 0.0
    %3735 = vmatpush1.msra.mxu0 0.0
    %3736 = vmatprep.subr.mxu0 0.0
    %3737 = vmatpush1.msra.mxu0 0.0
    %3738 = vmatprep.subr.mxu0 0.0
    %3739 = vmatpush1.msra.mxu0 0.0
    %3740 = vmatprep.subr.mxu0 0.0
    %3741 = vmatpush1.msra.mxu0 0.0
    %3742 = vmatprep.subr.mxu0 0.0
    %3743 = vmatpush1.msra.mxu0 0.0
    %3744 = vmatprep.subr.mxu0 0.0
    %3745 = vmatpush1.msra.mxu0 0.0
    %3746 = vmatprep.subr.mxu0 0.0
    %3747 = vmatpush1.msra.mxu0 0.0
    %3748 = vmatprep.subr.mxu0 0.0
    %3749 = vmatpush1.msra.mxu0 0.0
    %3750 = vmatprep.subr.mxu0 0.0
    %3751 = vmatpush1.msra.mxu0 0.0
    %3752 = vmatprep.subr.mxu0 0.0
    %3753 = vmatpush1.msra.mxu0 0.0
    %3754 = vmatprep.subr.mxu0 0.0
    %3755 = vmatpush1.msra.mxu0 0.0
    %3756 = vmatprep.subr.mxu0 0.0
    %3757 = vmatpush1.msra.mxu0 0.0
    %3758 = vmatprep.subr.mxu0 0.0
    %3759 = vmatpush1.msra.mxu0 0.0
    %3760 = vmatprep.subr.mxu0 0.0
    %3761 = vmatpush1.msra.mxu0 0.0
    %3762 = vmatprep.subr.mxu0 0.0
    %3763 = vmatpush1.msra.mxu0 0.0
    %3764 = vmatprep.subr.mxu0 0.0
    %3765 = vmatpush1.msra.mxu0 0.0
    %3766 = vmatprep.subr.mxu0 0.0
    %3767 = vmatpush1.msra.mxu0 0.0
    %3768 = vmatprep.subr.mxu0 0.0
    %3769 = vmatpush1.msra.mxu0 0.0
    %3770 = vmatprep.subr.mxu0 0.0
    %3771 = vmatpush1.msra.mxu0 0.0
    %3772 = vmatprep.subr.mxu0 0.0
    %3773 = vmatpush1.msra.mxu0 0.0
    %3774 = vmatprep.subr.mxu0 0.0
    %3775 = vmatpush1.msra.mxu0 0.0
    %3776 = vmatprep.subr.mxu0 0.0
    %3777 = vmatpush1.msra.mxu0 0.0
    %3778 = vmatprep.subr.mxu0 0.0
    %3779 = vmatpush1.msra.mxu0 0.0
    %3780 = vmatprep.subr.mxu0 0.0
    %3781 = vmatpush1.msra.mxu0 0.0
    %3782 = vmatprep.mubr.f32.mxu0 0.0
    %3783 = vmatmul.mubr.f32.gmra.mrb[0].mxu0 %v3716
    %v3784 = vpop.f32.mrb[0].mxu0
    %v3785 = vadd.f32 0.0, %v3784
    %v3786 = vpop.f32.mrb[0].mxu0
    %3787 = vdwg.mxu0
    %v3788 = vadd.f32 %v3714, %v3785
    %v3789 = vtanh.pop %v3788
    %3790 = vmatprep.subr.mxu0 0.0
    %3791 = vmatpush1.msra.mxu0 %v60
    %3792 = vmatprep.subr.mxu0 0.0
    %3793 = vmatpush1.msra.mxu0 %v61
    %3794 = vmatprep.subr.mxu0 0.0
    %3795 = vmatpush1.msra.mxu0 %v62
    %3796 = vmatprep.subr.mxu0 0.0
    %3797 = vmatpush1.msra.mxu0 %v63
    %3798 = vmatprep.subr.mxu0 0.0
    %3799 = vmatpush1.msra.mxu0 0.0
    %3800 = vmatprep.subr.mxu0 0.0
    %3801 = vmatpush1.msra.mxu0 0.0
    %3802 = vmatprep.subr.mxu0 0.0
    %3803 = vmatpush1.msra.mxu0 0.0
    %3804 = vmatprep.subr.mxu0 0.0
    %3805 = vmatpush1.msra.mxu0 0.0
    %3806 = vmatprep.subr.mxu0 0.0
    %3807 = vmatpush1.msra.mxu0 0.0
    %3808 = vmatprep.subr.mxu0 0.0
    %3809 = vmatpush1.msra.mxu0 0.0
    %3810 = vmatprep.subr.mxu0 0.0
    %3811 = vmatpush1.msra.mxu0 0.0
    %3812 = vmatprep.subr.mxu0 0.0
    %3813 = vmatpush1.msra.mxu0 0.0
    %3814 = vmatprep.subr.mxu0 0.0
    %3815 = vmatpush1.msra.mxu0 0.0
    %3816 = vmatprep.subr.mxu0 0.0
    %3817 = vmatpush1.msra.mxu0 0.0
    %3818 = vmatprep.subr.mxu0 0.0
    %3819 = vmatpush1.msra.mxu0 0.0
    %3820 = vmatprep.subr.mxu0 0.0
    %3821 = vmatpush1.msra.mxu0 0.0
    %3822 = vmatprep.subr.mxu0 0.0
    %3823 = vmatpush1.msra.mxu0 0.0
    %3824 = vmatprep.subr.mxu0 0.0
    %3825 = vmatpush1.msra.mxu0 0.0
    %3826 = vmatprep.subr.mxu0 0.0
    %3827 = vmatpush1.msra.mxu0 0.0
    %3828 = vmatprep.subr.mxu0 0.0
    %3829 = vmatpush1.msra.mxu0 0.0
    %3830 = vmatprep.subr.mxu0 0.0
    %3831 = vmatpush1.msra.mxu0 0.0
    %3832 = vmatprep.subr.mxu0 0.0
    %3833 = vmatpush1.msra.mxu0 0.0
    %3834 = vmatprep.subr.mxu0 0.0
    %3835 = vmatpush1.msra.mxu0 0.0
    %3836 = vmatprep.subr.mxu0 0.0
    %3837 = vmatpush1.msra.mxu0 0.0
    %3838 = vmatprep.subr.mxu0 0.0
    %3839 = vmatpush1.msra.mxu0 0.0
    %3840 = vmatprep.subr.mxu0 0.0
    %3841 = vmatpush1.msra.mxu0 0.0
    %3842 = vmatprep.subr.mxu0 0.0
    %3843 = vmatpush1.msra.mxu0 0.0
    %3844 = vmatprep.subr.mxu0 0.0
    %3845 = vmatpush1.msra.mxu0 0.0
    %3846 = vmatprep.subr.mxu0 0.0
    %3847 = vmatpush1.msra.mxu0 0.0
    %3848 = vmatprep.subr.mxu0 0.0
    %3849 = vmatpush1.msra.mxu0 0.0
    %3850 = vmatprep.subr.mxu0 0.0
    %3851 = vmatpush1.msra.mxu0 0.0
    %3852 = vmatprep.subr.mxu0 0.0
    %3853 = vmatpush1.msra.mxu0 0.0
    %3854 = vmatprep.mubr.f32.mxu0 0.0
    %3855 = vmatmul.mubr.f32.gmra.mrb[0].mxu0 %v3409
    %v3856 = vpop.f32.mrb[0].mxu0
    %v3857 = vadd.f32 0.0, %v3856
    %v3858 = vpop.f32.mrb[0].mxu0
    %3859 = vdwg.mxu0
    %3860 = vmatprep.subr.mxu0 0.0
    %3861 = vmatpush1.msra.mxu0 %v56
    %3862 = vmatprep.subr.mxu0 0.0
    %3863 = vmatpush1.msra.mxu0 %v57
    %3864 = vmatprep.subr.mxu0 0.0
    %3865 = vmatpush1.msra.mxu0 %v58
    %3866 = vmatprep.subr.mxu0 0.0
    %3867 = vmatpush1.msra.mxu0 %v59
    %3868 = vmatprep.subr.mxu0 0.0
    %3869 = vmatpush1.msra.mxu0 0.0
    %3870 = vmatprep.subr.mxu0 0.0
    %3871 = vmatpush1.msra.mxu0 0.0
    %3872 = vmatprep.subr.mxu0 0.0
    %3873 = vmatpush1.msra.mxu0 0.0
    %3874 = vmatprep.subr.mxu0 0.0
    %3875 = vmatpush1.msra.mxu0 0.0
    %3876 = vmatprep.subr.mxu0 0.0
    %3877 = vmatpush1.msra.mxu0 0.0
    %3878 = vmatprep.subr.mxu0 0.0
    %3879 = vmatpush1.msra.mxu0 0.0
    %3880 = vmatprep.subr.mxu0 0.0
    %3881 = vmatpush1.msra.mxu0 0.0
    %3882 = vmatprep.subr.mxu0 0.0
    %3883 = vmatpush1.msra.mxu0 0.0
    %3884 = vmatprep.subr.mxu0 0.0
    %3885 = vmatpush1.msra.mxu0 0.0
    %3886 = vmatprep.subr.mxu0 0.0
    %3887 = vmatpush1.msra.mxu0 0.0
    %3888 = vmatprep.subr.mxu0 0.0
    %3889 = vmatpush1.msra.mxu0 0.0
    %3890 = vmatprep.subr.mxu0 0.0
    %3891 = vmatpush1.msra.mxu0 0.0
    %3892 = vmatprep.subr.mxu0 0.0
    %3893 = vmatpush1.msra.mxu0 0.0
    %3894 = vmatprep.subr.mxu0 0.0
    %3895 = vmatpush1.msra.mxu0 0.0
    %3896 = vmatprep.subr.mxu0 0.0
    %3897 = vmatpush1.msra.mxu0 0.0
    %3898 = vmatprep.subr.mxu0 0.0
    %3899 = vmatpush1.msra.mxu0 0.0
    %3900 = vmatprep.subr.mxu0 0.0
    %3901 = vmatpush1.msra.mxu0 0.0
    %3902 = vmatprep.subr.mxu0 0.0
    %3903 = vmatpush1.msra.mxu0 0.0
    %3904 = vmatprep.subr.mxu0 0.0
    %3905 = vmatpush1.msra.mxu0 0.0
    %3906 = vmatprep.subr.mxu0 0.0
    %3907 = vmatpush1.msra.mxu0 0.0
    %3908 = vmatprep.subr.mxu0 0.0
    %3909 = vmatpush1.msra.mxu0 0.0
    %3910 = vmatprep.subr.mxu0 0.0
    %3911 = vmatpush1.msra.mxu0 0.0
    %3912 = vmatprep.subr.mxu0 0.0
    %3913 = vmatpush1.msra.mxu0 0.0
    %3914 = vmatprep.subr.mxu0 0.0
    %3915 = vmatpush1.msra.mxu0 0.0
    %3916 = vmatprep.subr.mxu0 0.0
    %3917 = vmatpush1.msra.mxu0 0.0
    %3918 = vmatprep.subr.mxu0 0.0
    %3919 = vmatpush1.msra.mxu0 0.0
    %3920 = vmatprep.subr.mxu0 0.0
    %3921 = vmatpush1.msra.mxu0 0.0
    %3922 = vmatprep.subr.mxu0 0.0
    %3923 = vmatpush1.msra.mxu0 0.0
    %3924 = vmatprep.mubr.f32.mxu0 0.0
    %3925 = vmatmul.mubr.f32.gmra.mrb[0].mxu0 %v3639
    %v3926 = vpop.f32.mrb[0].mxu0
    %v3927 = vadd.f32 %v3857, %v3926
    %v3928 = vpop.f32.mrb[0].mxu0
    %3929 = vdwg.mxu0
    %v3930 = vadd.f32 %v3927, %v89
    %v3931 = vtanh.pop %v3930
    %v3933 = vsel %vm190, %v3931, 0
    %3935 = vmatprep.subr.mxu0 0.0
    %3936 = vmatpush1.msra.mxu0 %v64
    %3937 = vmatprep.subr.mxu0 0.0
    %3938 = vmatpush1.msra.mxu0 %v65
    %3939 = vmatprep.subr.mxu0 0.0
    %3940 = vmatpush1.msra.mxu0 %v66
    %3941 = vmatprep.subr.mxu0 0.0
    %3942 = vmatpush1.msra.mxu0 %v67
    %3943 = vmatprep.subr.mxu0 0.0
    %3944 = vmatpush1.msra.mxu0 0.0
    %3945 = vmatprep.subr.mxu0 0.0
    %3946 = vmatpush1.msra.mxu0 0.0
    %3947 = vmatprep.subr.mxu0 0.0
    %3948 = vmatpush1.msra.mxu0 0.0
    %3949 = vmatprep.subr.mxu0 0.0
    %3950 = vmatpush1.msra.mxu0 0.0
    %3951 = vmatprep.subr.mxu0 0.0
    %3952 = vmatpush1.msra.mxu0 0.0
    %3953 = vmatprep.subr.mxu0 0.0
    %3954 = vmatpush1.msra.mxu0 0.0
    %3955 = vmatprep.subr.mxu0 0.0
    %3956 = vmatpush1.msra.mxu0 0.0
    %3957 = vmatprep.subr.mxu0 0.0
    %3958 = vmatpush1.msra.mxu0 0.0
    %3959 = vmatprep.subr.mxu0 0.0
    %3960 = vmatpush1.msra.mxu0 0.0
    %3961 = vmatprep.subr.mxu0 0.0
    %3962 = vmatpush1.msra.mxu0 0.0
    %3963 = vmatprep.subr.mxu0 0.0
    %3964 = vmatpush1.msra.mxu0 0.0
    %3965 = vmatprep.subr.mxu0 0.0
    %3966 = vmatpush1.msra.mxu0 0.0
    %3967 = vmatprep.subr.mxu0 0.0
    %3968 = vmatpush1.msra.mxu0 0.0
    %3969 = vmatprep.subr.mxu0 0.0
    %3970 = vmatpush1.msra.mxu0 0.0
    %3971 = vmatprep.subr.mxu0 0.0
    %3972 = vmatpush1.msra.mxu0 0.0
    %3973 = vmatprep.subr.mxu0 0.0
    %3974 = vmatpush1.msra.mxu0 0.0
    %3975 = vmatprep.subr.mxu0 0.0
    %3976 = vmatpush1.msra.mxu0 0.0
    %3977 = vmatprep.subr.mxu0 0.0
    %3978 = vmatpush1.msra.mxu0 0.0
    %3979 = vmatprep.subr.mxu0 0.0
    %3980 = vmatpush1.msra.mxu0 0.0
    %3981 = vmatprep.subr.mxu0 0.0
    %3982 = vmatpush1.msra.mxu0 0.0
    %3983 = vmatprep.subr.mxu0 0.0
    %3984 = vmatpush1.msra.mxu0 0.0
    %3985 = vmatprep.subr.mxu0 0.0
    %3986 = vmatpush1.msra.mxu0 0.0
    %3987 = vmatprep.subr.mxu0 0.0
    %3988 = vmatpush1.msra.mxu0 0.0
    %3989 = vmatprep.subr.mxu0 0.0
    %3990 = vmatpush1.msra.mxu0 0.0
    %3991 = vmatprep.subr.mxu0 0.0
    %3992 = vmatpush1.msra.mxu0 0.0
    %3993 = vmatprep.subr.mxu0 0.0
    %3994 = vmatpush1.msra.mxu0 0.0
    %3995 = vmatprep.subr.mxu0 0.0
    %3996 = vmatpush1.msra.mxu0 0.0
    %3997 = vmatprep.subr.mxu0 0.0
    %3998 = vmatpush1.msra.mxu0 0.0
    %3999 = vmatprep.mubr.f32.mxu0 0.0
    %4000 = vmatmul.mubr.f32.gmra.mrb[0].mxu0 %v3933
    %v4001 = vpop.f32.mrb[0].mxu0
    %v4002 = vadd.f32 %v96, %v4001
    %v4003 = vpop.f32.mrb[0].mxu0
    %4004 = vdwg.mxu0
    %v4005 = vsel %vm412, %v4002, -inf
    %4006 = vmax.xlane.f32.xlu0 %v4005
    %v4007 = vpop.xlane.xlu0 %4006
    %v4008 = vsub.f32 %v4002, %v4007
    %v4009 = vmul.f32 %v4008, 1.442695
    %v4010 = vpow.pop %v4009
    %v4011 = vsel %vm412, %v4010, 0.0
    %4012 = vadd.xlane.f32.xlu0 %v4011
    %v4013 = vpop.xlane.xlu0 %4012
    %v4014 = vrcp.pop %v4013
    %v4015 = vmul.f32 %v4010, %v4014
    %v4017 = vsel %vm424, %v4015, 0
    %4019 = vmatprep.subr.mxu0 0.0
    %4020 = vmatpush1.msra.mxu0 %v68
    %4021 = vmatprep.subr.mxu0 0.0
    %4022 = vmatpush1.msra.mxu0 %v69
    %4023 = vmatprep.subr.mxu0 0.0
    %4024 = vmatpush1.msra.mxu0 %v70
    %4025 = vmatprep.subr.mxu0 0.0
    %4026 = vmatpush1.msra.mxu0 %v71
    %4027 = vmatprep.subr.mxu0 0.0
    %4028 = vmatpush1.msra.mxu0 %v72
    %4029 = vmatprep.subr.mxu0 0.0
    %4030 = vmatpush1.msra.mxu0 %v73
    %4031 = vmatprep.subr.mxu0 0.0
    %4032 = vmatpush1.msra.mxu0 %v74
    %4033 = vmatprep.subr.mxu0 0.0
    %4034 = vmatpush1.msra.mxu0 %v75
    %4035 = vmatprep.subr.mxu0 0.0
    %4036 = vmatpush1.msra.mxu0 0.0
    %4037 = vmatprep.subr.mxu0 0.0
    %4038 = vmatpush1.msra.mxu0 0.0
    %4039 = vmatprep.subr.mxu0 0.0
    %4040 = vmatpush1.msra.mxu0 0.0
    %4041 = vmatprep.subr.mxu0 0.0
    %4042 = vmatpush1.msra.mxu0 0.0
    %4043 = vmatprep.subr.mxu0 0.0
    %4044 = vmatpush1.msra.mxu0 0.0
    %4045 = vmatprep.subr.mxu0 0.0
    %4046 = vmatpush1.msra.mxu0 0.0
    %4047 = vmatprep.subr.mxu0 0.0
    %4048 = vmatpush1.msra.mxu0 0.0
    %4049 = vmatprep.subr.mxu0 0.0
    %4050 = vmatpush1.msra.mxu0 0.0
    %4051 = vmatprep.subr.mxu0 0.0
    %4052 = vmatpush1.msra.mxu0 0.0
    %4053 = vmatprep.subr.mxu0 0.0
    %4054 = vmatpush1.msra.mxu0 0.0
    %4055 = vmatprep.subr.mxu0 0.0
    %4056 = vmatpush1.msra.mxu0 0.0
    %4057 = vmatprep.subr.mxu0 0.0
    %4058 = vmatpush1.msra.mxu0 0.0
    %4059 = vmatprep.subr.mxu0 0.0
    %4060 = vmatpush1.msra.mxu0 0.0
    %4061 = vmatprep.subr.mxu0 0.0
    %4062 = vmatpush1.msra.mxu0 0.0
    %4063 = vmatprep.subr.mxu0 0.0
    %4064 = vmatpush1.msra.mxu0 0.0
    %4065 = vmatprep.subr.mxu0 0.0
    %4066 = vmatpush1.msra.mxu0 0.0
    %4067 = vmatprep.subr.mxu0 0.0
    %4068 = vmatpush1.msra.mxu0 0.0
    %4069 = vmatprep.subr.mxu0 0.0
    %4070 = vmatpush1.msra.mxu0 0.0
    %4071 = vmatprep.subr.mxu0 0.0
    %4072 = vmatpush1.msra.mxu0 0.0
    %4073 = vmatprep.subr.mxu0 0.0
    %4074 = vmatpush1.msra.mxu0 0.0
    %4075 = vmatprep.subr.mxu0 0.0
    %4076 = vmatpush1.msra.mxu0 0.0
    %4077 = vmatprep.subr.mxu0 0.0
    %4078 = vmatpush1.msra.mxu0 0.0
    %4079 = vmatprep.subr.mxu0 0.0
    %4080 = vmatpush1.msra.mxu0 0.0
    %4081 = vmatprep.subr.mxu0 0.0
    %4082 = vmatpush1.msra.mxu0 0.0
    %4083 = vmatprep.mubr.f32.mxu0 0.0
    %4084 = vmatmul.mubr.f32.gmra.mrb[0].mxu0 %v4017
    %v4085 = vpop.f32.mrb[0].mxu0
    %v4086 = vadd.f32 0.0, %v4085
    %v4087 = vpop.f32.mrb[0].mxu0
    %4088 = vdwg.mxu0
    %v4090 = vsel %vm190, %v3712, 0
    %4092 = vmatprep.subr.mxu0 0.0
    %4093 = vmatpush1.msra.mxu0 %v80
    %4094 = vmatprep.subr.mxu0 0.0
    %4095 = vmatpush1.msra.mxu0 %v81
    %4096 = vmatprep.subr.mxu0 0.0
    %4097 = vmatpush1.msra.mxu0 %v82
    %4098 = vmatprep.subr.mxu0 0.0
    %4099 = vmatpush1.msra.mxu0 %v83
    %4100 = vmatprep.subr.mxu0 0.0
    %4101 = vmatpush1.msra.mxu0 0.0
    %4102 = vmatprep.subr.mxu0 0.0
    %4103 = vmatpush1.msra.mxu0 0.0
    %4104 = vmatprep.subr.mxu0 0.0
    %4105 = vmatpush1.msra.mxu0 0.0
    %4106 = vmatprep.subr.mxu0 0.0
    %4107 = vmatpush1.msra.mxu0 0.0
    %4108 = vmatprep.subr.mxu0 0.0
    %4109 = vmatpush1.msra.mxu0 0.0
    %4110 = vmatprep.subr.mxu0 0.0
    %4111 = vmatpush1.msra.mxu0 0.0
    %4112 = vmatprep.subr.mxu0 0.0
    %4113 = vmatpush1.msra.mxu0 0.0
    %4114 = vmatprep.subr.mxu0 0.0
    %4115 = vmatpush1.msra.mxu0 0.0
    %4116 = vmatprep.subr.mxu0 0.0
    %4117 = vmatpush1.msra.mxu0 0.0
    %4118 = vmatprep.subr.mxu0 0.0
    %4119 = vmatpush1.msra.mxu0 0.0
    %4120 = vmatprep.subr.mxu0 0.0
    %4121 = vmatpush1.msra.mxu0 0.0
    %4122 = vmatprep.subr.mxu0 0.0
    %4123 = vmatpush1.msra.mxu0 0.0
    %4124 = vmatprep.subr.mxu0 0.0
    %4125 = vmatpush1.msra.mxu0 0.0
    %4126 = vmatprep.subr.mxu0 0.0
    %4127 = vmatpush1.msra.mxu0 0.0
    %4128 = vmatprep.subr.mxu0 0.0
    %4129 = vmatpush1.msra.mxu0 0.0
    %4130 = vmatprep.subr.mxu0 0.0
    %4131 = vmatpush1.msra.mxu0 0.0
    %4132 = vmatprep.subr.mxu0 0.0
    %4133 = vmatpush1.msra.mxu0 0.0
    %4134 = vmatprep.subr.mxu0 0.0
    %4135 = vmatpush1.msra.mxu0 0.0
    %4136 = vmatprep.subr.mxu0 0.0
    %4137 = vmatpush1.msra.mxu0 0.0
    %4138 = vmatprep.subr.mxu0 0.0
    %4139 = vmatpush1.msra.mxu0 0.0
    %4140 = vmatprep.subr.mxu0 0.0
    %4141 = vmatpush1.msra.mxu0 0.0
    %4142 = vmatprep.subr.mxu0 0.0
    %4143 = vmatpush1.msra.mxu0 0.0
    %4144 = vmatprep.subr.mxu0 0.0
    %4145 = vmatpush1.msra.mxu0 0.0
    %4146 = vmatprep.subr.mxu0 0.0
    %4147 = vmatpush1.msra.mxu0 0.0
    %4148 = vmatprep.subr.mxu0 0.0
    %4149 = vmatpush1.msra.mxu0 0.0
    %4150 = vmatprep.subr.mxu0 0.0
    %4151 = vmatpush1.msra.mxu0 0.0
    %4152 = vmatprep.subr.mxu0 0.0
    %4153 = vmatpush1.msra.mxu0 0.0
    %4154 = vmatprep.subr.mxu0 0.0
    %4155 = vmatpush1.msra.mxu0 0.0
    %4156 = vmatprep.mubr.f32.mxu0 0.0
    %4157 = vmatmul.mubr.f32.gmra.mrb[0].mxu0 %v4090
    %v4158 = vpop.f32.mrb[0].mxu0
    %v4159 = vadd.f32 0.0, %v4158
    %v4160 = vpop.f32.mrb[0].mxu0
    %4161 = vdwg.mxu0
    %v4163 = vsel %vm190, %v4086, 0
    %4165 = vmatprep.subr.mxu0 0.0
    %4166 = vmatpush1.msra.mxu0 %v76
    %4167 = vmatprep.subr.mxu0 0.0
    %4168 = vmatpush1.msra.mxu0 %v77
    %4169 = vmatprep.subr.mxu0 0.0
    %4170 = vmatpush1.msra.mxu0 %v78
    %4171 = vmatprep.subr.mxu0 0.0
    %4172 = vmatpush1.msra.mxu0 %v79
    %4173 = vmatprep.subr.mxu0 0.0
    %4174 = vmatpush1.msra.mxu0 0.0
    %4175 = vmatprep.subr.mxu0 0.0
    %4176 = vmatpush1.msra.mxu0 0.0
    %4177 = vmatprep.subr.mxu0 0.0
    %4178 = vmatpush1.msra.mxu0 0.0
    %4179 = vmatprep.subr.mxu0 0.0
    %4180 = vmatpush1.msra.mxu0 0.0
    %4181 = vmatprep.subr.mxu0 0.0
    %4182 = vmatpush1.msra.mxu0 0.0
    %4183 = vmatprep.subr.mxu0 0.0
    %4184 = vmatpush1.msra.mxu0 0.0
    %4185 = vmatprep.subr.mxu0 0.0
    %4186 = vmatpush1.msra.mxu0 0.0
    %4187 = vmatprep.subr.mxu0 0.0
    %4188 = vmatpush1.msra.mxu0 0.0
    %4189 = vmatprep.subr.mxu0 0.0
    %4190 = vmatpush1.msra.mxu0 0.0
    %4191 = vmatprep.subr.mxu0 0.0
    %4192 = vmatpush1.msra.mxu0 0.0
    %4193 = vmatprep.subr.mxu0 0.0
    %4194 = vmatpush1.msra.mxu0 0.0
    %4195 = vmatprep.subr.mxu0 0.0
    %4196 = vmatpush1.msra.mxu0 0.0
    %4197 = vmatprep.subr.mxu0 0.0
    %4198 = vmatpush1.msra.mxu0 0.0
    %4199 = vmatprep.subr.mxu0 0.0
    %4200 = vmatpush1.msra.mxu0 0.0
    %4201 = vmatprep.subr.mxu0 0.0
    %4202 = vmatpush1.msra.mxu0 0.0
    %4203 = vmatprep.subr.mxu0 0.0
    %4204 = vmatpush1.msra.mxu0 0.0
    %4205 = vmatprep.subr.mxu0 0.0
    %4206 = vmatpush1.msra.mxu0 0.0
    %4207 = vmatprep.subr.mxu0 0.0
    %4208 = vmatpush1.msra.mxu0 0.0
    %4209 = vmatprep.subr.mxu0 0.0
    %4210 = vmatpush1.msra.mxu0 0.0
    %4211 = vmatprep.subr.mxu0 0.0
    %4212 = vmatpush1.msra.mxu0 0.0
    %4213 = vmatprep.subr.mxu0 0.0
    %4214 = vmatpush1.msra.mxu0 0.0
    %4215 = vmatprep.subr.mxu0 0.0
    %4216 = vmatpush1.msra.mxu0 0.0
    %4217 = vmatprep.subr.mxu0 0.0
    %4218 = vmatpush1.msra.mxu0 0.0
    %4219 = vmatprep.subr.mxu0 0.0
    %4220 = vmatpush1.msra.mxu0 0.0
    %4221 = vmatprep.subr.mxu0 0.0
    %4222 = vmatpush1.msra.mxu0 0.0
    %4223 = vmatprep.subr.mxu0 0.0
    %4224 = vmatpush1.msra.mxu0 0.0
    %4225 = vmatprep.subr.mxu0 0.0
    %4226 = vmatpush1.msra.mxu0 0.0
    %4227 = vmatprep.subr.mxu0 0.0
    %4228 = vmatpush1.msra.mxu0 0.0
    %4229 = vmatprep.mubr.f32.mxu0 0.0
    %4230 = vmatmul.mubr.f32.gmra.mrb[0].mxu0 %v4163
    %v4231 = vpop.f32.mrb[0].mxu0
    %v4232 = vadd.f32 %v4159, %v4231
    %v4233 = vpop.f32.mrb[0].mxu0
    %4234 = vdwg.mxu0
    %v4235 = vadd.f32 %v4232, %v103
    %v4236 = vtanh.pop %v4235
    %s4237 = scalar_lea.vmem %s0, 28
    %v4238 = vld [vmem:[%s4237] sm:$0xf]
    %v4240 = vsel %vm190, %v3789, 0
    %4242 = vmatprep.subr.mxu0 0.0
    %4243 = vmatpush1.msra.mxu0 %v80
    %4244 = vmatprep.subr.mxu0 0.0
    %4245 = vmatpush1.msra.mxu0 %v81
    %4246 = vmatprep.subr.mxu0 0.0
    %4247 = vmatpush1.msra.mxu0 %v82
    %4248 = vmatprep.subr.mxu0 0.0
    %4249 = vmatpush1.msra.mxu0 %v83
    %4250 = vmatprep.subr.mxu0 0.0
    %4251 = vmatpush1.msra.mxu0 0.0
    %4252 = vmatprep.subr.mxu0 0.0
    %4253 = vmatpush1.msra.mxu0 0.0
    %4254 = vmatprep.subr.mxu0 0.0
    %4255 = vmatpush1.msra.mxu0 0.0
    %4256 = vmatprep.subr.mxu0 0.0
    %4257 = vmatpush1.msra.mxu0 0.0
    %4258 = vmatprep.subr.mxu0 0.0
    %4259 = vmatpush1.msra.mxu0 0.0
    %4260 = vmatprep.subr.mxu0 0.0
    %4261 = vmatpush1.msra.mxu0 0.0
    %4262 = vmatprep.subr.mxu0 0.0
    %4263 = vmatpush1.msra.mxu0 0.0
    %4264 = vmatprep.subr.mxu0 0.0
    %4265 = vmatpush1.msra.mxu0 0.0
    %4266 = vmatprep.subr.mxu0 0.0
    %4267 = vmatpush1.msra.mxu0 0.0
    %4268 = vmatprep.subr.mxu0 0.0
    %4269 = vmatpush1.msra.mxu0 0.0
    %4270 = vmatprep.subr.mxu0 0.0
    %4271 = vmatpush1.msra.mxu0 0.0
    %4272 = vmatprep.subr.mxu0 0.0
    %4273 = vmatpush1.msra.mxu0 0.0
    %4274 = vmatprep.subr.mxu0 0.0
    %4275 = vmatpush1.msra.mxu0 0.0
    %4276 = vmatprep.subr.mxu0 0.0
    %4277 = vmatpush1.msra.mxu0 0.0
    %4278 = vmatprep.subr.mxu0 0.0
    %4279 = vmatpush1.msra.mxu0 0.0
    %4280 = vmatprep.subr.mxu0 0.0
    %4281 = vmatpush1.msra.mxu0 0.0
    %4282 = vmatprep.subr.mxu0 0.0
    %4283 = vmatpush1.msra.mxu0 0.0
    %4284 = vmatprep.subr.mxu0 0.0
    %4285 = vmatpush1.msra.mxu0 0.0
    %4286 = vmatprep.subr.mxu0 0.0
    %4287 = vmatpush1.msra.mxu0 0.0
    %4288 = vmatprep.subr.mxu0 0.0
    %4289 = vmatpush1.msra.mxu0 0.0
    %4290 = vmatprep.subr.mxu0 0.0
    %4291 = vmatpush1.msra.mxu0 0.0
    %4292 = vmatprep.subr.mxu0 0.0
    %4293 = vmatpush1.msra.mxu0 0.0
    %4294 = vmatprep.subr.mxu0 0.0
    %4295 = vmatpush1.msra.mxu0 0.0
    %4296 = vmatprep.subr.mxu0 0.0
    %4297 = vmatpush1.msra.mxu0 0.0
    %4298 = vmatprep.subr.mxu0 0.0
    %4299 = vmatpush1.msra.mxu0 0.0
    %4300 = vmatprep.subr.mxu0 0.0
    %4301 = vmatpush1.msra.mxu0 0.0
    %4302 = vmatprep.subr.mxu0 0.0
    %4303 = vmatpush1.msra.mxu0 0.0
    %4304 = vmatprep.subr.mxu0 0.0
    %4305 = vmatpush1.msra.mxu0 0.0
    %4306 = vmatprep.mubr.f32.mxu0 0.0
    %4307 = vmatmul.mubr.f32.gmra.mrb[0].mxu0 %v4240
    %v4308 = vpop.f32.mrb[0].mxu0
    %v4309 = vadd.f32 0.0, %v4308
    %v4310 = vpop.f32.mrb[0].mxu0
    %4311 = vdwg.mxu0
    %v4312 = vadd.f32 %v4238, %v4309
    %v4313 = vtanh.pop %v4312
    %v4314 = vld [vmem:[%s13] sm:$0xff]
    %v4315 = vld [vmem:[%s13 + $0x8] sm:$0xff]
    %v4316 = vld [vmem:[%s13 + $0x10] sm:$0xff]
    %v4317 = vld [vmem:[%s13 + $0x18] sm:$0xff]
    %v4318 = vld [vmem:[#allocation2] sm:$0x1]
    %v4320 = vlaneseq
    %v4321 = vshrl.u32 %v4320, 7
    %v4322 = vsub.s32 0, %v4321
    %v4323 = vrot.slane %v4318, %v4322
    %v4326 = vsel %vm190, %v4236, 0
    %4328 = vmatprep.subr.mxu0 0.0
    %4329 = vmatpush1.msra.mxu0 %v4314
    %4330 = vmatprep.subr.mxu0 0.0
    %4331 = vmatpush1.msra.mxu0 %v4315
    %4332 = vmatprep.subr.mxu0 0.0
    %4333 = vmatpush1.msra.mxu0 %v4316
    %4334 = vmatprep.subr.mxu0 0.0
    %4335 = vmatpush1.msra.mxu0 %v4317
    %4336 = vmatprep.subr.mxu0 0.0
    %4337 = vmatpush1.msra.mxu0 0.0
    %4338 = vmatprep.subr.mxu0 0.0
    %4339 = vmatpush1.msra.mxu0 0.0
    %4340 = vmatprep.subr.mxu0 0.0
    %4341 = vmatpush1.msra.mxu0 0.0
    %4342 = vmatprep.subr.mxu0 0.0
    %4343 = vmatpush1.msra.mxu0 0.0
    %4344 = vmatprep.subr.mxu0 0.0
    %4345 = vmatpush1.msra.mxu0 0.0
    %4346 = vmatprep.subr.mxu0 0.0
    %4347 = vmatpush1.msra.mxu0 0.0
    %4348 = vmatprep.subr.mxu0 0.0
    %4349 = vmatpush1.msra.mxu0 0.0
    %4350 = vmatprep.subr.mxu0 0.0
    %4351 = vmatpush1.msra.mxu0 0.0
    %4352 = vmatprep.subr.mxu0 0.0
    %4353 = vmatpush1.msra.mxu0 0.0
    %4354 = vmatprep.subr.mxu0 0.0
    %4355 = vmatpush1.msra.mxu0 0.0
    %4356 = vmatprep.subr.mxu0 0.0
    %4357 = vmatpush1.msra.mxu0 0.0
    %4358 = vmatprep.subr.mxu0 0.0
    %4359 = vmatpush1.msra.mxu0 0.0
    %4360 = vmatprep.subr.mxu0 0.0
    %4361 = vmatpush1.msra.mxu0 0.0
    %4362 = vmatprep.subr.mxu0 0.0
    %4363 = vmatpush1.msra.mxu0 0.0
    %4364 = vmatprep.subr.mxu0 0.0
    %4365 = vmatpush1.msra.mxu0 0.0
    %4366 = vmatprep.subr.mxu0 0.0
    %4367 = vmatpush1.msra.mxu0 0.0
    %4368 = vmatprep.subr.mxu0 0.0
    %4369 = vmatpush1.msra.mxu0 0.0
    %4370 = vmatprep.subr.mxu0 0.0
    %4371 = vmatpush1.msra.mxu0 0.0
    %4372 = vmatprep.subr.mxu0 0.0
    %4373 = vmatpush1.msra.mxu0 0.0
    %4374 = vmatprep.subr.mxu0 0.0
    %4375 = vmatpush1.msra.mxu0 0.0
    %4376 = vmatprep.subr.mxu0 0.0
    %4377 = vmatpush1.msra.mxu0 0.0
    %4378 = vmatprep.subr.mxu0 0.0
    %4379 = vmatpush1.msra.mxu0 0.0
    %4380 = vmatprep.subr.mxu0 0.0
    %4381 = vmatpush1.msra.mxu0 0.0
    %4382 = vmatprep.subr.mxu0 0.0
    %4383 = vmatpush1.msra.mxu0 0.0
    %4384 = vmatprep.subr.mxu0 0.0
    %4385 = vmatpush1.msra.mxu0 0.0
    %4386 = vmatprep.subr.mxu0 0.0
    %4387 = vmatpush1.msra.mxu0 0.0
    %4388 = vmatprep.subr.mxu0 0.0
    %4389 = vmatpush1.msra.mxu0 0.0
    %4390 = vmatprep.subr.mxu0 0.0
    %4391 = vmatpush1.msra.mxu0 0.0
    %4392 = vmatprep.mubr.f32.mxu0 0.0
    %4393 = vmatmul.mubr.f32.gmra.mrb[0].mxu0 %v4326
    %v4394 = vpop.f32.mrb[0].mxu0
    %v4395 = vadd.f32 %v4323, %v4394
    %v4396 = vpop.f32.mrb[0].mxu0
    %4397 = vdwg.mxu0
    %v4399 = vsel %vm190, %v4313, 0
    %4401 = vmatprep.subr.mxu0 0.0
    %4402 = vmatpush1.msra.mxu0 %v4314
    %4403 = vmatprep.subr.mxu0 0.0
    %4404 = vmatpush1.msra.mxu0 %v4315
    %4405 = vmatprep.subr.mxu0 0.0
    %4406 = vmatpush1.msra.mxu0 %v4316
    %4407 = vmatprep.subr.mxu0 0.0
    %4408 = vmatpush1.msra.mxu0 %v4317
    %4409 = vmatprep.subr.mxu0 0.0
    %4410 = vmatpush1.msra.mxu0 0.0
    %4411 = vmatprep.subr.mxu0 0.0
    %4412 = vmatpush1.msra.mxu0 0.0
    %4413 = vmatprep.subr.mxu0 0.0
    %4414 = vmatpush1.msra.mxu0 0.0
    %4415 = vmatprep.subr.mxu0 0.0
    %4416 = vmatpush1.msra.mxu0 0.0
    %4417 = vmatprep.subr.mxu0 0.0
    %4418 = vmatpush1.msra.mxu0 0.0
    %4419 = vmatprep.subr.mxu0 0.0
    %4420 = vmatpush1.msra.mxu0 0.0
    %4421 = vmatprep.subr.mxu0 0.0
    %4422 = vmatpush1.msra.mxu0 0.0
    %4423 = vmatprep.subr.mxu0 0.0
    %4424 = vmatpush1.msra.mxu0 0.0
    %4425 = vmatprep.subr.mxu0 0.0
    %4426 = vmatpush1.msra.mxu0 0.0
    %4427 = vmatprep.subr.mxu0 0.0
    %4428 = vmatpush1.msra.mxu0 0.0
    %4429 = vmatprep.subr.mxu0 0.0
    %4430 = vmatpush1.msra.mxu0 0.0
    %4431 = vmatprep.subr.mxu0 0.0
    %4432 = vmatpush1.msra.mxu0 0.0
    %4433 = vmatprep.subr.mxu0 0.0
    %4434 = vmatpush1.msra.mxu0 0.0
    %4435 = vmatprep.subr.mxu0 0.0
    %4436 = vmatpush1.msra.mxu0 0.0
    %4437 = vmatprep.subr.mxu0 0.0
    %4438 = vmatpush1.msra.mxu0 0.0
    %4439 = vmatprep.subr.mxu0 0.0
    %4440 = vmatpush1.msra.mxu0 0.0
    %4441 = vmatprep.subr.mxu0 0.0
    %4442 = vmatpush1.msra.mxu0 0.0
    %4443 = vmatprep.subr.mxu0 0.0
    %4444 = vmatpush1.msra.mxu0 0.0
    %4445 = vmatprep.subr.mxu0 0.0
    %4446 = vmatpush1.msra.mxu0 0.0
    %4447 = vmatprep.subr.mxu0 0.0
    %4448 = vmatpush1.msra.mxu0 0.0
    %4449 = vmatprep.subr.mxu0 0.0
    %4450 = vmatpush1.msra.mxu0 0.0
    %4451 = vmatprep.subr.mxu0 0.0
    %4452 = vmatpush1.msra.mxu0 0.0
    %4453 = vmatprep.subr.mxu0 0.0
    %4454 = vmatpush1.msra.mxu0 0.0
    %4455 = vmatprep.subr.mxu0 0.0
    %4456 = vmatpush1.msra.mxu0 0.0
    %4457 = vmatprep.subr.mxu0 0.0
    %4458 = vmatpush1.msra.mxu0 0.0
    %4459 = vmatprep.subr.mxu0 0.0
    %4460 = vmatpush1.msra.mxu0 0.0
    %4461 = vmatprep.subr.mxu0 0.0
    %4462 = vmatpush1.msra.mxu0 0.0
    %4463 = vmatprep.subr.mxu0 0.0
    %4464 = vmatpush1.msra.mxu0 0.0
    %4465 = vmatprep.mubr.f32.mxu0 0.0
    %4466 = vmatmul.mubr.f32.gmra.mrb[0].mxu0 %v4399
    %v4467 = vpop.f32.mrb[0].mxu0
    %v4468 = vadd.f32 %v4323, %v4467
    %v4469 = vpop.f32.mrb[0].mxu0
    %4470 = vdwg.mxu0
    %v4471 = vsub.f32 0.0, %v4468
    %v4472 = vmax.f32 %v4471, 0.0
    %v4473 = vand.u32 2147483647, %v4471
    %v4474 = vsub.f32 0.0, %v4473
    %v4475 = vmul.f32 %v4474, 1.442695
    %v4476 = vpow.pop %v4475
    %v4477 = vadd.f32 %v4476, 1.0
    %v4478 = vlog2.pop %v4477
    %v4479 = vmul.f32 %v4478, 0.6931472
    %v4480 = vmul.f32 -0.5, %v4476
    %v4481 = vadd.f32 %v4480, 1.0
    %v4482 = vmul.f32 %v4481, %v4476
    %v4483 = vand.u32 2147483647, %v4476
    %vm4484 = vcmp.lt.f32.partialorder %v4483, 0.0004427343
    %v4485 = vsel %vm4484, %v4482, %v4479
    %v4486 = vadd.f32 %v4472, %v4485
    %v4487 = vmax.f32 %v4395, 0.0
    %v4488 = vand.u32 2147483647, %v4395
    %v4489 = vsub.f32 0.0, %v4488
    %v4490 = vmul.f32 %v4489, 1.442695
    %v4491 = vpow.pop %v4490
    %v4492 = vadd.f32 %v4491, 1.0
    %v4493 = vlog2.pop %v4492
    %v4494 = vmul.f32 %v4493, 0.6931472
    %v4495 = vmul.f32 -0.5, %v4491
    %v4496 = vadd.f32 %v4495, 1.0
    %v4497 = vmul.f32 %v4496, %v4491
    %v4498 = vand.u32 2147483647, %v4491
    %vm4499 = vcmp.lt.f32.partialorder %v4498, 0.0004427343
    %v4500 = vsel %vm4499, %v4497, %v4494
    %v4501 = vadd.f32 %v4487, %v4500
    %v4502 = vadd.f32 %v4486, %v4501
    %vm4503 = vcmask 3072
    %v4504 = vsel %vm4503, %v4502, 0.0
    %4505 = vadd.xlane.f32.xlu0 %v4504
    %v4506 = vpop.xlane.xlu0 %4505
    %v4507 = vrot.slane %v4506, 4
    %v4508 = vadd.f32 %v4506, %v4507
    %v4509 = vrot.slane %v4508, 2
    %v4510 = vadd.f32 %v4508, %v4509
    %v4511 = vrot.slane %v4510, 1
    %v4512 = vadd.f32 %v4510, %v4511
    %s4513 = vtos %v4512
    %v4514 = vrcp.pop 4.0
    %s4515 = vtos %v4514
    %s4516 = smul.f32 %s4513, %s4515
    %v4517 = vsub.f32 0.0, %v4395
    %v4518 = vmax.f32 %v4517, 0.0
    %v4519 = vand.u32 2147483647, %v4517
    %v4520 = vsub.f32 0.0, %v4519
    %v4521 = vmul.f32 %v4520, 1.442695
    %v4522 = vpow.pop %v4521
    %v4523 = vadd.f32 %v4522, 1.0
    %v4524 = vlog2.pop %v4523
    %v4525 = vmul.f32 %v4524, 0.6931472
    %v4526 = vmul.f32 -0.5, %v4522
    %v4527 = vadd.f32 %v4526, 1.0
    %v4528 = vmul.f32 %v4527, %v4522
    %v4529 = vand.u32 2147483647, %v4522
    %vm4530 = vcmp.lt.f32.partialorder %v4529, 0.0004427343
    %v4531 = vsel %vm4530, %v4528, %v4525
    %v4532 = vadd.f32 %v4518, %v4531
    %v4533 = vsel %vm4503, %v4532, 0.0
    %4534 = vadd.xlane.f32.xlu0 %v4533
    %v4535 = vpop.xlane.xlu0 %4534
    %v4536 = vrot.slane %v4535, 4
    %v4537 = vadd.f32 %v4535, %v4536
    %v4538 = vrot.slane %v4537, 2
    %v4539 = vadd.f32 %v4537, %v4538
    %v4540 = vrot.slane %v4539, 1
    %v4541 = vadd.f32 %v4539, %v4540
    %s4542 = vtos %v4541
    %v4543 = vrcp.pop 4.0
    %s4544 = vtos %v4543
    %s4545 = smul.f32 %s4542, %s4544
    %v4546 = vstv %s4516
    %vm4547 = vcmask 0
    %4548 = vst.msk [vmem:[#allocation3] sm:$0x1] %vm4547, %v4546
    %v4549 = vstv %s4545
    %4550 = vst.msk [vmem:[#allocation5] sm:$0x1] %vm4547, %v4549
    // Predicated region
    $region62: #{rgan_forward.1} parent=1 // pred_check
      _
    $region63: #{rgan_forward.1} parent=1 // pred_check_branch
      %4552 = sbr.rel (0) target = $region65
    $region64: #{rgan_forward.1} parent=1 // pred_region
      %s4554 = ssub.s32 16, 16
      %4555 = vsyncadd [#allocation4], %s4554
      %s4557 = sshll.u32 [#allocation3], 4
      %s4558 = int_to_ptr.vmem [resolvable:$true] %s4557
      %4560 = dma.vmem_to_hbm [thread:$0]  %s4558, 16, %s15, [#allocation4]
    $region65: #{rgan_forward.1} parent=1 // pred_fallthru
      _
    // Predicated region
    $region66: #{rgan_forward.1} parent=1 // pred_check
      _
    $region67: #{rgan_forward.1} parent=1 // pred_check_branch
      %4562 = sbr.rel (0) target = $region69
    $region68: #{rgan_forward.1} parent=1 // pred_region
      %s4564 = ssub.s32 16, 16
      %4565 = vsyncadd [#allocation6], %s4564
      %s4567 = sshll.u32 [#allocation5], 4
      %s4568 = int_to_ptr.vmem [resolvable:$true] %s4567
      %4570 = dma.vmem_to_hbm [thread:$0]  %s4568, 16, %s16, [#allocation6]
    $region69: #{rgan_forward.1} parent=1 // pred_fallthru
      _
    // Predicated region
    $region70: #{rgan_forward.1} parent=1 // pred_check
      _
    $region71: #{rgan_forward.1} parent=1 // pred_check_branch
      %4572 = sbr.rel (0) target = $region73
    $region72: #{rgan_forward.1} parent=1 // pred_region
      %4573 = dma.done [#allocation4], 16
    $region73: #{rgan_forward.1} parent=1 // pred_fallthru
      _
    // Predicated region
    $region74: #{rgan_forward.1} parent=1 // pred_check
      _
    $region75: #{rgan_forward.1} parent=1 // pred_check_branch
      %4575 = sbr.rel (0) target = $region77
    $region76: #{rgan_forward.1} parent=1 // pred_region
      %4576 = dma.done [#allocation6], 16
    $region77: #{rgan_forward.1} parent=1 // pred_fallthru
      _
    %4577 = vsyncpa [#allocation4], 1
    %4578 = vsyncpa [#allocation6], 1

</llo_original>
